<compile_context>
chip_gen: v5e
topology: v5e:2x2
jax: 0.10.0
libtpu: 0.0.40
codegen_flags: <defaults>
</compile_context>

<pallas_src>
import math

import jax
import jax.numpy as jnp
from jax.experimental import pallas as pl
from jax.experimental.pallas import tpu as pltpu

# ---------------- Config (small synthetic ViT + classifier head) ------------
IMG = 16            # input spatial size
PATCH = 4           # patch size -> (16/4)^2 = 16 patches
CHANNELS = 3        # RGB-like input
HIDDEN = 32         # vit.config.hidden_size
HEADS = 2
HEAD_DIM = HIDDEN // HEADS
LAYERS = 2          # encoder depth
INTERMEDIATE = 64   # MLP expansion
NUM_CLASSES = 5
GRID = IMG // PATCH
N_PATCH = GRID * GRID
SEQ = N_PATCH + 1            # CLS + patches = 17
CPP = CHANNELS * PATCH * PATCH
LN_EPS = 1e-12               # HF ViT layer_norm_eps
OUT_PAD = 128                # lane-dense padded classifier output width
NEG_INF = -1e9               # additive mask value for cross-batch attention


def _gelu_tanh(x):
    # TODO(synk): HF ViT / nn.GELU() default to exact erf GELU; the tanh
    # approximation is used here (no guaranteed erf lowering in Mosaic).
    c = math.sqrt(2.0 / math.pi)
    return 0.5 * x * (1.0 + jnp.tanh(c * (x + 0.044715 * x * x * x)))


def _layernorm(x, g, b):
    mu = jnp.mean(x, axis=-1, keepdims=True)
    var = jnp.mean((x - mu) ** 2, axis=-1, keepdims=True)
    return (x - mu) * jax.lax.rsqrt(var + LN_EPS) * g + b


# ---------------------------- Fused Pallas kernel ----------------------------
def _build_fused_kernel(batch):
    """Whole VITClassifier forward for a fixed (static) batch size."""
    rows = batch * SEQ
    scale = 1.0 / math.sqrt(HEAD_DIM)

    def kernel(tok_ref, wext_ref, add_ref, sel_ref, mask_ref,
               ln1g_ref, ln1b_ref, wqkv_ref, bqkv_ref, wo_ref, bo_ref,
               ln2g_ref, ln2b_ref, wi_ref, bi_ref, wo2_ref, bo2_ref,
               lng_ref, lnb_ref, w1_ref, b1_ref, w2_ref, b2_ref,
               w3_ref, b3_ref, out_ref):
        # ---- patch embedding (Conv2d(k=P, s=P) == matmul) + CLS + pos ----
        # The CLS token is folded into the same matmul via an extra one-hot
        # column of the token matrix; positional embeddings + conv bias come
        # pre-tiled in add_ref.  Batch is flattened into the row dimension.
        x = jnp.dot(tok_ref[...], wext_ref[...],
                    preferred_element_type=jnp.float32) + add_ref[...]   # [rows, H]

        mask = mask_ref[...]                                             # [rows, rows]
        for li in range(LAYERS):                      # static unroll (2 layers)
            # --- self-attention block (pre-LN) ---
            h = _layernorm(x, ln1g_ref[li], ln1b_ref[li])
            qkv = jnp.dot(h, wqkv_ref[li],            # fused Wq|Wk|Wv matmul
                          preferred_element_type=jnp.float32) + bqkv_ref[li]
            q = qkv[:, 0:HIDDEN]
            k = qkv[:, HIDDEN:2 * HIDDEN]
            v = qkv[:, 2 * HIDDEN:3 * HIDDEN]
            wo = wo_ref[li]
            attn = jnp.zeros((rows, HIDDEN), jnp.float32)
            for hd in range(HEADS):                   # static unroll (2 heads)
                c0, c1 = hd * HEAD_DIM, (hd + 1) * HEAD_DIM
                qh, kh, vh = q[:, c0:c1], k[:, c0:c1], v[:, c0:c1]
                # Scores over all B*SEQ rows at once; the additive
                # block-diagonal mask keeps attention within a batch element.
                s = jax.lax.dot_general(qh, kh, (((1,), (1,)), ((), ())),
                                        preferred_element_type=jnp.float32)
                s = s * scale + mask
                s = s - jnp.max(s, axis=-1, keepdims=True)
                p = jnp.exp(s)
                p = p / jnp.sum(p, axis=-1, keepdims=True)          # softmax
                ctx = jnp.dot(p, vh, preferred_element_type=jnp.float32)
                # TODO(synk): a single merged ctx @ Wo would require a lane-dim
                # concat of 16-wide heads (uncertain Mosaic lowering at
                # HEAD_DIM=16); the per-head partial projections below are
                # mathematically identical and lower robustly.
                attn = attn + jnp.dot(ctx, wo[c0:c1, :],
                                      preferred_element_type=jnp.float32)
            x = x + attn + bo_ref[li]                 # residual 1 (bias hoisted)

            # --- MLP block (pre-LN) ---
            h2 = _layernorm(x, ln2g_ref[li], ln2b_ref[li])
            mid = _gelu_tanh(jnp.dot(h2, wi_ref[li],
                                     preferred_element_type=jnp.float32)
                             + bi_ref[li])
            x = x + jnp.dot(mid, wo2_ref[li],
                            preferred_element_type=jnp.float32) + bo2_ref[li]

        # ---- classifier head on the CLS tokens (rows b*SEQ) ----
        # Selector matmul extracts CLS rows (avoids sublane gathers/concats).
        # Dropout(0.3)/Dropout(0.2) are identity (inference semantics).
        cls = jnp.dot(sel_ref[...], x, preferred_element_type=jnp.float32)  # [B, H]
        cls = _layernorm(cls, lng_ref[...], lnb_ref[...])
        h1 = jnp.maximum(jnp.dot(cls, w1_ref[...],
                                 preferred_element_type=jnp.float32)
                         + b1_ref[...], 0.0)                                # ReLU
        hg = _gelu_tanh(jnp.dot(h1, w2_ref[...],
                                preferred_element_type=jnp.float32) + b2_ref[...])
        # Lane-dense padded output [B, 128]; wrapper slices [:, :NUM_CLASSES].
        out_ref[...] = jnp.dot(hg, w3_ref[...],
                               preferred_element_type=jnp.float32) + b3_ref[...]

    return kernel


# ---------------------------- Host-side packing -------------------------------
def _pack_inputs(x, params):
    """Layout glue: unfold patches, fold the CLS token into the embedding
    matmul, pre-tile positional embeddings, and build the block-diagonal
    attention mask and the CLS-row selector."""
    B = x.shape[0]
    patches = x.reshape(B, CHANNELS, GRID, PATCH, GRID, PATCH)
    patches = patches.transpose(0, 2, 4, 1, 3, 5).reshape(B, N_PATCH, CPP)
    patch_rows = jnp.concatenate(
        [patches, jnp.zeros((B, N_PATCH, 1), jnp.float32)], axis=-1)
    cls_rows = jnp.zeros((B, 1, CPP + 1), jnp.float32).at[:, :, CPP].set(1.0)
    tokens = jnp.concatenate([cls_rows, patch_rows], axis=1).reshape(
        B * SEQ, CPP + 1)                                           # [B*SEQ, CPP+1]

    w_ext = jnp.concatenate(
        [params['patch_w'],
         params['cls'].reshape(1, HIDDEN) - params['patch_b'].reshape(1, HIDDEN)],
        axis=0)                                                     # [CPP+1, H]
    add = (jnp.tile(params['pos'].reshape(SEQ, HIDDEN), (B, 1))
           + params['patch_b'].reshape(1, HIDDEN))                  # [B*SEQ, H]

    sel = jnp.zeros((B, B * SEQ), jnp.float32).at[
        jnp.arange(B), jnp.arange(B) * SEQ].set(1.0)                # CLS selector
    tok_b = jnp.arange(B * SEQ) // SEQ
    mask = jnp.where(tok_b[:, None] == tok_b[None, :], 0.0,
                     NEG_INF).astype(jnp.float32)                   # [B*SEQ, B*SEQ]
    return tokens, w_ext, add, sel, mask


def _pack_weights(p):
    r1 = lambda a: a.reshape(1, -1)
    stackb = lambda n: jnp.stack([r1(lp[n]) for lp in p['layers']])  # [L,1,dim]
    stackw = lambda n: jnp.stack([lp[n] for lp in p['layers']])      # [L,in,out]
    wqkv = jnp.stack([jnp.concatenate([lp['wq'], lp['wk'], lp['wv']], axis=1)
                      for lp in p['layers']])                        # [L, H, 3H]
    bqkv = jnp.stack([r1(jnp.concatenate([lp['bq'], lp['bk'], lp['bv']]))
                      for lp in p['layers']])                        # [L, 1, 3H]
    w3p = jnp.zeros((p['c_w3'].shape[0], OUT_PAD), jnp.float32
                    ).at[:, :NUM_CLASSES].set(p['c_w3'])
    b3p = jnp.zeros((1, OUT_PAD), jnp.float32).at[:, :NUM_CLASSES].set(p['c_b3'])
    return (stackb('ln1_g'), stackb('ln1_b'), wqkv, bqkv,
            stackw('wo'), stackb('bo'), stackb('ln2_g'), stackb('ln2_b'),
            stackw('wi'), stackb('bi'), stackw('wo2'), stackb('bo2'),
            r1(p['final_ln_g']), r1(p['final_ln_b']),
            p['c_w1'], r1(p['c_b1']), p['c_w2'], r1(p['c_b2']), w3p, b3p)


# ---------------------------- Forward pass ------------------------------------
def vit_classifier_forward(x, params):
    B = x.shape[0]
    inputs = _pack_inputs(x, params)
    weights = _pack_weights(params)
    # Single fused kernel, no grid: the full workload (<1 MiB) lives in VMEM on
    # all of v5e/v6e/v7x.  (If B or SEQ grows, split the row dim over a
    # "parallel" grid axis so v7x's second TensorCore is used.)
    out_padded = pl.pallas_call(
        _build_fused_kernel(B),
        out_shape=jax.ShapeDtypeStruct((B, OUT_PAD), jnp.float32),
        compiler_params=pltpu.CompilerParams(vmem_limit_bytes=32 * 1024 * 1024),
    )(*inputs, *weights)
    return out_padded[:, :NUM_CLASSES]


# ---------------------------- Parameters -------------------------------------
def init_params(key):
    keys = jax.random.split(key, 4 + LAYERS)
    w = lambda k, shape: 0.1 * jax.random.normal(k, shape, jnp.float32)
    params = {
        'patch_w': w(keys[0], (CPP, HIDDEN)),
        'patch_b': jnp.zeros((HIDDEN,), jnp.float32),
        'cls': w(keys[1], (1, 1, HIDDEN)),
        'pos': w(keys[2], (1, SEQ, HIDDEN)),
        'final_ln_g': jnp.ones((HIDDEN,), jnp.float32),
        'final_ln_b': jnp.zeros((HIDDEN,), jnp.float32),
    }
    layers = []
    for li in range(LAYERS):
        lk = jax.random.split(keys[3 + li], 6)
        layers.append(dict(
            ln1_g=jnp.ones((HIDDEN,), jnp.float32), ln1_b=jnp.zeros((HIDDEN,), jnp.float32),
            wq=w(lk[0], (HIDDEN, HIDDEN)), bq=jnp.zeros((HIDDEN,), jnp.float32),
            wk=w(lk[1], (HIDDEN, HIDDEN)), bk=jnp.zeros((HIDDEN,), jnp.float32),
            wv=w(lk[2], (HIDDEN, HIDDEN)), bv=jnp.zeros((HIDDEN,), jnp.float32),
            wo=w(lk[3], (HIDDEN, HIDDEN)), bo=jnp.zeros((HIDDEN,), jnp.float32),
            ln2_g=jnp.ones((HIDDEN,), jnp.float32), ln2_b=jnp.zeros((HIDDEN,), jnp.float32),
            wi=w(lk[4], (HIDDEN, INTERMEDIATE)), bi=jnp.zeros((INTERMEDIATE,), jnp.float32),
            wo2=w(lk[5], (INTERMEDIATE, HIDDEN)), bo2=jnp.zeros((HIDDEN,), jnp.float32),
        ))
    params['layers'] = layers
    ck = jax.random.split(keys[3 + LAYERS], 3)
    params['c_w1'] = w(ck[0], (HIDDEN, 512)); params['c_b1'] = jnp.zeros((512,), jnp.float32)
    params['c_w2'] = w(ck[1], (512, 128));    params['c_b2'] = jnp.zeros((128,), jnp.float32)
    params['c_w3'] = w(ck[2], (128, NUM_CLASSES)); params['c_b3'] = jnp.zeros((NUM_CLASSES,), jnp.float32)
    return params


# ---------------------------- Pure-JAX reference ------------------------------
def ref_forward(x, params):
    B = x.shape[0]
    patches = x.reshape(B, CHANNELS, GRID, PATCH, GRID, PATCH)
    patches = patches.transpose(0, 2, 4, 1, 3, 5).reshape(B, N_PATCH, -1)
    emb = jnp.einsum('bnk,kh->bnh', patches, params['patch_w'],
                     precision='highest') + params['patch_b']
    cls_tok = jnp.broadcast_to(params['cls'], (B, 1, HIDDEN))
    h = jnp.concatenate([cls_tok, emb], axis=1) + params['pos']
    for p in params['layers']:
        hn = _layernorm(h, p['ln1_g'], p['ln1_b'])
        q = jnp.einsum('bsh,hd->bsd', hn, p['wq'], precision='highest') + p['bq']
        k = jnp.einsum('bsh,hd->bsd', hn, p['wk'], precision='highest') + p['bk']
        v = jnp.einsum('bsh,hd->bsd', hn, p['wv'], precision='highest') + p['bv']
        split = lambda t: t.reshape(B, SEQ, HEADS, HEAD_DIM).transpose(0, 2, 1, 3)
        qh, kh, vh = split(q), split(k), split(v)
        s = jnp.einsum('bhqd,bhkd->bhqk', qh, kh,
                       precision='highest') / math.sqrt(HEAD_DIM)
        a = jax.nn.softmax(s, axis=-1)
        ctx = jnp.einsum('bhqk,bhkd->bhqd', a, vh, precision='highest')
        ctx = ctx.transpose(0, 2, 1, 3).reshape(B, SEQ, HIDDEN)
        h = h + jnp.einsum('bsh,hd->bsd', ctx, p['wo'], precision='highest') + p['bo']
        hn2 = _layernorm(h, p['ln2_g'], p['ln2_b'])
        mid = _gelu_tanh(jnp.einsum('bsh,hi->bsi', hn2, p['wi'],
                                    precision='highest') + p['bi'])
        h = h + jnp.einsum('bsi,ih->bsh', mid, p['wo2'], precision='highest') + p['bo2']
    cls = _layernorm(h[:, 0, :], params['final_ln_g'], params['final_ln_b'])
    h1 = jnp.maximum(jnp.dot(cls, params['c_w1'], precision='highest') + params['c_b1'], 0.0)
    h2 = _gelu_tanh(jnp.dot(h1, params['c_w2'], precision='highest') + params['c_b2'])
    return jnp.dot(h2, params['c_w3'], precision='highest') + params['c_b3']


if __name__ == "__main__":
    key = jax.random.PRNGKey(0)
    kx, kp = jax.random.split(key)
    x = jax.random.normal(kx, (2, CHANNELS, IMG, IMG), jnp.float32)
    params = init_params(kp)

    fwd = jax.jit(vit_classifier_forward)
    logits = jax.block_until_ready(fwd(x, params))

    ref = ref_forward(x, params)
    assert logits.shape == (2, NUM_CLASSES)
    assert jnp.allclose(logits, ref, atol=5e-3, rtol=5e-3), (logits, ref)
    print("KERNEL_OK")
</pallas_src>

<mosaic_0001>
module attributes {stable_mosaic.version = 11 : i64} {
  func.func @kernel(%arg0: memref<34x49xf32, #tpu.memory_space<vmem>>, %arg1: memref<49x32xf32, #tpu.memory_space<vmem>>, %arg2: memref<34x32xf32, #tpu.memory_space<vmem>>, %arg3: memref<2x34xf32, #tpu.memory_space<vmem>>, %arg4: memref<34x34xf32, #tpu.memory_space<vmem>>, %arg5: memref<2x1x32xf32, #tpu.memory_space<vmem>>, %arg6: memref<2x1x32xf32, #tpu.memory_space<vmem>>, %arg7: memref<2x32x96xf32, #tpu.memory_space<vmem>>, %arg8: memref<2x1x96xf32, #tpu.memory_space<vmem>>, %arg9: memref<2x32x32xf32, #tpu.memory_space<vmem>>, %arg10: memref<2x1x32xf32, #tpu.memory_space<vmem>>, %arg11: memref<2x1x32xf32, #tpu.memory_space<vmem>>, %arg12: memref<2x1x32xf32, #tpu.memory_space<vmem>>, %arg13: memref<2x32x64xf32, #tpu.memory_space<vmem>>, %arg14: memref<2x1x64xf32, #tpu.memory_space<vmem>>, %arg15: memref<2x64x32xf32, #tpu.memory_space<vmem>>, %arg16: memref<2x1x32xf32, #tpu.memory_space<vmem>>, %arg17: memref<1x32xf32, #tpu.memory_space<vmem>>, %arg18: memref<1x32xf32, #tpu.memory_space<vmem>>, %arg19: memref<32x512xf32, #tpu.memory_space<vmem>>, %arg20: memref<1x512xf32, #tpu.memory_space<vmem>>, %arg21: memref<512x128xf32, #tpu.memory_space<vmem>>, %arg22: memref<1x128xf32, #tpu.memory_space<vmem>>, %arg23: memref<128x128xf32, #tpu.memory_space<vmem>>, %arg24: memref<1x128xf32, #tpu.memory_space<vmem>>, %arg25: memref<2x128xf32, #tpu.memory_space<vmem>>) attributes {dimension_semantics = [], scalar_prefetch = 0 : i64, scratch_operands = 0 : i64, tpu.core_type = #tpu.core_type<tc>} {
    %c0 = arith.constant 0 : index
    %c0_0 = arith.constant 0 : index
    %0 = vector.load %arg0[%c0, %c0_0] : memref<34x49xf32, #tpu.memory_space<vmem>>, vector<34x49xf32>
    %c0_1 = arith.constant 0 : index
    %c0_2 = arith.constant 0 : index
    %1 = vector.load %arg1[%c0_1, %c0_2] : memref<49x32xf32, #tpu.memory_space<vmem>>, vector<49x32xf32>
    %cst = arith.constant dense<0.000000e+00> : vector<34x32xf32>
    %2 = tpu.matmul %0, %1, %cst {dimension_numbers = #tpu.dot_dimension_numbers<[1], [0], [0], [1], [0, 0, 1, 1], [], []>} : vector<34x49xf32>, vector<49x32xf32>, vector<34x32xf32> -> vector<34x32xf32>
    %c0_3 = arith.constant 0 : index
    %c0_4 = arith.constant 0 : index
    %3 = vector.load %arg2[%c0_3, %c0_4] : memref<34x32xf32, #tpu.memory_space<vmem>>, vector<34x32xf32>
    %4 = arith.addf %2, %3 : vector<34x32xf32>
    %c0_5 = arith.constant 0 : index
    %c0_6 = arith.constant 0 : index
    %5 = vector.load %arg4[%c0_5, %c0_6] : memref<34x34xf32, #tpu.memory_space<vmem>>, vector<34x34xf32>
    %c0_7 = arith.constant 0 : index
    %c0_8 = arith.constant 0 : index
    %c0_9 = arith.constant 0 : index
    %6 = vector.load %arg5[%c0_7, %c0_8, %c0_9] : memref<2x1x32xf32, #tpu.memory_space<vmem>>, vector<1x1x32xf32>
    %7 = vector.shape_cast %6 : vector<1x1x32xf32> to vector<1x32xf32>
    %c0_10 = arith.constant 0 : index
    %c0_11 = arith.constant 0 : index
    %c0_12 = arith.constant 0 : index
    %8 = vector.load %arg6[%c0_10, %c0_11, %c0_12] : memref<2x1x32xf32, #tpu.memory_space<vmem>>, vector<1x1x32xf32>
    %9 = vector.shape_cast %8 : vector<1x1x32xf32> to vector<1x32xf32>
    %cst_13 = arith.constant dense<0.000000e+00> : vector<34xf32>
    %10 = vector.multi_reduction <add>, %4, %cst_13 [1] : vector<34x32xf32> to vector<34xf32>
    %11 = vector.shape_cast %10 : vector<34xf32> to vector<34x1xf32>
    %cst_14 = arith.constant 3.200000e+01 : f32
    %12 = vector.broadcast %cst_14 : f32 to vector<34x1xf32>
    %13 = arith.divf %11, %12 : vector<34x1xf32>
    %14 = vector.broadcast %13 : vector<34x1xf32> to vector<34x32xf32>
    %15 = arith.subf %4, %14 : vector<34x32xf32>
    %16 = arith.mulf %15, %15 : vector<34x32xf32>
    %cst_15 = arith.constant dense<0.000000e+00> : vector<34xf32>
    %17 = vector.multi_reduction <add>, %16, %cst_15 [1] : vector<34x32xf32> to vector<34xf32>
    %18 = vector.shape_cast %17 : vector<34xf32> to vector<34x1xf32>
    %cst_16 = arith.constant 3.200000e+01 : f32
    %19 = vector.broadcast %cst_16 : f32 to vector<34x1xf32>
    %20 = arith.divf %18, %19 : vector<34x1xf32>
    %21 = vector.broadcast %13 : vector<34x1xf32> to vector<34x32xf32>
    %22 = arith.subf %4, %21 : vector<34x32xf32>
    %cst_17 = arith.constant 9.99999996E-13 : f32
    %23 = vector.broadcast %cst_17 : f32 to vector<34x1xf32>
    %24 = arith.addf %20, %23 : vector<34x1xf32>
    %25 = math.rsqrt %24 : vector<34x1xf32>
    %26 = vector.broadcast %25 : vector<34x1xf32> to vector<34x32xf32>
    %27 = arith.mulf %22, %26 : vector<34x32xf32>
    %28 = vector.broadcast %7 : vector<1x32xf32> to vector<34x32xf32>
    %29 = arith.mulf %27, %28 : vector<34x32xf32>
    %30 = vector.broadcast %9 : vector<1x32xf32> to vector<34x32xf32>
    %31 = arith.addf %29, %30 : vector<34x32xf32>
    %c0_18 = arith.constant 0 : index
    %c0_19 = arith.constant 0 : index
    %c0_20 = arith.constant 0 : index
    %32 = vector.load %arg7[%c0_18, %c0_19, %c0_20] : memref<2x32x96xf32, #tpu.memory_space<vmem>>, vector<1x32x96xf32>
    %33 = vector.shape_cast %32 : vector<1x32x96xf32> to vector<32x96xf32>
    %cst_21 = arith.constant dense<0.000000e+00> : vector<34x96xf32>
    %34 = tpu.matmul %31, %33, %cst_21 {dimension_numbers = #tpu.dot_dimension_numbers<[1], [0], [0], [1], [0, 0, 1, 1], [], []>} : vector<34x32xf32>, vector<32x96xf32>, vector<34x96xf32> -> vector<34x96xf32>
    %c0_22 = arith.constant 0 : index
    %c0_23 = arith.constant 0 : index
    %c0_24 = arith.constant 0 : index
    %35 = vector.load %arg8[%c0_22, %c0_23, %c0_24] : memref<2x1x96xf32, #tpu.memory_space<vmem>>, vector<1x1x96xf32>
    %36 = vector.shape_cast %35 : vector<1x1x96xf32> to vector<1x96xf32>
    %37 = vector.broadcast %36 : vector<1x96xf32> to vector<34x96xf32>
    %38 = arith.addf %34, %37 : vector<34x96xf32>
    %39 = vector.extract_strided_slice %38 {offsets = [0, 0], sizes = [34, 32], strides = [1, 1]} : vector<34x96xf32> to vector<34x32xf32>
    %40 = vector.extract_strided_slice %38 {offsets = [0, 32], sizes = [34, 32], strides = [1, 1]} : vector<34x96xf32> to vector<34x32xf32>
    %41 = vector.extract_strided_slice %38 {offsets = [0, 64], sizes = [34, 32], strides = [1, 1]} : vector<34x96xf32> to vector<34x32xf32>
    %c0_25 = arith.constant 0 : index
    %c0_26 = arith.constant 0 : index
    %c0_27 = arith.constant 0 : index
    %42 = vector.load %arg9[%c0_25, %c0_26, %c0_27] : memref<2x32x32xf32, #tpu.memory_space<vmem>>, vector<1x32x32xf32>
    %43 = vector.shape_cast %42 : vector<1x32x32xf32> to vector<32x32xf32>
    %cst_28 = arith.constant 0.000000e+00 : f32
    %44 = vector.broadcast %cst_28 : f32 to vector<34x32xf32>
    %45 = vector.extract_strided_slice %39 {offsets = [0, 0], sizes = [34, 16], strides = [1, 1]} : vector<34x32xf32> to vector<34x16xf32>
    %46 = vector.extract_strided_slice %40 {offsets = [0, 0], sizes = [34, 16], strides = [1, 1]} : vector<34x32xf32> to vector<34x16xf32>
    %47 = vector.extract_strided_slice %41 {offsets = [0, 0], sizes = [34, 16], strides = [1, 1]} : vector<34x32xf32> to vector<34x16xf32>
    %cst_29 = arith.constant dense<0.000000e+00> : vector<34x34xf32>
    %48 = tpu.matmul %45, %46, %cst_29 {dimension_numbers = #tpu.dot_dimension_numbers<[1], [1], [0], [0], [0, 0, 1, 0], [], []>} : vector<34x16xf32>, vector<34x16xf32>, vector<34x34xf32> -> vector<34x34xf32>
    %cst_30 = arith.constant 2.500000e-01 : f32
    %49 = vector.broadcast %cst_30 : f32 to vector<34x34xf32>
    %50 = arith.mulf %48, %49 : vector<34x34xf32>
    %51 = arith.addf %50, %5 : vector<34x34xf32>
    %cst_31 = arith.constant dense<0xFF800000> : vector<34xf32>
    %52 = vector.multi_reduction <maximumf>, %51, %cst_31 [1] : vector<34x34xf32> to vector<34xf32>
    %53 = vector.shape_cast %52 : vector<34xf32> to vector<34x1xf32>
    %54 = vector.broadcast %53 : vector<34x1xf32> to vector<34x34xf32>
    %55 = arith.subf %51, %54 : vector<34x34xf32>
    %56 = math.exp %55 : vector<34x34xf32>
    %cst_32 = arith.constant dense<0.000000e+00> : vector<34xf32>
    %57 = vector.multi_reduction <add>, %56, %cst_32 [1] : vector<34x34xf32> to vector<34xf32>
    %58 = vector.shape_cast %57 : vector<34xf32> to vector<34x1xf32>
    %59 = vector.broadcast %58 : vector<34x1xf32> to vector<34x34xf32>
    %60 = arith.divf %56, %59 : vector<34x34xf32>
    %cst_33 = arith.constant dense<0.000000e+00> : vector<34x16xf32>
    %61 = tpu.matmul %60, %47, %cst_33 {dimension_numbers = #tpu.dot_dimension_numbers<[1], [0], [0], [1], [0, 0, 1, 1], [], []>} : vector<34x34xf32>, vector<34x16xf32>, vector<34x16xf32> -> vector<34x16xf32>
    %62 = vector.extract_strided_slice %43 {offsets = [0, 0], sizes = [16, 32], strides = [1, 1]} : vector<32x32xf32> to vector<16x32xf32>
    %cst_34 = arith.constant dense<0.000000e+00> : vector<34x32xf32>
    %63 = tpu.matmul %61, %62, %cst_34 {dimension_numbers = #tpu.dot_dimension_numbers<[1], [0], [0], [1], [0, 0, 1, 1], [], []>} : vector<34x16xf32>, vector<16x32xf32>, vector<34x32xf32> -> vector<34x32xf32>
    %64 = arith.addf %44, %63 : vector<34x32xf32>
    %65 = vector.extract_strided_slice %39 {offsets = [0, 16], sizes = [34, 16], strides = [1, 1]} : vector<34x32xf32> to vector<34x16xf32>
    %66 = vector.extract_strided_slice %40 {offsets = [0, 16], sizes = [34, 16], strides = [1, 1]} : vector<34x32xf32> to vector<34x16xf32>
    %67 = vector.extract_strided_slice %41 {offsets = [0, 16], sizes = [34, 16], strides = [1, 1]} : vector<34x32xf32> to vector<34x16xf32>
    %cst_35 = arith.constant dense<0.000000e+00> : vector<34x34xf32>
    %68 = tpu.matmul %65, %66, %cst_35 {dimension_numbers = #tpu.dot_dimension_numbers<[1], [1], [0], [0], [0, 0, 1, 0], [], []>} : vector<34x16xf32>, vector<34x16xf32>, vector<34x34xf32> -> vector<34x34xf32>
    %cst_36 = arith.constant 2.500000e-01 : f32
    %69 = vector.broadcast %cst_36 : f32 to vector<34x34xf32>
    %70 = arith.mulf %68, %69 : vector<34x34xf32>
    %71 = arith.addf %70, %5 : vector<34x34xf32>
    %cst_37 = arith.constant dense<0xFF800000> : vector<34xf32>
    %72 = vector.multi_reduction <maximumf>, %71, %cst_37 [1] : vector<34x34xf32> to vector<34xf32>
    %73 = vector.shape_cast %72 : vector<34xf32> to vector<34x1xf32>
    %74 = vector.broadcast %73 : vector<34x1xf32> to vector<34x34xf32>
    %75 = arith.subf %71, %74 : vector<34x34xf32>
    %76 = math.exp %75 : vector<34x34xf32>
    %cst_38 = arith.constant dense<0.000000e+00> : vector<34xf32>
    %77 = vector.multi_reduction <add>, %76, %cst_38 [1] : vector<34x34xf32> to vector<34xf32>
    %78 = vector.shape_cast %77 : vector<34xf32> to vector<34x1xf32>
    %79 = vector.broadcast %78 : vector<34x1xf32> to vector<34x34xf32>
    %80 = arith.divf %76, %79 : vector<34x34xf32>
    %cst_39 = arith.constant dense<0.000000e+00> : vector<34x16xf32>
    %81 = tpu.matmul %80, %67, %cst_39 {dimension_numbers = #tpu.dot_dimension_numbers<[1], [0], [0], [1], [0, 0, 1, 1], [], []>} : vector<34x34xf32>, vector<34x16xf32>, vector<34x16xf32> -> vector<34x16xf32>
    %82 = vector.extract_strided_slice %43 {offsets = [16, 0], sizes = [16, 32], strides = [1, 1]} : vector<32x32xf32> to vector<16x32xf32>
    %cst_40 = arith.constant dense<0.000000e+00> : vector<34x32xf32>
    %83 = tpu.matmul %81, %82, %cst_40 {dimension_numbers = #tpu.dot_dimension_numbers<[1], [0], [0], [1], [0, 0, 1, 1], [], []>} : vector<34x16xf32>, vector<16x32xf32>, vector<34x32xf32> -> vector<34x32xf32>
    %84 = arith.addf %64, %83 : vector<34x32xf32>
    %85 = arith.addf %4, %84 : vector<34x32xf32>
    %c0_41 = arith.constant 0 : index
    %c0_42 = arith.constant 0 : index
    %c0_43 = arith.constant 0 : index
    %86 = vector.load %arg10[%c0_41, %c0_42, %c0_43] : memref<2x1x32xf32, #tpu.memory_space<vmem>>, vector<1x1x32xf32>
    %87 = vector.shape_cast %86 : vector<1x1x32xf32> to vector<1x32xf32>
    %88 = vector.broadcast %87 : vector<1x32xf32> to vector<34x32xf32>
    %89 = arith.addf %85, %88 : vector<34x32xf32>
    %c0_44 = arith.constant 0 : index
    %c0_45 = arith.constant 0 : index
    %c0_46 = arith.constant 0 : index
    %90 = vector.load %arg11[%c0_44, %c0_45, %c0_46] : memref<2x1x32xf32, #tpu.memory_space<vmem>>, vector<1x1x32xf32>
    %91 = vector.shape_cast %90 : vector<1x1x32xf32> to vector<1x32xf32>
    %c0_47 = arith.constant 0 : index
    %c0_48 = arith.constant 0 : index
    %c0_49 = arith.constant 0 : index
    %92 = vector.load %arg12[%c0_47, %c0_48, %c0_49] : memref<2x1x32xf32, #tpu.memory_space<vmem>>, vector<1x1x32xf32>
    %93 = vector.shape_cast %92 : vector<1x1x32xf32> to vector<1x32xf32>
    %cst_50 = arith.constant dense<0.000000e+00> : vector<34xf32>
    %94 = vector.multi_reduction <add>, %89, %cst_50 [1] : vector<34x32xf32> to vector<34xf32>
    %95 = vector.shape_cast %94 : vector<34xf32> to vector<34x1xf32>
    %cst_51 = arith.constant 3.200000e+01 : f32
    %96 = vector.broadcast %cst_51 : f32 to vector<34x1xf32>
    %97 = arith.divf %95, %96 : vector<34x1xf32>
    %98 = vector.broadcast %97 : vector<34x1xf32> to vector<34x32xf32>
    %99 = arith.subf %89, %98 : vector<34x32xf32>
    %100 = arith.mulf %99, %99 : vector<34x32xf32>
    %cst_52 = arith.constant dense<0.000000e+00> : vector<34xf32>
    %101 = vector.multi_reduction <add>, %100, %cst_52 [1] : vector<34x32xf32> to vector<34xf32>
    %102 = vector.shape_cast %101 : vector<34xf32> to vector<34x1xf32>
    %cst_53 = arith.constant 3.200000e+01 : f32
    %103 = vector.broadcast %cst_53 : f32 to vector<34x1xf32>
    %104 = arith.divf %102, %103 : vector<34x1xf32>
    %105 = vector.broadcast %97 : vector<34x1xf32> to vector<34x32xf32>
    %106 = arith.subf %89, %105 : vector<34x32xf32>
    %cst_54 = arith.constant 9.99999996E-13 : f32
    %107 = vector.broadcast %cst_54 : f32 to vector<34x1xf32>
    %108 = arith.addf %104, %107 : vector<34x1xf32>
    %109 = math.rsqrt %108 : vector<34x1xf32>
    %110 = vector.broadcast %109 : vector<34x1xf32> to vector<34x32xf32>
    %111 = arith.mulf %106, %110 : vector<34x32xf32>
    %112 = vector.broadcast %91 : vector<1x32xf32> to vector<34x32xf32>
    %113 = arith.mulf %111, %112 : vector<34x32xf32>
    %114 = vector.broadcast %93 : vector<1x32xf32> to vector<34x32xf32>
    %115 = arith.addf %113, %114 : vector<34x32xf32>
    %c0_55 = arith.constant 0 : index
    %c0_56 = arith.constant 0 : index
    %c0_57 = arith.constant 0 : index
    %116 = vector.load %arg13[%c0_55, %c0_56, %c0_57] : memref<2x32x64xf32, #tpu.memory_space<vmem>>, vector<1x32x64xf32>
    %117 = vector.shape_cast %116 : vector<1x32x64xf32> to vector<32x64xf32>
    %cst_58 = arith.constant dense<0.000000e+00> : vector<34x64xf32>
    %118 = tpu.matmul %115, %117, %cst_58 {dimension_numbers = #tpu.dot_dimension_numbers<[1], [0], [0], [1], [0, 0, 1, 1], [], []>} : vector<34x32xf32>, vector<32x64xf32>, vector<34x64xf32> -> vector<34x64xf32>
    %c0_59 = arith.constant 0 : index
    %c0_60 = arith.constant 0 : index
    %c0_61 = arith.constant 0 : index
    %119 = vector.load %arg14[%c0_59, %c0_60, %c0_61] : memref<2x1x64xf32, #tpu.memory_space<vmem>>, vector<1x1x64xf32>
    %120 = vector.shape_cast %119 : vector<1x1x64xf32> to vector<1x64xf32>
    %121 = vector.broadcast %120 : vector<1x64xf32> to vector<34x64xf32>
    %122 = arith.addf %118, %121 : vector<34x64xf32>
    %cst_62 = arith.constant 5.000000e-01 : f32
    %123 = vector.broadcast %cst_62 : f32 to vector<34x64xf32>
    %124 = arith.mulf %123, %122 : vector<34x64xf32>
    %cst_63 = arith.constant 4.471500e-02 : f32
    %125 = vector.broadcast %cst_63 : f32 to vector<34x64xf32>
    %126 = arith.mulf %125, %122 : vector<34x64xf32>
    %127 = arith.mulf %126, %122 : vector<34x64xf32>
    %128 = arith.mulf %127, %122 : vector<34x64xf32>
    %129 = arith.addf %122, %128 : vector<34x64xf32>
    %cst_64 = arith.constant 0.797884583 : f32
    %130 = vector.broadcast %cst_64 : f32 to vector<34x64xf32>
    %131 = arith.mulf %130, %129 : vector<34x64xf32>
    %132 = math.tanh %131 : vector<34x64xf32>
    %cst_65 = arith.constant 1.000000e+00 : f32
    %133 = vector.broadcast %cst_65 : f32 to vector<34x64xf32>
    %134 = arith.addf %133, %132 : vector<34x64xf32>
    %135 = arith.mulf %124, %134 : vector<34x64xf32>
    %c0_66 = arith.constant 0 : index
    %c0_67 = arith.constant 0 : index
    %c0_68 = arith.constant 0 : index
    %136 = vector.load %arg15[%c0_66, %c0_67, %c0_68] : memref<2x64x32xf32, #tpu.memory_space<vmem>>, vector<1x64x32xf32>
    %137 = vector.shape_cast %136 : vector<1x64x32xf32> to vector<64x32xf32>
    %cst_69 = arith.constant dense<0.000000e+00> : vector<34x32xf32>
    %138 = tpu.matmul %135, %137, %cst_69 {dimension_numbers = #tpu.dot_dimension_numbers<[1], [0], [0], [1], [0, 0, 1, 1], [], []>} : vector<34x64xf32>, vector<64x32xf32>, vector<34x32xf32> -> vector<34x32xf32>
    %139 = arith.addf %89, %138 : vector<34x32xf32>
    %c0_70 = arith.constant 0 : index
    %c0_71 = arith.constant 0 : index
    %c0_72 = arith.constant 0 : index
    %140 = vector.load %arg16[%c0_70, %c0_71, %c0_72] : memref<2x1x32xf32, #tpu.memory_space<vmem>>, vector<1x1x32xf32>
    %141 = vector.shape_cast %140 : vector<1x1x32xf32> to vector<1x32xf32>
    %142 = vector.broadcast %141 : vector<1x32xf32> to vector<34x32xf32>
    %143 = arith.addf %139, %142 : vector<34x32xf32>
    %c1 = arith.constant 1 : index
    %c0_73 = arith.constant 0 : index
    %c0_74 = arith.constant 0 : index
    %144 = vector.load %arg5[%c1, %c0_73, %c0_74] : memref<2x1x32xf32, #tpu.memory_space<vmem>>, vector<1x1x32xf32>
    %145 = vector.shape_cast %144 : vector<1x1x32xf32> to vector<1x32xf32>
    %c1_75 = arith.constant 1 : index
    %c0_76 = arith.constant 0 : index
    %c0_77 = arith.constant 0 : index
    %146 = vector.load %arg6[%c1_75, %c0_76, %c0_77] : memref<2x1x32xf32, #tpu.memory_space<vmem>>, vector<1x1x32xf32>
    %147 = vector.shape_cast %146 : vector<1x1x32xf32> to vector<1x32xf32>
    %cst_78 = arith.constant dense<0.000000e+00> : vector<34xf32>
    %148 = vector.multi_reduction <add>, %143, %cst_78 [1] : vector<34x32xf32> to vector<34xf32>
    %149 = vector.shape_cast %148 : vector<34xf32> to vector<34x1xf32>
    %cst_79 = arith.constant 3.200000e+01 : f32
    %150 = vector.broadcast %cst_79 : f32 to vector<34x1xf32>
    %151 = arith.divf %149, %150 : vector<34x1xf32>
    %152 = vector.broadcast %151 : vector<34x1xf32> to vector<34x32xf32>
    %153 = arith.subf %143, %152 : vector<34x32xf32>
    %154 = arith.mulf %153, %153 : vector<34x32xf32>
    %cst_80 = arith.constant dense<0.000000e+00> : vector<34xf32>
    %155 = vector.multi_reduction <add>, %154, %cst_80 [1] : vector<34x32xf32> to vector<34xf32>
    %156 = vector.shape_cast %155 : vector<34xf32> to vector<34x1xf32>
    %cst_81 = arith.constant 3.200000e+01 : f32
    %157 = vector.broadcast %cst_81 : f32 to vector<34x1xf32>
    %158 = arith.divf %156, %157 : vector<34x1xf32>
    %159 = vector.broadcast %151 : vector<34x1xf32> to vector<34x32xf32>
    %160 = arith.subf %143, %159 : vector<34x32xf32>
    %cst_82 = arith.constant 9.99999996E-13 : f32
    %161 = vector.broadcast %cst_82 : f32 to vector<34x1xf32>
    %162 = arith.addf %158, %161 : vector<34x1xf32>
    %163 = math.rsqrt %162 : vector<34x1xf32>
    %164 = vector.broadcast %163 : vector<34x1xf32> to vector<34x32xf32>
    %165 = arith.mulf %160, %164 : vector<34x32xf32>
    %166 = vector.broadcast %145 : vector<1x32xf32> to vector<34x32xf32>
    %167 = arith.mulf %165, %166 : vector<34x32xf32>
    %168 = vector.broadcast %147 : vector<1x32xf32> to vector<34x32xf32>
    %169 = arith.addf %167, %168 : vector<34x32xf32>
    %c1_83 = arith.constant 1 : index
    %c0_84 = arith.constant 0 : index
    %c0_85 = arith.constant 0 : index
    %170 = vector.load %arg7[%c1_83, %c0_84, %c0_85] : memref<2x32x96xf32, #tpu.memory_space<vmem>>, vector<1x32x96xf32>
    %171 = vector.shape_cast %170 : vector<1x32x96xf32> to vector<32x96xf32>
    %cst_86 = arith.constant dense<0.000000e+00> : vector<34x96xf32>
    %172 = tpu.matmul %169, %171, %cst_86 {dimension_numbers = #tpu.dot_dimension_numbers<[1], [0], [0], [1], [0, 0, 1, 1], [], []>} : vector<34x32xf32>, vector<32x96xf32>, vector<34x96xf32> -> vector<34x96xf32>
    %c1_87 = arith.constant 1 : index
    %c0_88 = arith.constant 0 : index
    %c0_89 = arith.constant 0 : index
    %173 = vector.load %arg8[%c1_87, %c0_88, %c0_89] : memref<2x1x96xf32, #tpu.memory_space<vmem>>, vector<1x1x96xf32>
    %174 = vector.shape_cast %173 : vector<1x1x96xf32> to vector<1x96xf32>
    %175 = vector.broadcast %174 : vector<1x96xf32> to vector<34x96xf32>
    %176 = arith.addf %172, %175 : vector<34x96xf32>
    %177 = vector.extract_strided_slice %176 {offsets = [0, 0], sizes = [34, 32], strides = [1, 1]} : vector<34x96xf32> to vector<34x32xf32>
    %178 = vector.extract_strided_slice %176 {offsets = [0, 32], sizes = [34, 32], strides = [1, 1]} : vector<34x96xf32> to vector<34x32xf32>
    %179 = vector.extract_strided_slice %176 {offsets = [0, 64], sizes = [34, 32], strides = [1, 1]} : vector<34x96xf32> to vector<34x32xf32>
    %c1_90 = arith.constant 1 : index
    %c0_91 = arith.constant 0 : index
    %c0_92 = arith.constant 0 : index
    %180 = vector.load %arg9[%c1_90, %c0_91, %c0_92] : memref<2x32x32xf32, #tpu.memory_space<vmem>>, vector<1x32x32xf32>
    %181 = vector.shape_cast %180 : vector<1x32x32xf32> to vector<32x32xf32>
    %cst_93 = arith.constant 0.000000e+00 : f32
    %182 = vector.broadcast %cst_93 : f32 to vector<34x32xf32>
    %183 = vector.extract_strided_slice %177 {offsets = [0, 0], sizes = [34, 16], strides = [1, 1]} : vector<34x32xf32> to vector<34x16xf32>
    %184 = vector.extract_strided_slice %178 {offsets = [0, 0], sizes = [34, 16], strides = [1, 1]} : vector<34x32xf32> to vector<34x16xf32>
    %185 = vector.extract_strided_slice %179 {offsets = [0, 0], sizes = [34, 16], strides = [1, 1]} : vector<34x32xf32> to vector<34x16xf32>
    %cst_94 = arith.constant dense<0.000000e+00> : vector<34x34xf32>
    %186 = tpu.matmul %183, %184, %cst_94 {dimension_numbers = #tpu.dot_dimension_numbers<[1], [1], [0], [0], [0, 0, 1, 0], [], []>} : vector<34x16xf32>, vector<34x16xf32>, vector<34x34xf32> -> vector<34x34xf32>
    %cst_95 = arith.constant 2.500000e-01 : f32
    %187 = vector.broadcast %cst_95 : f32 to vector<34x34xf32>
    %188 = arith.mulf %186, %187 : vector<34x34xf32>
    %189 = arith.addf %188, %5 : vector<34x34xf32>
    %cst_96 = arith.constant dense<0xFF800000> : vector<34xf32>
    %190 = vector.multi_reduction <maximumf>, %189, %cst_96 [1] : vector<34x34xf32> to vector<34xf32>
    %191 = vector.shape_cast %190 : vector<34xf32> to vector<34x1xf32>
    %192 = vector.broadcast %191 : vector<34x1xf32> to vector<34x34xf32>
    %193 = arith.subf %189, %192 : vector<34x34xf32>
    %194 = math.exp %193 : vector<34x34xf32>
    %cst_97 = arith.constant dense<0.000000e+00> : vector<34xf32>
    %195 = vector.multi_reduction <add>, %194, %cst_97 [1] : vector<34x34xf32> to vector<34xf32>
    %196 = vector.shape_cast %195 : vector<34xf32> to vector<34x1xf32>
    %197 = vector.broadcast %196 : vector<34x1xf32> to vector<34x34xf32>
    %198 = arith.divf %194, %197 : vector<34x34xf32>
    %cst_98 = arith.constant dense<0.000000e+00> : vector<34x16xf32>
    %199 = tpu.matmul %198, %185, %cst_98 {dimension_numbers = #tpu.dot_dimension_numbers<[1], [0], [0], [1], [0, 0, 1, 1], [], []>} : vector<34x34xf32>, vector<34x16xf32>, vector<34x16xf32> -> vector<34x16xf32>
    %200 = vector.extract_strided_slice %181 {offsets = [0, 0], sizes = [16, 32], strides = [1, 1]} : vector<32x32xf32> to vector<16x32xf32>
    %cst_99 = arith.constant dense<0.000000e+00> : vector<34x32xf32>
    %201 = tpu.matmul %199, %200, %cst_99 {dimension_numbers = #tpu.dot_dimension_numbers<[1], [0], [0], [1], [0, 0, 1, 1], [], []>} : vector<34x16xf32>, vector<16x32xf32>, vector<34x32xf32> -> vector<34x32xf32>
    %202 = arith.addf %182, %201 : vector<34x32xf32>
    %203 = vector.extract_strided_slice %177 {offsets = [0, 16], sizes = [34, 16], strides = [1, 1]} : vector<34x32xf32> to vector<34x16xf32>
    %204 = vector.extract_strided_slice %178 {offsets = [0, 16], sizes = [34, 16], strides = [1, 1]} : vector<34x32xf32> to vector<34x16xf32>
    %205 = vector.extract_strided_slice %179 {offsets = [0, 16], sizes = [34, 16], strides = [1, 1]} : vector<34x32xf32> to vector<34x16xf32>
    %cst_100 = arith.constant dense<0.000000e+00> : vector<34x34xf32>
    %206 = tpu.matmul %203, %204, %cst_100 {dimension_numbers = #tpu.dot_dimension_numbers<[1], [1], [0], [0], [0, 0, 1, 0], [], []>} : vector<34x16xf32>, vector<34x16xf32>, vector<34x34xf32> -> vector<34x34xf32>
    %cst_101 = arith.constant 2.500000e-01 : f32
    %207 = vector.broadcast %cst_101 : f32 to vector<34x34xf32>
    %208 = arith.mulf %206, %207 : vector<34x34xf32>
    %209 = arith.addf %208, %5 : vector<34x34xf32>
    %cst_102 = arith.constant dense<0xFF800000> : vector<34xf32>
    %210 = vector.multi_reduction <maximumf>, %209, %cst_102 [1] : vector<34x34xf32> to vector<34xf32>
    %211 = vector.shape_cast %210 : vector<34xf32> to vector<34x1xf32>
    %212 = vector.broadcast %211 : vector<34x1xf32> to vector<34x34xf32>
    %213 = arith.subf %209, %212 : vector<34x34xf32>
    %214 = math.exp %213 : vector<34x34xf32>
    %cst_103 = arith.constant dense<0.000000e+00> : vector<34xf32>
    %215 = vector.multi_reduction <add>, %214, %cst_103 [1] : vector<34x34xf32> to vector<34xf32>
    %216 = vector.shape_cast %215 : vector<34xf32> to vector<34x1xf32>
    %217 = vector.broadcast %216 : vector<34x1xf32> to vector<34x34xf32>
    %218 = arith.divf %214, %217 : vector<34x34xf32>
    %cst_104 = arith.constant dense<0.000000e+00> : vector<34x16xf32>
    %219 = tpu.matmul %218, %205, %cst_104 {dimension_numbers = #tpu.dot_dimension_numbers<[1], [0], [0], [1], [0, 0, 1, 1], [], []>} : vector<34x34xf32>, vector<34x16xf32>, vector<34x16xf32> -> vector<34x16xf32>
    %220 = vector.extract_strided_slice %181 {offsets = [16, 0], sizes = [16, 32], strides = [1, 1]} : vector<32x32xf32> to vector<16x32xf32>
    %cst_105 = arith.constant dense<0.000000e+00> : vector<34x32xf32>
    %221 = tpu.matmul %219, %220, %cst_105 {dimension_numbers = #tpu.dot_dimension_numbers<[1], [0], [0], [1], [0, 0, 1, 1], [], []>} : vector<34x16xf32>, vector<16x32xf32>, vector<34x32xf32> -> vector<34x32xf32>
    %222 = arith.addf %202, %221 : vector<34x32xf32>
    %223 = arith.addf %143, %222 : vector<34x32xf32>
    %c1_106 = arith.constant 1 : index
    %c0_107 = arith.constant 0 : index
    %c0_108 = arith.constant 0 : index
    %224 = vector.load %arg10[%c1_106, %c0_107, %c0_108] : memref<2x1x32xf32, #tpu.memory_space<vmem>>, vector<1x1x32xf32>
    %225 = vector.shape_cast %224 : vector<1x1x32xf32> to vector<1x32xf32>
    %226 = vector.broadcast %225 : vector<1x32xf32> to vector<34x32xf32>
    %227 = arith.addf %223, %226 : vector<34x32xf32>
    %c1_109 = arith.constant 1 : index
    %c0_110 = arith.constant 0 : index
    %c0_111 = arith.constant 0 : index
    %228 = vector.load %arg11[%c1_109, %c0_110, %c0_111] : memref<2x1x32xf32, #tpu.memory_space<vmem>>, vector<1x1x32xf32>
    %229 = vector.shape_cast %228 : vector<1x1x32xf32> to vector<1x32xf32>
    %c1_112 = arith.constant 1 : index
    %c0_113 = arith.constant 0 : index
    %c0_114 = arith.constant 0 : index
    %230 = vector.load %arg12[%c1_112, %c0_113, %c0_114] : memref<2x1x32xf32, #tpu.memory_space<vmem>>, vector<1x1x32xf32>
    %231 = vector.shape_cast %230 : vector<1x1x32xf32> to vector<1x32xf32>
    %cst_115 = arith.constant dense<0.000000e+00> : vector<34xf32>
    %232 = vector.multi_reduction <add>, %227, %cst_115 [1] : vector<34x32xf32> to vector<34xf32>
    %233 = vector.shape_cast %232 : vector<34xf32> to vector<34x1xf32>
    %cst_116 = arith.constant 3.200000e+01 : f32
    %234 = vector.broadcast %cst_116 : f32 to vector<34x1xf32>
    %235 = arith.divf %233, %234 : vector<34x1xf32>
    %236 = vector.broadcast %235 : vector<34x1xf32> to vector<34x32xf32>
    %237 = arith.subf %227, %236 : vector<34x32xf32>
    %238 = arith.mulf %237, %237 : vector<34x32xf32>
    %cst_117 = arith.constant dense<0.000000e+00> : vector<34xf32>
    %239 = vector.multi_reduction <add>, %238, %cst_117 [1] : vector<34x32xf32> to vector<34xf32>
    %240 = vector.shape_cast %239 : vector<34xf32> to vector<34x1xf32>
    %cst_118 = arith.constant 3.200000e+01 : f32
    %241 = vector.broadcast %cst_118 : f32 to vector<34x1xf32>
    %242 = arith.divf %240, %241 : vector<34x1xf32>
    %243 = vector.broadcast %235 : vector<34x1xf32> to vector<34x32xf32>
    %244 = arith.subf %227, %243 : vector<34x32xf32>
    %cst_119 = arith.constant 9.99999996E-13 : f32
    %245 = vector.broadcast %cst_119 : f32 to vector<34x1xf32>
    %246 = arith.addf %242, %245 : vector<34x1xf32>
    %247 = math.rsqrt %246 : vector<34x1xf32>
    %248 = vector.broadcast %247 : vector<34x1xf32> to vector<34x32xf32>
    %249 = arith.mulf %244, %248 : vector<34x32xf32>
    %250 = vector.broadcast %229 : vector<1x32xf32> to vector<34x32xf32>
    %251 = arith.mulf %249, %250 : vector<34x32xf32>
    %252 = vector.broadcast %231 : vector<1x32xf32> to vector<34x32xf32>
    %253 = arith.addf %251, %252 : vector<34x32xf32>
    %c1_120 = arith.constant 1 : index
    %c0_121 = arith.constant 0 : index
    %c0_122 = arith.constant 0 : index
    %254 = vector.load %arg13[%c1_120, %c0_121, %c0_122] : memref<2x32x64xf32, #tpu.memory_space<vmem>>, vector<1x32x64xf32>
    %255 = vector.shape_cast %254 : vector<1x32x64xf32> to vector<32x64xf32>
    %cst_123 = arith.constant dense<0.000000e+00> : vector<34x64xf32>
    %256 = tpu.matmul %253, %255, %cst_123 {dimension_numbers = #tpu.dot_dimension_numbers<[1], [0], [0], [1], [0, 0, 1, 1], [], []>} : vector<34x32xf32>, vector<32x64xf32>, vector<34x64xf32> -> vector<34x64xf32>
    %c1_124 = arith.constant 1 : index
    %c0_125 = arith.constant 0 : index
    %c0_126 = arith.constant 0 : index
    %257 = vector.load %arg14[%c1_124, %c0_125, %c0_126] : memref<2x1x64xf32, #tpu.memory_space<vmem>>, vector<1x1x64xf32>
    %258 = vector.shape_cast %257 : vector<1x1x64xf32> to vector<1x64xf32>
    %259 = vector.broadcast %258 : vector<1x64xf32> to vector<34x64xf32>
    %260 = arith.addf %256, %259 : vector<34x64xf32>
    %cst_127 = arith.constant 5.000000e-01 : f32
    %261 = vector.broadcast %cst_127 : f32 to vector<34x64xf32>
    %262 = arith.mulf %261, %260 : vector<34x64xf32>
    %cst_128 = arith.constant 4.471500e-02 : f32
    %263 = vector.broadcast %cst_128 : f32 to vector<34x64xf32>
    %264 = arith.mulf %263, %260 : vector<34x64xf32>
    %265 = arith.mulf %264, %260 : vector<34x64xf32>
    %266 = arith.mulf %265, %260 : vector<34x64xf32>
    %267 = arith.addf %260, %266 : vector<34x64xf32>
    %cst_129 = arith.constant 0.797884583 : f32
    %268 = vector.broadcast %cst_129 : f32 to vector<34x64xf32>
    %269 = arith.mulf %268, %267 : vector<34x64xf32>
    %270 = math.tanh %269 : vector<34x64xf32>
    %cst_130 = arith.constant 1.000000e+00 : f32
    %271 = vector.broadcast %cst_130 : f32 to vector<34x64xf32>
    %272 = arith.addf %271, %270 : vector<34x64xf32>
    %273 = arith.mulf %262, %272 : vector<34x64xf32>
    %c1_131 = arith.constant 1 : index
    %c0_132 = arith.constant 0 : index
    %c0_133 = arith.constant 0 : index
    %274 = vector.load %arg15[%c1_131, %c0_132, %c0_133] : memref<2x64x32xf32, #tpu.memory_space<vmem>>, vector<1x64x32xf32>
    %275 = vector.shape_cast %274 : vector<1x64x32xf32> to vector<64x32xf32>
    %cst_134 = arith.constant dense<0.000000e+00> : vector<34x32xf32>
    %276 = tpu.matmul %273, %275, %cst_134 {dimension_numbers = #tpu.dot_dimension_numbers<[1], [0], [0], [1], [0, 0, 1, 1], [], []>} : vector<34x64xf32>, vector<64x32xf32>, vector<34x32xf32> -> vector<34x32xf32>
    %277 = arith.addf %227, %276 : vector<34x32xf32>
    %c1_135 = arith.constant 1 : index
    %c0_136 = arith.constant 0 : index
    %c0_137 = arith.constant 0 : index
    %278 = vector.load %arg16[%c1_135, %c0_136, %c0_137] : memref<2x1x32xf32, #tpu.memory_space<vmem>>, vector<1x1x32xf32>
    %279 = vector.shape_cast %278 : vector<1x1x32xf32> to vector<1x32xf32>
    %280 = vector.broadcast %279 : vector<1x32xf32> to vector<34x32xf32>
    %281 = arith.addf %277, %280 : vector<34x32xf32>
    %c0_138 = arith.constant 0 : index
    %c0_139 = arith.constant 0 : index
    %282 = vector.load %arg3[%c0_138, %c0_139] : memref<2x34xf32, #tpu.memory_space<vmem>>, vector<2x34xf32>
    %cst_140 = arith.constant dense<0.000000e+00> : vector<2x32xf32>
    %283 = tpu.matmul %282, %281, %cst_140 {dimension_numbers = #tpu.dot_dimension_numbers<[1], [0], [0], [1], [0, 0, 1, 1], [], []>} : vector<2x34xf32>, vector<34x32xf32>, vector<2x32xf32> -> vector<2x32xf32>
    %c0_141 = arith.constant 0 : index
    %c0_142 = arith.constant 0 : index
    %284 = vector.load %arg17[%c0_141, %c0_142] : memref<1x32xf32, #tpu.memory_space<vmem>>, vector<1x32xf32>
    %c0_143 = arith.constant 0 : index
    %c0_144 = arith.constant 0 : index
    %285 = vector.load %arg18[%c0_143, %c0_144] : memref<1x32xf32, #tpu.memory_space<vmem>>, vector<1x32xf32>
    %cst_145 = arith.constant dense<0.000000e+00> : vector<2xf32>
    %286 = vector.multi_reduction <add>, %283, %cst_145 [1] : vector<2x32xf32> to vector<2xf32>
    %287 = vector.shape_cast %286 : vector<2xf32> to vector<2x1xf32>
    %cst_146 = arith.constant 3.200000e+01 : f32
    %288 = vector.broadcast %cst_146 : f32 to vector<2x1xf32>
    %289 = arith.divf %287, %288 : vector<2x1xf32>
    %290 = vector.broadcast %289 : vector<2x1xf32> to vector<2x32xf32>
    %291 = arith.subf %283, %290 : vector<2x32xf32>
    %292 = arith.mulf %291, %291 : vector<2x32xf32>
    %cst_147 = arith.constant dense<0.000000e+00> : vector<2xf32>
    %293 = vector.multi_reduction <add>, %292, %cst_147 [1] : vector<2x32xf32> to vector<2xf32>
    %294 = vector.shape_cast %293 : vector<2xf32> to vector<2x1xf32>
    %cst_148 = arith.constant 3.200000e+01 : f32
    %295 = vector.broadcast %cst_148 : f32 to vector<2x1xf32>
    %296 = arith.divf %294, %295 : vector<2x1xf32>
    %297 = vector.broadcast %289 : vector<2x1xf32> to vector<2x32xf32>
    %298 = arith.subf %283, %297 : vector<2x32xf32>
    %cst_149 = arith.constant 9.99999996E-13 : f32
    %299 = vector.broadcast %cst_149 : f32 to vector<2x1xf32>
    %300 = arith.addf %296, %299 : vector<2x1xf32>
    %301 = math.rsqrt %300 : vector<2x1xf32>
    %302 = vector.broadcast %301 : vector<2x1xf32> to vector<2x32xf32>
    %303 = arith.mulf %298, %302 : vector<2x32xf32>
    %304 = vector.broadcast %284 : vector<1x32xf32> to vector<2x32xf32>
    %305 = arith.mulf %303, %304 : vector<2x32xf32>
    %306 = vector.broadcast %285 : vector<1x32xf32> to vector<2x32xf32>
    %307 = arith.addf %305, %306 : vector<2x32xf32>
    %c0_150 = arith.constant 0 : index
    %c0_151 = arith.constant 0 : index
    %308 = vector.load %arg19[%c0_150, %c0_151] : memref<32x512xf32, #tpu.memory_space<vmem>>, vector<32x512xf32>
    %cst_152 = arith.constant dense<0.000000e+00> : vector<2x512xf32>
    %309 = tpu.matmul %307, %308, %cst_152 {dimension_numbers = #tpu.dot_dimension_numbers<[1], [0], [0], [1], [0, 0, 1, 1], [], []>} : vector<2x32xf32>, vector<32x512xf32>, vector<2x512xf32> -> vector<2x512xf32>
    %c0_153 = arith.constant 0 : index
    %c0_154 = arith.constant 0 : index
    %310 = vector.load %arg20[%c0_153, %c0_154] : memref<1x512xf32, #tpu.memory_space<vmem>>, vector<1x512xf32>
    %311 = vector.broadcast %310 : vector<1x512xf32> to vector<2x512xf32>
    %312 = arith.addf %309, %311 : vector<2x512xf32>
    %cst_155 = arith.constant 0.000000e+00 : f32
    %313 = vector.broadcast %cst_155 : f32 to vector<2x512xf32>
    %314 = arith.maximumf %312, %313 : vector<2x512xf32>
    %c0_156 = arith.constant 0 : index
    %c0_157 = arith.constant 0 : index
    %315 = vector.load %arg21[%c0_156, %c0_157] : memref<512x128xf32, #tpu.memory_space<vmem>>, vector<512x128xf32>
    %cst_158 = arith.constant dense<0.000000e+00> : vector<2x128xf32>
    %316 = tpu.matmul %314, %315, %cst_158 {dimension_numbers = #tpu.dot_dimension_numbers<[1], [0], [0], [1], [0, 0, 1, 1], [], []>} : vector<2x512xf32>, vector<512x128xf32>, vector<2x128xf32> -> vector<2x128xf32>
    %c0_159 = arith.constant 0 : index
    %c0_160 = arith.constant 0 : index
    %317 = vector.load %arg22[%c0_159, %c0_160] : memref<1x128xf32, #tpu.memory_space<vmem>>, vector<1x128xf32>
    %318 = vector.broadcast %317 : vector<1x128xf32> to vector<2x128xf32>
    %319 = arith.addf %316, %318 : vector<2x128xf32>
    %cst_161 = arith.constant 5.000000e-01 : f32
    %320 = vector.broadcast %cst_161 : f32 to vector<2x128xf32>
    %321 = arith.mulf %320, %319 : vector<2x128xf32>
    %cst_162 = arith.constant 4.471500e-02 : f32
    %322 = vector.broadcast %cst_162 : f32 to vector<2x128xf32>
    %323 = arith.mulf %322, %319 : vector<2x128xf32>
    %324 = arith.mulf %323, %319 : vector<2x128xf32>
    %325 = arith.mulf %324, %319 : vector<2x128xf32>
    %326 = arith.addf %319, %325 : vector<2x128xf32>
    %cst_163 = arith.constant 0.797884583 : f32
    %327 = vector.broadcast %cst_163 : f32 to vector<2x128xf32>
    %328 = arith.mulf %327, %326 : vector<2x128xf32>
    %329 = math.tanh %328 : vector<2x128xf32>
    %cst_164 = arith.constant 1.000000e+00 : f32
    %330 = vector.broadcast %cst_164 : f32 to vector<2x128xf32>
    %331 = arith.addf %330, %329 : vector<2x128xf32>
    %332 = arith.mulf %321, %331 : vector<2x128xf32>
    %c0_165 = arith.constant 0 : index
    %c0_166 = arith.constant 0 : index
    %333 = vector.load %arg23[%c0_165, %c0_166] : memref<128x128xf32, #tpu.memory_space<vmem>>, vector<128x128xf32>
    %cst_167 = arith.constant dense<0.000000e+00> : vector<2x128xf32>
    %334 = tpu.matmul %332, %333, %cst_167 {dimension_numbers = #tpu.dot_dimension_numbers<[1], [0], [0], [1], [0, 0, 1, 1], [], []>} : vector<2x128xf32>, vector<128x128xf32>, vector<2x128xf32> -> vector<2x128xf32>
    %c0_168 = arith.constant 0 : index
    %c0_169 = arith.constant 0 : index
    %335 = vector.load %arg24[%c0_168, %c0_169] : memref<1x128xf32, #tpu.memory_space<vmem>>, vector<1x128xf32>
    %336 = vector.broadcast %335 : vector<1x128xf32> to vector<2x128xf32>
    %337 = arith.addf %334, %336 : vector<2x128xf32>
    %c0_170 = arith.constant 0 : index
    %c0_171 = arith.constant 0 : index
    %338 = vector.load %arg25[%c0_170, %c0_171] : memref<2x128xf32, #tpu.memory_space<vmem>>, vector<2x128xf32>
    tpu.vector_store %arg25[%c0_170, %c0_171], %337 {strides = array<i32>} : memref<2x128xf32, #tpu.memory_space<vmem>>, vector<2x128xf32>,
    return
  }
}

</mosaic_0001>

<llo_original>
// kernel: tile.7
$region0: #{tile.7}
  %s0 = inlined_call_operand.vmem [shape: f32[2,17,32], index: 0, kind: input, shape index: {}]
  %s1 = inlined_call_operand.vmem [shape: f32[34,32], index: 1, kind: output, shape index: {}]
  %v2 = vld [vmem:[%s0] sm:$0xff]
  %vm3 = vcmask 261120
  %4 = vst.msk [vmem:[%s1] sm:$0xff] %vm3, %v2
  %s5 = scalar_lea.vmem %s0, 8
  %v6 = vld [vmem:[%s5] sm:$0xff]
  %vm7 = vcmask 261120
  %s8 = scalar_lea.vmem %s1, 8
  %9 = vst.msk [vmem:[%s8] sm:$0xff] %vm7, %v6
  %s10 = scalar_lea.vmem %s0, 16
  %s11 = smov 3
  %v12 = vld [vmem:[%s10] ss:$8 sm:%s11]
  %vm13 = vcmask 261120
  %s14 = scalar_lea.vmem %s1, 16
  %15 = vst.msk [vmem:[%s14] sm:$0x3] %vm13, %v12
  %s16 = scalar_lea.vmem %s0, 25
  %v17 = vld [vmem:[%s16] sm:$0xff]
  %vm18 = vcmask 261120
  %s19 = scalar_lea.vmem %s1, 18
  %20 = vst.msk [vmem:[%s19] sm:$0xff] %vm18, %v17
  %s21 = scalar_lea.vmem %s0, 33
  %v22 = vld [vmem:[%s21] sm:$0xff]
  %vm23 = vcmask 261120
  %s24 = scalar_lea.vmem %s1, 26
  %25 = vst.msk [vmem:[%s24] sm:$0xff] %vm23, %v22

// kernel: vit_classifier_forward.1
$region0: #{vit_classifier_forward.1}
  #allocation0 [shape = 'u32[]', space=smem, size = 0x4, offset = 0x4, fixed_abs, tag = 'smem constant byte address 0x4 - core index']
  #allocation1 [shape = 'u32[72,128]{1,0:T(1,128)}', space=vmem, size = 0x9000, scoped, tag = 'internal scratch']
  %s0 = inlined_call_operand.vmem [shape: f32[34,49], index: 0, kind: input, shape index: {}]
  %s1 = inlined_call_operand.vmem [shape: f32[49,32], index: 1, kind: input, shape index: {}]
  %s2 = inlined_call_operand.vmem [shape: f32[34,32], index: 2, kind: input, shape index: {}]
  %s3 = inlined_call_operand.vmem [shape: f32[2,34], index: 3, kind: input, shape index: {}]
  %s4 = inlined_call_operand.vmem [shape: f32[34,34], index: 4, kind: input, shape index: {}]
  %s5 = inlined_call_operand.vmem [shape: f32[2,1,32], index: 5, kind: input, shape index: {}]
  %s6 = inlined_call_operand.vmem [shape: f32[2,1,32], index: 6, kind: input, shape index: {}]
  %s7 = inlined_call_operand.vmem [shape: f32[2,32,96], index: 7, kind: input, shape index: {}]
  %s8 = inlined_call_operand.vmem [shape: f32[2,1,96], index: 8, kind: input, shape index: {}]
  %s9 = inlined_call_operand.vmem [shape: f32[2,32,32], index: 9, kind: input, shape index: {}]
  %s10 = inlined_call_operand.vmem [shape: f32[2,1,32], index: 10, kind: input, shape index: {}]
  %s11 = inlined_call_operand.vmem [shape: f32[2,1,32], index: 11, kind: input, shape index: {}]
  %s12 = inlined_call_operand.vmem [shape: f32[2,1,32], index: 12, kind: input, shape index: {}]
  %s13 = inlined_call_operand.vmem [shape: f32[2,32,64], index: 13, kind: input, shape index: {}]
  %s14 = inlined_call_operand.vmem [shape: f32[2,1,64], index: 14, kind: input, shape index: {}]
  %s15 = inlined_call_operand.vmem [shape: f32[2,64,32], index: 15, kind: input, shape index: {}]
  %s16 = inlined_call_operand.vmem [shape: f32[2,1,32], index: 16, kind: input, shape index: {}]
  %s17 = inlined_call_operand.vmem [shape: f32[1,32], index: 17, kind: input, shape index: {}]
  %s18 = inlined_call_operand.vmem [shape: f32[1,32], index: 18, kind: input, shape index: {}]
  %s19 = inlined_call_operand.vmem [shape: f32[32,512], index: 19, kind: input, shape index: {}]
  %s20 = inlined_call_operand.vmem [shape: f32[1,512], index: 20, kind: input, shape index: {}]
  %s21 = inlined_call_operand.vmem [shape: f32[512,128], index: 21, kind: input, shape index: {}]
  %s22 = inlined_call_operand.vmem [shape: f32[1,128], index: 22, kind: input, shape index: {}]
  %s23 = inlined_call_operand.vmem [shape: f32[128,128], index: 23, kind: input, shape index: {}]
  %s24 = inlined_call_operand.vmem [shape: f32[1,128], index: 24, kind: input, shape index: {}]
  %s25 = inlined_call_operand.hbm [shape: f32[2,128], index: 25, kind: output, shape index: {}]
  %s26 = sld [smem:[#allocation0]]
  $region110: #{vit_classifier_forward.1} parent=0
    _
  %s28 = ssub.s32 1, %s26
  %s29 = scalar_select 0, %s28, %s26
  $region1: #{vit_classifier_forward.1} parent=0
    #allocation2 [shape = 'u8[1024]{0}', space=vmem, size = 0x400, scoped, tag = 'output window, operand 0, single buffered']
    #allocation3 [shape = 's32[1]{0}', space=sflag, size = 0x4, scoped, tag = 'scoped memory for vit_classifier_forward.1']
    %30 = vsyncpa [#allocation3], 0
    // Predicated region
    $region2: #{vit_classifier_forward.1} parent=1 // pred_check
      _
    $region3: #{vit_classifier_forward.1} parent=1 // pred_check_branch
      %32 = sbr.rel (0) target = $region5
    $region4: #{vit_classifier_forward.1} parent=1 // pred_region
      _
    $region5: #{vit_classifier_forward.1} parent=1 // pred_fallthru
      _
    // Predicated region
    $region6: #{vit_classifier_forward.1} parent=1 // pred_check
      _
    $region7: #{vit_classifier_forward.1} parent=1 // pred_check_branch
      %34 = sbr.rel (0) target = $region9
    $region8: #{vit_classifier_forward.1} parent=1 // pred_region
      _
    $region9: #{vit_classifier_forward.1} parent=1 // pred_fallthru
      _
    // Predicated region
    $region10: #{vit_classifier_forward.1} parent=1 // pred_check
      _
    $region11: #{vit_classifier_forward.1} parent=1 // pred_check_branch
      %36 = sbr.rel (0) target = $region13
    $region12: #{vit_classifier_forward.1} parent=1 // pred_region
      _
    $region13: #{vit_classifier_forward.1} parent=1 // pred_fallthru
      _
    // Predicated region
    $region14: #{vit_classifier_forward.1} parent=1 // pred_check
      _
    $region15: #{vit_classifier_forward.1} parent=1 // pred_check_branch
      %38 = sbr.rel (0) target = $region17
    $region16: #{vit_classifier_forward.1} parent=1 // pred_region
      _
    $region17: #{vit_classifier_forward.1} parent=1 // pred_fallthru
      _
    // Predicated region
    $region18: #{vit_classifier_forward.1} parent=1 // pred_check
      _
    $region19: #{vit_classifier_forward.1} parent=1 // pred_check_branch
      %40 = sbr.rel (0) target = $region21
    $region20: #{vit_classifier_forward.1} parent=1 // pred_region
      _
    $region21: #{vit_classifier_forward.1} parent=1 // pred_fallthru
      _
    // Predicated region
    $region22: #{vit_classifier_forward.1} parent=1 // pred_check
      _
    $region23: #{vit_classifier_forward.1} parent=1 // pred_check_branch
      %42 = sbr.rel (0) target = $region25
    $region24: #{vit_classifier_forward.1} parent=1 // pred_region
      _
    $region25: #{vit_classifier_forward.1} parent=1 // pred_fallthru
      _
    // Predicated region
    $region26: #{vit_classifier_forward.1} parent=1 // pred_check
      _
    $region27: #{vit_classifier_forward.1} parent=1 // pred_check_branch
      %44 = sbr.rel (0) target = $region29
    $region28: #{vit_classifier_forward.1} parent=1 // pred_region
      _
    $region29: #{vit_classifier_forward.1} parent=1 // pred_fallthru
      _
    // Predicated region
    $region30: #{vit_classifier_forward.1} parent=1 // pred_check
      _
    $region31: #{vit_classifier_forward.1} parent=1 // pred_check_branch
      %46 = sbr.rel (0) target = $region33
    $region32: #{vit_classifier_forward.1} parent=1 // pred_region
      _
    $region33: #{vit_classifier_forward.1} parent=1 // pred_fallthru
      _
    // Predicated region
    $region34: #{vit_classifier_forward.1} parent=1 // pred_check
      _
    $region35: #{vit_classifier_forward.1} parent=1 // pred_check_branch
      %48 = sbr.rel (0) target = $region37
    $region36: #{vit_classifier_forward.1} parent=1 // pred_region
      _
    $region37: #{vit_classifier_forward.1} parent=1 // pred_fallthru
      _
    // Predicated region
    $region38: #{vit_classifier_forward.1} parent=1 // pred_check
      _
    $region39: #{vit_classifier_forward.1} parent=1 // pred_check_branch
      %50 = sbr.rel (0) target = $region41
    $region40: #{vit_classifier_forward.1} parent=1 // pred_region
      _
    $region41: #{vit_classifier_forward.1} parent=1 // pred_fallthru
      _
    // Predicated region
    $region42: #{vit_classifier_forward.1} parent=1 // pred_check
      _
    $region43: #{vit_classifier_forward.1} parent=1 // pred_check_branch
      %52 = sbr.rel (0) target = $region45
    $region44: #{vit_classifier_forward.1} parent=1 // pred_region
      _
    $region45: #{vit_classifier_forward.1} parent=1 // pred_fallthru
      _
    // Predicated region
    $region46: #{vit_classifier_forward.1} parent=1 // pred_check
      _
    $region47: #{vit_classifier_forward.1} parent=1 // pred_check_branch
      %54 = sbr.rel (0) target = $region49
    $region48: #{vit_classifier_forward.1} parent=1 // pred_region
      _
    $region49: #{vit_classifier_forward.1} parent=1 // pred_fallthru
      _
    // Predicated region
    $region50: #{vit_classifier_forward.1} parent=1 // pred_check
      _
    $region51: #{vit_classifier_forward.1} parent=1 // pred_check_branch
      %56 = sbr.rel (0) target = $region53
    $region52: #{vit_classifier_forward.1} parent=1 // pred_region
      _
    $region53: #{vit_classifier_forward.1} parent=1 // pred_fallthru
      _
    // Predicated region
    $region54: #{vit_classifier_forward.1} parent=1 // pred_check
      _
    $region55: #{vit_classifier_forward.1} parent=1 // pred_check_branch
      %58 = sbr.rel (0) target = $region57
    $region56: #{vit_classifier_forward.1} parent=1 // pred_region
      _
    $region57: #{vit_classifier_forward.1} parent=1 // pred_fallthru
      _
    // Predicated region
    $region58: #{vit_classifier_forward.1} parent=1 // pred_check
      _
    $region59: #{vit_classifier_forward.1} parent=1 // pred_check_branch
      %60 = sbr.rel (0) target = $region61
    $region60: #{vit_classifier_forward.1} parent=1 // pred_region
      _
    $region61: #{vit_classifier_forward.1} parent=1 // pred_fallthru
      _
    // Predicated region
    $region62: #{vit_classifier_forward.1} parent=1 // pred_check
      _
    $region63: #{vit_classifier_forward.1} parent=1 // pred_check_branch
      %62 = sbr.rel (0) target = $region65
    $region64: #{vit_classifier_forward.1} parent=1 // pred_region
      _
    $region65: #{vit_classifier_forward.1} parent=1 // pred_fallthru
      _
    // Predicated region
    $region66: #{vit_classifier_forward.1} parent=1 // pred_check
      _
    $region67: #{vit_classifier_forward.1} parent=1 // pred_check_branch
      %64 = sbr.rel (0) target = $region69
    $region68: #{vit_classifier_forward.1} parent=1 // pred_region
      _
    $region69: #{vit_classifier_forward.1} parent=1 // pred_fallthru
      _
    // Predicated region
    $region70: #{vit_classifier_forward.1} parent=1 // pred_check
      _
    $region71: #{vit_classifier_forward.1} parent=1 // pred_check_branch
      %66 = sbr.rel (0) target = $region73
    $region72: #{vit_classifier_forward.1} parent=1 // pred_region
      _
    $region73: #{vit_classifier_forward.1} parent=1 // pred_fallthru
      _
    // Predicated region
    $region74: #{vit_classifier_forward.1} parent=1 // pred_check
      _
    $region75: #{vit_classifier_forward.1} parent=1 // pred_check_branch
      %68 = sbr.rel (0) target = $region77
    $region76: #{vit_classifier_forward.1} parent=1 // pred_region
      _
    $region77: #{vit_classifier_forward.1} parent=1 // pred_fallthru
      _
    // Predicated region
    $region78: #{vit_classifier_forward.1} parent=1 // pred_check
      _
    $region79: #{vit_classifier_forward.1} parent=1 // pred_check_branch
      %70 = sbr.rel (0) target = $region81
    $region80: #{vit_classifier_forward.1} parent=1 // pred_region
      _
    $region81: #{vit_classifier_forward.1} parent=1 // pred_fallthru
      _
    // Predicated region
    $region82: #{vit_classifier_forward.1} parent=1 // pred_check
      _
    $region83: #{vit_classifier_forward.1} parent=1 // pred_check_branch
      %72 = sbr.rel (0) target = $region85
    $region84: #{vit_classifier_forward.1} parent=1 // pred_region
      _
    $region85: #{vit_classifier_forward.1} parent=1 // pred_fallthru
      _
    // Predicated region
    $region86: #{vit_classifier_forward.1} parent=1 // pred_check
      _
    $region87: #{vit_classifier_forward.1} parent=1 // pred_check_branch
      %74 = sbr.rel (0) target = $region89
    $region88: #{vit_classifier_forward.1} parent=1 // pred_region
      _
    $region89: #{vit_classifier_forward.1} parent=1 // pred_fallthru
      _
    // Predicated region
    $region90: #{vit_classifier_forward.1} parent=1 // pred_check
      _
    $region91: #{vit_classifier_forward.1} parent=1 // pred_check_branch
      %76 = sbr.rel (0) target = $region93
    $region92: #{vit_classifier_forward.1} parent=1 // pred_region
      _
    $region93: #{vit_classifier_forward.1} parent=1 // pred_fallthru
      _
    // Predicated region
    $region94: #{vit_classifier_forward.1} parent=1 // pred_check
      _
    $region95: #{vit_classifier_forward.1} parent=1 // pred_check_branch
      %78 = sbr.rel (0) target = $region97
    $region96: #{vit_classifier_forward.1} parent=1 // pred_region
      _
    $region97: #{vit_classifier_forward.1} parent=1 // pred_fallthru
      _
    // Predicated region
    $region98: #{vit_classifier_forward.1} parent=1 // pred_check
      _
    $region99: #{vit_classifier_forward.1} parent=1 // pred_check_branch
      %80 = sbr.rel (0) target = $region101
    $region100: #{vit_classifier_forward.1} parent=1 // pred_region
      _
    $region101: #{vit_classifier_forward.1} parent=1 // pred_fallthru
      _
    %v81 = vld [vmem:[%s0] sm:$0xff]
    %v82 = vld [vmem:[%s0 + $0x8] sm:$0xff]
    %v83 = vld [vmem:[%s0 + $0x10] sm:$0xff]
    %v84 = vld [vmem:[%s0 + $0x18] sm:$0xff]
    %v85 = vld [vmem:[%s0 + $0x20] sm:$0x3]
    %v86 = vld [vmem:[%s1] sm:$0xff]
    %v87 = vld [vmem:[%s1 + $0x8] sm:$0xff]
    %v88 = vld [vmem:[%s1 + $0x10] sm:$0xff]
    %v89 = vld [vmem:[%s1 + $0x18] sm:$0xff]
    %v90 = vld [vmem:[%s1 + $0x20] sm:$0xff]
    %v91 = vld [vmem:[%s1 + $0x28] sm:$0xff]
    %v92 = vld [vmem:[%s1 + $0x30] sm:$0x1]
    %v93 = vld [vmem:[%s2] sm:$0xff]
    %v94 = vld [vmem:[%s2 + $0x8] sm:$0xff]
    %v95 = vld [vmem:[%s2 + $0x10] sm:$0xff]
    %v96 = vld [vmem:[%s2 + $0x18] sm:$0xff]
    %v97 = vld [vmem:[%s2 + $0x20] sm:$0x3]
    %vm98 = vcmask 400384
    %v100 = vsel %vm98, %v81, 0
    %v103 = vsel %vm98, %v82, 0
    %v106 = vsel %vm98, %v83, 0
    %v109 = vsel %vm98, %v84, 0
    %v112 = vsel %vm98, %v85, 0
    %vm114 = vcmask 1040384
    %v116 = vsel %vm114, %v92, 0
    %118 = vmatpush.msra.mxu0 0.0
    %119 = vmatpush.msra.mxu0 0.0
    %120 = vmatpush.msra.mxu0 0.0
    %121 = vmatpush.msra.mxu0 0.0
    %122 = vmatpush.msra.mxu0 0.0
    %123 = vmatpush.msra.mxu0 0.0
    %124 = vmatpush.msra.mxu0 0.0
    %125 = vmatpush.msra.mxu0 0.0
    %126 = vmatpush.msra.mxu0 0.0
    %127 = vmatpush.msra.mxu0 %v116
    %128 = vmatpush.msra.mxu0 %v91
    %129 = vmatpush.msra.mxu0 %v90
    %130 = vmatpush.msra.mxu0 %v89
    %131 = vmatpush.msra.mxu0 %v88
    %132 = vmatpush.msra.mxu0 %v87
    %133 = vmatpush.msra.mxu0 %v86
    %134 = vmatmul.f32.gmra.mxu0 %v100
    %v135 = vpop.f32.mrf.mxu0
    %v136 = vadd.f32 %v93, %v135
    %137 = vmatmul.f32.gmra.mxu0 %v103
    %v138 = vpop.f32.mrf.mxu0
    %v139 = vadd.f32 %v94, %v138
    %140 = vmatmul.f32.gmra.mxu0 %v106
    %v141 = vpop.f32.mrf.mxu0
    %v142 = vadd.f32 %v95, %v141
    %143 = vmatmul.f32.gmra.mxu0 %v109
    %v144 = vpop.f32.mrf.mxu0
    %v145 = vadd.f32 %v96, %v144
    %146 = vmatmul.f32.gmra.mxu0 %v112
    %v147 = vpop.f32.mrf.mxu0
    %v148 = vadd.f32 %v97, %v147
    %149 = vdwg.mxu0
    %v150 = vld [vmem:[%s4] sm:$0xff]
    %v151 = vld [vmem:[%s4 + $0x8] sm:$0xff]
    %v152 = vld [vmem:[%s4 + $0x10] sm:$0xff]
    %v153 = vld [vmem:[%s4 + $0x18] sm:$0xff]
    %v154 = vld [vmem:[%s4 + $0x20] sm:$0x3]
    %v155 = vld [vmem:[%s5] sm:$0x1]
    %v156 = vld [vmem:[%s6] sm:$0x1]
    %vm157 = vcmask 261120
    %v158 = vsel %vm157, %v136, 0.0
    %159 = vadd.xlane.f32.xlu0 %v158
    %v160 = vpop.xlane.xlu0 %159
    %v161 = vsel %vm157, %v139, 0.0
    %162 = vadd.xlane.f32.xlu0 %v161
    %v163 = vpop.xlane.xlu0 %162
    %v164 = vsel %vm157, %v142, 0.0
    %165 = vadd.xlane.f32.xlu0 %v164
    %v166 = vpop.xlane.xlu0 %165
    %v167 = vsel %vm157, %v145, 0.0
    %168 = vadd.xlane.f32.xlu0 %v167
    %v169 = vpop.xlane.xlu0 %168
    %vm170 = vcmask 254976
    %v171 = vsel %vm170, %v148, 0.0
    %172 = vadd.xlane.f32.xlu0 %v171
    %v173 = vpop.xlane.xlu0 %172
    %v174 = vrcp.pop 32.0
    %v175 = vmul.f32 32.0, %v174
    %v176 = vsub.f32 1.0, %v175
    %v177 = vmul.f32 %v174, %v176
    %v178 = vadd.f32 %v174, %v177
    %vm179 = vweird.f32 %v174
    %v180 = vsel %vm179, %v174, %v178
    %v181 = vmul.f32 %v160, %v180
    %v182 = vmul.f32 %v163, %v180
    %v183 = vmul.f32 %v166, %v180
    %v184 = vmul.f32 %v169, %v180
    %v185 = vmul.f32 %v173, %v180
    %v186 = vsub.f32 %v136, %v181
    %v187 = vsub.f32 %v139, %v182
    %v188 = vsub.f32 %v142, %v183
    %v189 = vsub.f32 %v145, %v184
    %v190 = vsub.f32 %v148, %v185
    %v191 = vmul.f32 %v186, %v186
    %v192 = vmul.f32 %v187, %v187
    %v193 = vmul.f32 %v188, %v188
    %v194 = vmul.f32 %v189, %v189
    %v195 = vmul.f32 %v190, %v190
    %v196 = vsel %vm157, %v191, 0.0
    %197 = vadd.xlane.f32.xlu0 %v196
    %v198 = vpop.xlane.xlu0 %197
    %v199 = vsel %vm157, %v192, 0.0
    %200 = vadd.xlane.f32.xlu0 %v199
    %v201 = vpop.xlane.xlu0 %200
    %v202 = vsel %vm157, %v193, 0.0
    %203 = vadd.xlane.f32.xlu0 %v202
    %v204 = vpop.xlane.xlu0 %203
    %v205 = vsel %vm157, %v194, 0.0
    %206 = vadd.xlane.f32.xlu0 %v205
    %v207 = vpop.xlane.xlu0 %206
    %v208 = vsel %vm170, %v195, 0.0
    %209 = vadd.xlane.f32.xlu0 %v208
    %v210 = vpop.xlane.xlu0 %209
    %v211 = vmul.f32 %v198, %v180
    %v212 = vmul.f32 %v201, %v180
    %v213 = vmul.f32 %v204, %v180
    %v214 = vmul.f32 %v207, %v180
    %v215 = vmul.f32 %v210, %v180
    %v216 = vadd.f32 %v211, 1e-12
    %v217 = vadd.f32 %v212, 1e-12
    %v218 = vadd.f32 %v213, 1e-12
    %v219 = vadd.f32 %v214, 1e-12
    %v220 = vadd.f32 %v215, 1e-12
    %v221 = vrsqrt.pop %v216
    %v222 = vmul.f32 %v221, %v216
    %v223 = vmul.f32 %v222, %v221
    %v224 = vmul.f32 0.5, %v223
    %v225 = vsub.f32 1.5, %v224
    %v226 = vmul.f32 %v221, %v225
    %vm227 = vweird.f32 %v216
    %vm228 = vweird.f32 %v221
    %vm229 = vmor %vm227, %vm228
    %v230 = vsel %vm229, %v221, %v226
    %v231 = vrsqrt.pop %v217
    %v232 = vmul.f32 %v231, %v217
    %v233 = vmul.f32 %v232, %v231
    %v234 = vmul.f32 0.5, %v233
    %v235 = vsub.f32 1.5, %v234
    %v236 = vmul.f32 %v231, %v235
    %vm237 = vweird.f32 %v217
    %vm238 = vweird.f32 %v231
    %vm239 = vmor %vm237, %vm238
    %v240 = vsel %vm239, %v231, %v236
    %v241 = vrsqrt.pop %v218
    %v242 = vmul.f32 %v241, %v218
    %v243 = vmul.f32 %v242, %v241
    %v244 = vmul.f32 0.5, %v243
    %v245 = vsub.f32 1.5, %v244
    %v246 = vmul.f32 %v241, %v245
    %vm247 = vweird.f32 %v218
    %vm248 = vweird.f32 %v241
    %vm249 = vmor %vm247, %vm248
    %v250 = vsel %vm249, %v241, %v246
    %v251 = vrsqrt.pop %v219
    %v252 = vmul.f32 %v251, %v219
    %v253 = vmul.f32 %v252, %v251
    %v254 = vmul.f32 0.5, %v253
    %v255 = vsub.f32 1.5, %v254
    %v256 = vmul.f32 %v251, %v255
    %vm257 = vweird.f32 %v219
    %vm258 = vweird.f32 %v251
    %vm259 = vmor %vm257, %vm258
    %v260 = vsel %vm259, %v251, %v256
    %v261 = vrsqrt.pop %v220
    %v262 = vmul.f32 %v261, %v220
    %v263 = vmul.f32 %v262, %v261
    %v264 = vmul.f32 0.5, %v263
    %v265 = vsub.f32 1.5, %v264
    %v266 = vmul.f32 %v261, %v265
    %vm267 = vweird.f32 %v220
    %vm268 = vweird.f32 %v261
    %vm269 = vmor %vm267, %vm268
    %v270 = vsel %vm269, %v261, %v266
    %v271 = vmul.f32 %v186, %v230
    %v272 = vmul.f32 %v187, %v240
    %v273 = vmul.f32 %v188, %v250
    %v274 = vmul.f32 %v189, %v260
    %v275 = vmul.f32 %v190, %v270
    %v277 = vperm.slane %v155, 0
    %v279 = vmul.f32 %v271, %v277
    %v280 = vmul.f32 %v272, %v277
    %v281 = vmul.f32 %v273, %v277
    %v282 = vmul.f32 %v274, %v277
    %v283 = vmul.f32 %v275, %v277
    %v285 = vperm.slane %v156, 0
    %v287 = vadd.f32 %v279, %v285
    %v288 = vadd.f32 %v280, %v285
    %v289 = vadd.f32 %v281, %v285
    %v290 = vadd.f32 %v282, %v285
    %v291 = vadd.f32 %v283, %v285
    %v292 = vld [vmem:[%s7] sm:$0xff]
    %v293 = vld [vmem:[%s7 + $0x8] sm:$0xff]
    %v294 = vld [vmem:[%s7 + $0x10] sm:$0xff]
    %v295 = vld [vmem:[%s7 + $0x18] sm:$0xff]
    %v296 = vld [vmem:[%s8] sm:$0x1]
    %v298 = vperm.slane %v296, 0
    %v301 = vsel %vm157, %v287, 0
    %v304 = vsel %vm157, %v288, 0
    %v307 = vsel %vm157, %v289, 0
    %v310 = vsel %vm157, %v290, 0
    %v313 = vsel %vm157, %v291, 0
    %315 = vmatpush.msra.mxu0 0.0
    %316 = vmatpush.msra.mxu0 0.0
    %317 = vmatpush.msra.mxu0 0.0
    %318 = vmatpush.msra.mxu0 0.0
    %319 = vmatpush.msra.mxu0 0.0
    %320 = vmatpush.msra.mxu0 0.0
    %321 = vmatpush.msra.mxu0 0.0
    %322 = vmatpush.msra.mxu0 0.0
    %323 = vmatpush.msra.mxu0 0.0
    %324 = vmatpush.msra.mxu0 0.0
    %325 = vmatpush.msra.mxu0 0.0
    %326 = vmatpush.msra.mxu0 0.0
    %327 = vmatpush.msra.mxu0 %v295
    %328 = vmatpush.msra.mxu0 %v294
    %329 = vmatpush.msra.mxu0 %v293
    %330 = vmatpush.msra.mxu0 %v292
    %331 = vmatmul.f32.gmra.mxu0 %v301
    %v332 = vpop.f32.mrf.mxu0
    %v333 = vadd.f32 %v298, %v332
    %334 = vmatmul.f32.gmra.mxu0 %v304
    %v335 = vpop.f32.mrf.mxu0
    %v336 = vadd.f32 %v298, %v335
    %337 = vmatmul.f32.gmra.mxu0 %v307
    %v338 = vpop.f32.mrf.mxu0
    %v339 = vadd.f32 %v298, %v338
    %340 = vmatmul.f32.gmra.mxu0 %v310
    %v341 = vpop.f32.mrf.mxu0
    %v342 = vadd.f32 %v298, %v341
    %343 = vmatmul.f32.gmra.mxu0 %v313
    %v344 = vpop.f32.mrf.mxu0
    %v345 = vadd.f32 %v298, %v344
    %346 = vdwg.mxu0
    %v347 = vld [vmem:[%s9] sm:$0xff]
    %v348 = vld [vmem:[%s9 + $0x8] sm:$0xff]
    %v349 = vld [vmem:[%s9 + $0x10] sm:$0xff]
    %v350 = vld [vmem:[%s9 + $0x18] sm:$0xff]
    %356 = vrot.lane.b32.xlu0 %v333, 96
    %v357 = vpop.permute.xlu0 %356
    %358 = vrot.lane.b32.xlu0 %v336, 96
    %v359 = vpop.permute.xlu0 %358
    %360 = vrot.lane.b32.xlu0 %v339, 96
    %v361 = vpop.permute.xlu0 %360
    %362 = vrot.lane.b32.xlu0 %v342, 96
    %v363 = vpop.permute.xlu0 %362
    %364 = vrot.lane.b32.xlu0 %v345, 96
    %v365 = vpop.permute.xlu0 %364
    %vm366 = vcmask 130048
    %v367 = vsel %vm366, %v333, 0
    %v369 = vsel %vm366, %v336, 0
    %v371 = vsel %vm366, %v339, 0
    %v373 = vsel %vm366, %v342, 0
    %v375 = vsel %vm366, %v345, 0
    %v377 = vsel %vm366, %v357, 0
    %v379 = vsel %vm366, %v359, 0
    %v381 = vsel %vm366, %v361, 0
    %v383 = vsel %vm366, %v363, 0
    %v385 = vsel %vm366, %v365, 0
    %387 = vmatpush.xpose.msra.mxu0 0.0
    %388 = vmatpush.xpose.msra.mxu0 0.0
    %389 = vmatpush.xpose.msra.mxu0 0.0
    %390 = vmatpush.xpose.msra.mxu0 0.0
    %391 = vmatpush.xpose.msra.mxu0 0.0
    %392 = vmatpush.xpose.msra.mxu0 0.0
    %393 = vmatpush.xpose.msra.mxu0 0.0
    %394 = vmatpush.xpose.msra.mxu0 0.0
    %395 = vmatpush.xpose.msra.mxu0 0.0
    %396 = vmatpush.xpose.msra.mxu0 0.0
    %397 = vmatpush.xpose.msra.mxu0 0.0
    %398 = vmatpush.xpose.msra.mxu0 %v385
    %399 = vmatpush.xpose.msra.mxu0 %v383
    %400 = vmatpush.xpose.msra.mxu0 %v381
    %401 = vmatpush.xpose.msra.mxu0 %v379
    %402 = vmatpush.xpose.msra.mxu0 %v377
    %403 = vmatmul.f32.gmra.mxu0 %v367
    %v404 = vpop.f32.mrf.mxu0
    %v405 = vadd.f32 0.0, %v404
    %406 = vmatmul.f32.gmra.mxu0 %v369
    %v407 = vpop.f32.mrf.mxu0
    %v408 = vadd.f32 0.0, %v407
    %409 = vmatmul.f32.gmra.mxu0 %v371
    %v410 = vpop.f32.mrf.mxu0
    %v411 = vadd.f32 0.0, %v410
    %412 = vmatmul.f32.gmra.mxu0 %v373
    %v413 = vpop.f32.mrf.mxu0
    %v414 = vadd.f32 0.0, %v413
    %415 = vmatmul.f32.gmra.mxu0 %v375
    %v416 = vpop.f32.mrf.mxu0
    %v417 = vadd.f32 0.0, %v416
    %418 = vdwg.mxu0
    %v419 = vmul.f32 %v405, 0.25
    %v420 = vmul.f32 %v408, 0.25
    %v421 = vmul.f32 %v411, 0.25
    %v422 = vmul.f32 %v414, 0.25
    %v423 = vmul.f32 %v417, 0.25
    %v424 = vadd.f32 %v419, %v150
    %v425 = vadd.f32 %v420, %v151
    %v426 = vadd.f32 %v421, %v152
    %v427 = vadd.f32 %v422, %v153
    %v428 = vadd.f32 %v423, %v154
    %vm429 = vcmask 277504
    %v430 = vsel %vm429, %v424, -inf
    %431 = vmax.xlane.f32.xlu0 %v430
    %v432 = vpop.xlane.xlu0 %431
    %v433 = vsel %vm429, %v425, -inf
    %434 = vmax.xlane.f32.xlu0 %v433
    %v435 = vpop.xlane.xlu0 %434
    %v436 = vsel %vm429, %v426, -inf
    %437 = vmax.xlane.f32.xlu0 %v436
    %v438 = vpop.xlane.xlu0 %437
    %v439 = vsel %vm429, %v427, -inf
    %440 = vmax.xlane.f32.xlu0 %v439
    %v441 = vpop.xlane.xlu0 %440
    %vm442 = vcmask 271360
    %v443 = vsel %vm442, %v428, -inf
    %444 = vmax.xlane.f32.xlu0 %v443
    %v445 = vpop.xlane.xlu0 %444
    %v446 = vsub.f32 %v424, %v432
    %v447 = vsub.f32 %v425, %v435
    %v448 = vsub.f32 %v426, %v438
    %v449 = vsub.f32 %v427, %v441
    %v450 = vsub.f32 %v428, %v445
    %v451 = vmul.f32 %v446, 1.442695
    %v452 = vpow.pop %v451
    %v453 = vmul.f32 %v447, 1.442695
    %v454 = vpow.pop %v453
    %v455 = vmul.f32 %v448, 1.442695
    %v456 = vpow.pop %v455
    %v457 = vmul.f32 %v449, 1.442695
    %v458 = vpow.pop %v457
    %v459 = vmul.f32 %v450, 1.442695
    %v460 = vpow.pop %v459
    %v461 = vsel %vm429, %v452, 0.0
    %462 = vadd.xlane.f32.xlu0 %v461
    %v463 = vpop.xlane.xlu0 %462
    %v464 = vsel %vm429, %v454, 0.0
    %465 = vadd.xlane.f32.xlu0 %v464
    %v466 = vpop.xlane.xlu0 %465
    %v467 = vsel %vm429, %v456, 0.0
    %468 = vadd.xlane.f32.xlu0 %v467
    %v469 = vpop.xlane.xlu0 %468
    %v470 = vsel %vm429, %v458, 0.0
    %471 = vadd.xlane.f32.xlu0 %v470
    %v472 = vpop.xlane.xlu0 %471
    %v473 = vsel %vm442, %v460, 0.0
    %474 = vadd.xlane.f32.xlu0 %v473
    %v475 = vpop.xlane.xlu0 %474
    %v476 = vrcp.pop %v463
    %v477 = vmul.f32 %v463, %v476
    %v478 = vsub.f32 1.0, %v477
    %v479 = vmul.f32 %v476, %v478
    %v480 = vadd.f32 %v476, %v479
    %vm481 = vweird.f32 %v463
    %vm482 = vweird.f32 %v476
    %vm483 = vmor %vm481, %vm482
    %v484 = vsel %vm483, %v476, %v480
    %v485 = vand.u32 2147483647, %v463
    %vm486 = vcmp.eq.f32.partialorder %v485, 8.507059e+37
    %v487 = vand.u32 %v463, 2147483648
    %v488 = vor.u32 1.1754944e-38, %v487
    %v489 = vsel %vm486, %v488, %v484
    %v490 = vmul.f32 %v452, %v489
    %v491 = vrcp.pop %v466
    %v492 = vmul.f32 %v466, %v491
    %v493 = vsub.f32 1.0, %v492
    %v494 = vmul.f32 %v491, %v493
    %v495 = vadd.f32 %v491, %v494
    %vm496 = vweird.f32 %v466
    %vm497 = vweird.f32 %v491
    %vm498 = vmor %vm496, %vm497
    %v499 = vsel %vm498, %v491, %v495
    %v500 = vand.u32 2147483647, %v466
    %vm501 = vcmp.eq.f32.partialorder %v500, 8.507059e+37
    %v502 = vand.u32 %v466, 2147483648
    %v503 = vor.u32 1.1754944e-38, %v502
    %v504 = vsel %vm501, %v503, %v499
    %v505 = vmul.f32 %v454, %v504
    %v506 = vrcp.pop %v469
    %v507 = vmul.f32 %v469, %v506
    %v508 = vsub.f32 1.0, %v507
    %v509 = vmul.f32 %v506, %v508
    %v510 = vadd.f32 %v506, %v509
    %vm511 = vweird.f32 %v469
    %vm512 = vweird.f32 %v506
    %vm513 = vmor %vm511, %vm512
    %v514 = vsel %vm513, %v506, %v510
    %v515 = vand.u32 2147483647, %v469
    %vm516 = vcmp.eq.f32.partialorder %v515, 8.507059e+37
    %v517 = vand.u32 %v469, 2147483648
    %v518 = vor.u32 1.1754944e-38, %v517
    %v519 = vsel %vm516, %v518, %v514
    %v520 = vmul.f32 %v456, %v519
    %v521 = vrcp.pop %v472
    %v522 = vmul.f32 %v472, %v521
    %v523 = vsub.f32 1.0, %v522
    %v524 = vmul.f32 %v521, %v523
    %v525 = vadd.f32 %v521, %v524
    %vm526 = vweird.f32 %v472
    %vm527 = vweird.f32 %v521
    %vm528 = vmor %vm526, %vm527
    %v529 = vsel %vm528, %v521, %v525
    %v530 = vand.u32 2147483647, %v472
    %vm531 = vcmp.eq.f32.partialorder %v530, 8.507059e+37
    %v532 = vand.u32 %v472, 2147483648
    %v533 = vor.u32 1.1754944e-38, %v532
    %v534 = vsel %vm531, %v533, %v529
    %v535 = vmul.f32 %v458, %v534
    %v536 = vrcp.pop %v475
    %v537 = vmul.f32 %v475, %v536
    %v538 = vsub.f32 1.0, %v537
    %v539 = vmul.f32 %v536, %v538
    %v540 = vadd.f32 %v536, %v539
    %vm541 = vweird.f32 %v475
    %vm542 = vweird.f32 %v536
    %vm543 = vmor %vm541, %vm542
    %v544 = vsel %vm543, %v536, %v540
    %v545 = vand.u32 2147483647, %v475
    %vm546 = vcmp.eq.f32.partialorder %v545, 8.507059e+37
    %v547 = vand.u32 %v475, 2147483648
    %v548 = vor.u32 1.1754944e-38, %v547
    %v549 = vsel %vm546, %v548, %v544
    %v550 = vmul.f32 %v460, %v549
    %551 = vrot.lane.b32.xlu0 %v333, 64
    %v552 = vpop.permute.xlu0 %551
    %553 = vrot.lane.b32.xlu0 %v336, 64
    %v554 = vpop.permute.xlu0 %553
    %555 = vrot.lane.b32.xlu0 %v339, 64
    %v556 = vpop.permute.xlu0 %555
    %557 = vrot.lane.b32.xlu0 %v342, 64
    %v558 = vpop.permute.xlu0 %557
    %559 = vrot.lane.b32.xlu0 %v345, 64
    %v560 = vpop.permute.xlu0 %559
    %v566 = vsel %vm429, %v490, 0
    %v569 = vsel %vm429, %v505, 0
    %v572 = vsel %vm429, %v520, 0
    %v575 = vsel %vm429, %v535, 0
    %v578 = vsel %vm429, %v550, 0
    %vm580 = vcmask 1041408
    %v581 = vsel %vm580, %v560, 0
    %583 = vmatpush.msra.mxu0 0.0
    %584 = vmatpush.msra.mxu0 0.0
    %585 = vmatpush.msra.mxu0 0.0
    %586 = vmatpush.msra.mxu0 0.0
    %587 = vmatpush.msra.mxu0 0.0
    %588 = vmatpush.msra.mxu0 0.0
    %589 = vmatpush.msra.mxu0 0.0
    %590 = vmatpush.msra.mxu0 0.0
    %591 = vmatpush.msra.mxu0 0.0
    %592 = vmatpush.msra.mxu0 0.0
    %593 = vmatpush.msra.mxu0 0.0
    %594 = vmatpush.msra.mxu0 %v581
    %595 = vmatpush.msra.mxu0 %v558
    %596 = vmatpush.msra.mxu0 %v556
    %597 = vmatpush.msra.mxu0 %v554
    %598 = vmatpush.msra.mxu0 %v552
    %599 = vmatmul.f32.gmra.mxu0 %v566
    %v600 = vpop.f32.mrf.mxu0
    %v601 = vadd.f32 0.0, %v600
    %602 = vmatmul.f32.gmra.mxu0 %v569
    %v603 = vpop.f32.mrf.mxu0
    %v604 = vadd.f32 0.0, %v603
    %605 = vmatmul.f32.gmra.mxu0 %v572
    %v606 = vpop.f32.mrf.mxu0
    %v607 = vadd.f32 0.0, %v606
    %608 = vmatmul.f32.gmra.mxu0 %v575
    %v609 = vpop.f32.mrf.mxu0
    %v610 = vadd.f32 0.0, %v609
    %611 = vmatmul.f32.gmra.mxu0 %v578
    %v612 = vpop.f32.mrf.mxu0
    %v613 = vadd.f32 0.0, %v612
    %614 = vdwg.mxu0
    %615 = vrot.lane.b32.xlu0 %v333, 112
    %v616 = vpop.permute.xlu0 %615
    %617 = vrot.lane.b32.xlu0 %v336, 112
    %v618 = vpop.permute.xlu0 %617
    %619 = vrot.lane.b32.xlu0 %v339, 112
    %v620 = vpop.permute.xlu0 %619
    %621 = vrot.lane.b32.xlu0 %v342, 112
    %v622 = vpop.permute.xlu0 %621
    %623 = vrot.lane.b32.xlu0 %v345, 112
    %v624 = vpop.permute.xlu0 %623
    %625 = vrot.lane.b32.xlu0 %v333, 80
    %v626 = vpop.permute.xlu0 %625
    %627 = vrot.lane.b32.xlu0 %v336, 80
    %v628 = vpop.permute.xlu0 %627
    %629 = vrot.lane.b32.xlu0 %v339, 80
    %v630 = vpop.permute.xlu0 %629
    %631 = vrot.lane.b32.xlu0 %v342, 80
    %v632 = vpop.permute.xlu0 %631
    %633 = vrot.lane.b32.xlu0 %v345, 80
    %v634 = vpop.permute.xlu0 %633
    %v635 = vsel %vm366, %v616, 0
    %v637 = vsel %vm366, %v618, 0
    %v639 = vsel %vm366, %v620, 0
    %v641 = vsel %vm366, %v622, 0
    %v643 = vsel %vm366, %v624, 0
    %v645 = vsel %vm366, %v626, 0
    %v647 = vsel %vm366, %v628, 0
    %v649 = vsel %vm366, %v630, 0
    %v651 = vsel %vm366, %v632, 0
    %v653 = vsel %vm366, %v634, 0
    %655 = vmatpush.xpose.msra.mxu0 0.0
    %656 = vmatpush.xpose.msra.mxu0 0.0
    %657 = vmatpush.xpose.msra.mxu0 0.0
    %658 = vmatpush.xpose.msra.mxu0 0.0
    %659 = vmatpush.xpose.msra.mxu0 0.0
    %660 = vmatpush.xpose.msra.mxu0 0.0
    %661 = vmatpush.xpose.msra.mxu0 0.0
    %662 = vmatpush.xpose.msra.mxu0 0.0
    %663 = vmatpush.xpose.msra.mxu0 0.0
    %664 = vmatpush.xpose.msra.mxu0 0.0
    %665 = vmatpush.xpose.msra.mxu0 0.0
    %666 = vmatpush.xpose.msra.mxu0 %v653
    %667 = vmatpush.xpose.msra.mxu0 %v651
    %668 = vmatpush.xpose.msra.mxu0 %v649
    %669 = vmatpush.xpose.msra.mxu0 %v647
    %670 = vmatpush.xpose.msra.mxu0 %v645
    %671 = vmatmul.f32.gmra.mxu0 %v635
    %v672 = vpop.f32.mrf.mxu0
    %v673 = vadd.f32 0.0, %v672
    %674 = vmatmul.f32.gmra.mxu0 %v637
    %v675 = vpop.f32.mrf.mxu0
    %v676 = vadd.f32 0.0, %v675
    %677 = vmatmul.f32.gmra.mxu0 %v639
    %v678 = vpop.f32.mrf.mxu0
    %v679 = vadd.f32 0.0, %v678
    %680 = vmatmul.f32.gmra.mxu0 %v641
    %v681 = vpop.f32.mrf.mxu0
    %v682 = vadd.f32 0.0, %v681
    %683 = vmatmul.f32.gmra.mxu0 %v643
    %v684 = vpop.f32.mrf.mxu0
    %v685 = vadd.f32 0.0, %v684
    %686 = vdwg.mxu0
    %v687 = vmul.f32 %v673, 0.25
    %v688 = vmul.f32 %v676, 0.25
    %v689 = vmul.f32 %v679, 0.25
    %v690 = vmul.f32 %v682, 0.25
    %v691 = vmul.f32 %v685, 0.25
    %v692 = vadd.f32 %v687, %v150
    %v693 = vadd.f32 %v688, %v151
    %v694 = vadd.f32 %v689, %v152
    %v695 = vadd.f32 %v690, %v153
    %v696 = vadd.f32 %v691, %v154
    %v697 = vsel %vm429, %v692, -inf
    %698 = vmax.xlane.f32.xlu0 %v697
    %v699 = vpop.xlane.xlu0 %698
    %v700 = vsel %vm429, %v693, -inf
    %701 = vmax.xlane.f32.xlu0 %v700
    %v702 = vpop.xlane.xlu0 %701
    %v703 = vsel %vm429, %v694, -inf
    %704 = vmax.xlane.f32.xlu0 %v703
    %v705 = vpop.xlane.xlu0 %704
    %v706 = vsel %vm429, %v695, -inf
    %707 = vmax.xlane.f32.xlu0 %v706
    %v708 = vpop.xlane.xlu0 %707
    %v709 = vsel %vm442, %v696, -inf
    %710 = vmax.xlane.f32.xlu0 %v709
    %v711 = vpop.xlane.xlu0 %710
    %v712 = vsub.f32 %v692, %v699
    %v713 = vsub.f32 %v693, %v702
    %v714 = vsub.f32 %v694, %v705
    %v715 = vsub.f32 %v695, %v708
    %v716 = vsub.f32 %v696, %v711
    %v717 = vmul.f32 %v712, 1.442695
    %v718 = vpow.pop %v717
    %v719 = vmul.f32 %v713, 1.442695
    %v720 = vpow.pop %v719
    %v721 = vmul.f32 %v714, 1.442695
    %v722 = vpow.pop %v721
    %v723 = vmul.f32 %v715, 1.442695
    %v724 = vpow.pop %v723
    %v725 = vmul.f32 %v716, 1.442695
    %v726 = vpow.pop %v725
    %v727 = vsel %vm429, %v718, 0.0
    %728 = vadd.xlane.f32.xlu0 %v727
    %v729 = vpop.xlane.xlu0 %728
    %v730 = vsel %vm429, %v720, 0.0
    %731 = vadd.xlane.f32.xlu0 %v730
    %v732 = vpop.xlane.xlu0 %731
    %v733 = vsel %vm429, %v722, 0.0
    %734 = vadd.xlane.f32.xlu0 %v733
    %v735 = vpop.xlane.xlu0 %734
    %v736 = vsel %vm429, %v724, 0.0
    %737 = vadd.xlane.f32.xlu0 %v736
    %v738 = vpop.xlane.xlu0 %737
    %v739 = vsel %vm442, %v726, 0.0
    %740 = vadd.xlane.f32.xlu0 %v739
    %v741 = vpop.xlane.xlu0 %740
    %v742 = vrcp.pop %v729
    %v743 = vmul.f32 %v729, %v742
    %v744 = vsub.f32 1.0, %v743
    %v745 = vmul.f32 %v742, %v744
    %v746 = vadd.f32 %v742, %v745
    %vm747 = vweird.f32 %v729
    %vm748 = vweird.f32 %v742
    %vm749 = vmor %vm747, %vm748
    %v750 = vsel %vm749, %v742, %v746
    %v751 = vand.u32 2147483647, %v729
    %vm752 = vcmp.eq.f32.partialorder %v751, 8.507059e+37
    %v753 = vand.u32 %v729, 2147483648
    %v754 = vor.u32 1.1754944e-38, %v753
    %v755 = vsel %vm752, %v754, %v750
    %v756 = vmul.f32 %v718, %v755
    %v757 = vrcp.pop %v732
    %v758 = vmul.f32 %v732, %v757
    %v759 = vsub.f32 1.0, %v758
    %v760 = vmul.f32 %v757, %v759
    %v761 = vadd.f32 %v757, %v760
    %vm762 = vweird.f32 %v732
    %vm763 = vweird.f32 %v757
    %vm764 = vmor %vm762, %vm763
    %v765 = vsel %vm764, %v757, %v761
    %v766 = vand.u32 2147483647, %v732
    %vm767 = vcmp.eq.f32.partialorder %v766, 8.507059e+37
    %v768 = vand.u32 %v732, 2147483648
    %v769 = vor.u32 1.1754944e-38, %v768
    %v770 = vsel %vm767, %v769, %v765
    %v771 = vmul.f32 %v720, %v770
    %v772 = vrcp.pop %v735
    %v773 = vmul.f32 %v735, %v772
    %v774 = vsub.f32 1.0, %v773
    %v775 = vmul.f32 %v772, %v774
    %v776 = vadd.f32 %v772, %v775
    %vm777 = vweird.f32 %v735
    %vm778 = vweird.f32 %v772
    %vm779 = vmor %vm777, %vm778
    %v780 = vsel %vm779, %v772, %v776
    %v781 = vand.u32 2147483647, %v735
    %vm782 = vcmp.eq.f32.partialorder %v781, 8.507059e+37
    %v783 = vand.u32 %v735, 2147483648
    %v784 = vor.u32 1.1754944e-38, %v783
    %v785 = vsel %vm782, %v784, %v780
    %v786 = vmul.f32 %v722, %v785
    %v787 = vrcp.pop %v738
    %v788 = vmul.f32 %v738, %v787
    %v789 = vsub.f32 1.0, %v788
    %v790 = vmul.f32 %v787, %v789
    %v791 = vadd.f32 %v787, %v790
    %vm792 = vweird.f32 %v738
    %vm793 = vweird.f32 %v787
    %vm794 = vmor %vm792, %vm793
    %v795 = vsel %vm794, %v787, %v791
    %v796 = vand.u32 2147483647, %v738
    %vm797 = vcmp.eq.f32.partialorder %v796, 8.507059e+37
    %v798 = vand.u32 %v738, 2147483648
    %v799 = vor.u32 1.1754944e-38, %v798
    %v800 = vsel %vm797, %v799, %v795
    %v801 = vmul.f32 %v724, %v800
    %v802 = vrcp.pop %v741
    %v803 = vmul.f32 %v741, %v802
    %v804 = vsub.f32 1.0, %v803
    %v805 = vmul.f32 %v802, %v804
    %v806 = vadd.f32 %v802, %v805
    %vm807 = vweird.f32 %v741
    %vm808 = vweird.f32 %v802
    %vm809 = vmor %vm807, %vm808
    %v810 = vsel %vm809, %v802, %v806
    %v811 = vand.u32 2147483647, %v741
    %vm812 = vcmp.eq.f32.partialorder %v811, 8.507059e+37
    %v813 = vand.u32 %v741, 2147483648
    %v814 = vor.u32 1.1754944e-38, %v813
    %v815 = vsel %vm812, %v814, %v810
    %v816 = vmul.f32 %v726, %v815
    %817 = vrot.lane.b32.xlu0 %v333, 48
    %v818 = vpop.permute.xlu0 %817
    %819 = vrot.lane.b32.xlu0 %v336, 48
    %v820 = vpop.permute.xlu0 %819
    %821 = vrot.lane.b32.xlu0 %v339, 48
    %v822 = vpop.permute.xlu0 %821
    %823 = vrot.lane.b32.xlu0 %v342, 48
    %v824 = vpop.permute.xlu0 %823
    %825 = vrot.lane.b32.xlu0 %v345, 48
    %v826 = vpop.permute.xlu0 %825
    %v832 = vsel %vm429, %v756, 0
    %v835 = vsel %vm429, %v771, 0
    %v838 = vsel %vm429, %v786, 0
    %v841 = vsel %vm429, %v801, 0
    %v844 = vsel %vm429, %v816, 0
    %v846 = vsel %vm580, %v826, 0
    %848 = vmatpush.msra.mxu0 0.0
    %849 = vmatpush.msra.mxu0 0.0
    %850 = vmatpush.msra.mxu0 0.0
    %851 = vmatpush.msra.mxu0 0.0
    %852 = vmatpush.msra.mxu0 0.0
    %853 = vmatpush.msra.mxu0 0.0
    %854 = vmatpush.msra.mxu0 0.0
    %855 = vmatpush.msra.mxu0 0.0
    %856 = vmatpush.msra.mxu0 0.0
    %857 = vmatpush.msra.mxu0 0.0
    %858 = vmatpush.msra.mxu0 0.0
    %859 = vmatpush.msra.mxu0 %v846
    %860 = vmatpush.msra.mxu0 %v824
    %861 = vmatpush.msra.mxu0 %v822
    %862 = vmatpush.msra.mxu0 %v820
    %863 = vmatpush.msra.mxu0 %v818
    %864 = vmatmul.f32.gmra.mxu0 %v832
    %v865 = vpop.f32.mrf.mxu0
    %v866 = vadd.f32 0.0, %v865
    %867 = vmatmul.f32.gmra.mxu0 %v835
    %v868 = vpop.f32.mrf.mxu0
    %v869 = vadd.f32 0.0, %v868
    %870 = vmatmul.f32.gmra.mxu0 %v838
    %v871 = vpop.f32.mrf.mxu0
    %v872 = vadd.f32 0.0, %v871
    %873 = vmatmul.f32.gmra.mxu0 %v841
    %v874 = vpop.f32.mrf.mxu0
    %v875 = vadd.f32 0.0, %v874
    %876 = vmatmul.f32.gmra.mxu0 %v844
    %v877 = vpop.f32.mrf.mxu0
    %v878 = vadd.f32 0.0, %v877
    %879 = vdwg.mxu0
    %v881 = vsel %vm366, %v866, 0
    %v884 = vsel %vm366, %v869, 0
    %v887 = vsel %vm366, %v872, 0
    %v890 = vsel %vm366, %v875, 0
    %v893 = vsel %vm366, %v878, 0
    %895 = vmatpush.msra.mxu0 0.0
    %896 = vmatpush.msra.mxu0 0.0
    %897 = vmatpush.msra.mxu0 0.0
    %898 = vmatpush.msra.mxu0 0.0
    %899 = vmatpush.msra.mxu0 0.0
    %900 = vmatpush.msra.mxu0 0.0
    %901 = vmatpush.msra.mxu0 0.0
    %902 = vmatpush.msra.mxu0 0.0
    %903 = vmatpush.msra.mxu0 0.0
    %904 = vmatpush.msra.mxu0 0.0
    %905 = vmatpush.msra.mxu0 0.0
    %906 = vmatpush.msra.mxu0 0.0
    %907 = vmatpush.msra.mxu0 0.0
    %908 = vmatpush.msra.mxu0 0.0
    %909 = vmatpush.msra.mxu0 %v350
    %910 = vmatpush.msra.mxu0 %v349
    %911 = vmatmul.f32.gmra.mxu0 %v881
    %v912 = vpop.f32.mrf.mxu0
    %v913 = vadd.f32 0.0, %v912
    %914 = vmatmul.f32.gmra.mxu0 %v884
    %v915 = vpop.f32.mrf.mxu0
    %v916 = vadd.f32 0.0, %v915
    %917 = vmatmul.f32.gmra.mxu0 %v887
    %v918 = vpop.f32.mrf.mxu0
    %v919 = vadd.f32 0.0, %v918
    %920 = vmatmul.f32.gmra.mxu0 %v890
    %v921 = vpop.f32.mrf.mxu0
    %v922 = vadd.f32 0.0, %v921
    %923 = vmatmul.f32.gmra.mxu0 %v893
    %v924 = vpop.f32.mrf.mxu0
    %v925 = vadd.f32 0.0, %v924
    %926 = vdwg.mxu0
    %v928 = vsel %vm366, %v601, 0
    %v931 = vsel %vm366, %v604, 0
    %v934 = vsel %vm366, %v607, 0
    %v937 = vsel %vm366, %v610, 0
    %v940 = vsel %vm366, %v613, 0
    %942 = vmatpush.msra.mxu0 0.0
    %943 = vmatpush.msra.mxu0 0.0
    %944 = vmatpush.msra.mxu0 0.0
    %945 = vmatpush.msra.mxu0 0.0
    %946 = vmatpush.msra.mxu0 0.0
    %947 = vmatpush.msra.mxu0 0.0
    %948 = vmatpush.msra.mxu0 0.0
    %949 = vmatpush.msra.mxu0 0.0
    %950 = vmatpush.msra.mxu0 0.0
    %951 = vmatpush.msra.mxu0 0.0
    %952 = vmatpush.msra.mxu0 0.0
    %953 = vmatpush.msra.mxu0 0.0
    %954 = vmatpush.msra.mxu0 0.0
    %955 = vmatpush.msra.mxu0 0.0
    %956 = vmatpush.msra.mxu0 %v348
    %957 = vmatpush.msra.mxu0 %v347
    %958 = vmatmul.f32.gmra.mxu0 %v928
    %v959 = vpop.f32.mrf.mxu0
    %v960 = vadd.f32 %v913, %v959
    %961 = vmatmul.f32.gmra.mxu0 %v931
    %v962 = vpop.f32.mrf.mxu0
    %v963 = vadd.f32 %v916, %v962
    %964 = vmatmul.f32.gmra.mxu0 %v934
    %v965 = vpop.f32.mrf.mxu0
    %v966 = vadd.f32 %v919, %v965
    %967 = vmatmul.f32.gmra.mxu0 %v937
    %v968 = vpop.f32.mrf.mxu0
    %v969 = vadd.f32 %v922, %v968
    %970 = vmatmul.f32.gmra.mxu0 %v940
    %v971 = vpop.f32.mrf.mxu0
    %v972 = vadd.f32 %v925, %v971
    %973 = vdwg.mxu0
    %v974 = vadd.f32 %v136, %v960
    %v975 = vadd.f32 %v139, %v963
    %v976 = vadd.f32 %v142, %v966
    %v977 = vadd.f32 %v145, %v969
    %v978 = vadd.f32 %v148, %v972
    %v979 = vld [vmem:[%s10] sm:$0x1]
    %v981 = vperm.slane %v979, 0
    %v983 = vadd.f32 %v974, %v981
    %v984 = vadd.f32 %v975, %v981
    %v985 = vadd.f32 %v976, %v981
    %v986 = vadd.f32 %v977, %v981
    %v987 = vadd.f32 %v978, %v981
    %v988 = vld [vmem:[%s11] sm:$0x1]
    %v989 = vld [vmem:[%s12] sm:$0x1]
    %v990 = vsel %vm157, %v983, 0.0
    %991 = vadd.xlane.f32.xlu0 %v990
    %v992 = vpop.xlane.xlu0 %991
    %v993 = vsel %vm157, %v984, 0.0
    %994 = vadd.xlane.f32.xlu0 %v993
    %v995 = vpop.xlane.xlu0 %994
    %v996 = vsel %vm157, %v985, 0.0
    %997 = vadd.xlane.f32.xlu0 %v996
    %v998 = vpop.xlane.xlu0 %997
    %v999 = vsel %vm157, %v986, 0.0
    %1000 = vadd.xlane.f32.xlu0 %v999
    %v1001 = vpop.xlane.xlu0 %1000
    %v1002 = vsel %vm170, %v987, 0.0
    %1003 = vadd.xlane.f32.xlu0 %v1002
    %v1004 = vpop.xlane.xlu0 %1003
    %v1005 = vmul.f32 %v992, %v180
    %v1006 = vmul.f32 %v995, %v180
    %v1007 = vmul.f32 %v998, %v180
    %v1008 = vmul.f32 %v1001, %v180
    %v1009 = vmul.f32 %v1004, %v180
    %v1010 = vsub.f32 %v983, %v1005
    %v1011 = vsub.f32 %v984, %v1006
    %v1012 = vsub.f32 %v985, %v1007
    %v1013 = vsub.f32 %v986, %v1008
    %v1014 = vsub.f32 %v987, %v1009
    %v1015 = vmul.f32 %v1010, %v1010
    %v1016 = vmul.f32 %v1011, %v1011
    %v1017 = vmul.f32 %v1012, %v1012
    %v1018 = vmul.f32 %v1013, %v1013
    %v1019 = vmul.f32 %v1014, %v1014
    %v1020 = vsel %vm157, %v1015, 0.0
    %1021 = vadd.xlane.f32.xlu0 %v1020
    %v1022 = vpop.xlane.xlu0 %1021
    %v1023 = vsel %vm157, %v1016, 0.0
    %1024 = vadd.xlane.f32.xlu0 %v1023
    %v1025 = vpop.xlane.xlu0 %1024
    %v1026 = vsel %vm157, %v1017, 0.0
    %1027 = vadd.xlane.f32.xlu0 %v1026
    %v1028 = vpop.xlane.xlu0 %1027
    %v1029 = vsel %vm157, %v1018, 0.0
    %1030 = vadd.xlane.f32.xlu0 %v1029
    %v1031 = vpop.xlane.xlu0 %1030
    %v1032 = vsel %vm170, %v1019, 0.0
    %1033 = vadd.xlane.f32.xlu0 %v1032
    %v1034 = vpop.xlane.xlu0 %1033
    %v1035 = vmul.f32 %v1022, %v180
    %v1036 = vmul.f32 %v1025, %v180
    %v1037 = vmul.f32 %v1028, %v180
    %v1038 = vmul.f32 %v1031, %v180
    %v1039 = vmul.f32 %v1034, %v180
    %v1040 = vadd.f32 %v1035, 1e-12
    %v1041 = vadd.f32 %v1036, 1e-12
    %v1042 = vadd.f32 %v1037, 1e-12
    %v1043 = vadd.f32 %v1038, 1e-12
    %v1044 = vadd.f32 %v1039, 1e-12
    %v1045 = vrsqrt.pop %v1040
    %v1046 = vmul.f32 %v1045, %v1040
    %v1047 = vmul.f32 %v1046, %v1045
    %v1048 = vmul.f32 0.5, %v1047
    %v1049 = vsub.f32 1.5, %v1048
    %v1050 = vmul.f32 %v1045, %v1049
    %vm1051 = vweird.f32 %v1040
    %vm1052 = vweird.f32 %v1045
    %vm1053 = vmor %vm1051, %vm1052
    %v1054 = vsel %vm1053, %v1045, %v1050
    %v1055 = vrsqrt.pop %v1041
    %v1056 = vmul.f32 %v1055, %v1041
    %v1057 = vmul.f32 %v1056, %v1055
    %v1058 = vmul.f32 0.5, %v1057
    %v1059 = vsub.f32 1.5, %v1058
    %v1060 = vmul.f32 %v1055, %v1059
    %vm1061 = vweird.f32 %v1041
    %vm1062 = vweird.f32 %v1055
    %vm1063 = vmor %vm1061, %vm1062
    %v1064 = vsel %vm1063, %v1055, %v1060
    %v1065 = vrsqrt.pop %v1042
    %v1066 = vmul.f32 %v1065, %v1042
    %v1067 = vmul.f32 %v1066, %v1065
    %v1068 = vmul.f32 0.5, %v1067
    %v1069 = vsub.f32 1.5, %v1068
    %v1070 = vmul.f32 %v1065, %v1069
    %vm1071 = vweird.f32 %v1042
    %vm1072 = vweird.f32 %v1065
    %vm1073 = vmor %vm1071, %vm1072
    %v1074 = vsel %vm1073, %v1065, %v1070
    %v1075 = vrsqrt.pop %v1043
    %v1076 = vmul.f32 %v1075, %v1043
    %v1077 = vmul.f32 %v1076, %v1075
    %v1078 = vmul.f32 0.5, %v1077
    %v1079 = vsub.f32 1.5, %v1078
    %v1080 = vmul.f32 %v1075, %v1079
    %vm1081 = vweird.f32 %v1043
    %vm1082 = vweird.f32 %v1075
    %vm1083 = vmor %vm1081, %vm1082
    %v1084 = vsel %vm1083, %v1075, %v1080
    %v1085 = vrsqrt.pop %v1044
    %v1086 = vmul.f32 %v1085, %v1044
    %v1087 = vmul.f32 %v1086, %v1085
    %v1088 = vmul.f32 0.5, %v1087
    %v1089 = vsub.f32 1.5, %v1088
    %v1090 = vmul.f32 %v1085, %v1089
    %vm1091 = vweird.f32 %v1044
    %vm1092 = vweird.f32 %v1085
    %vm1093 = vmor %vm1091, %vm1092
    %v1094 = vsel %vm1093, %v1085, %v1090
    %v1095 = vmul.f32 %v1010, %v1054
    %v1096 = vmul.f32 %v1011, %v1064
    %v1097 = vmul.f32 %v1012, %v1074
    %v1098 = vmul.f32 %v1013, %v1084
    %v1099 = vmul.f32 %v1014, %v1094
    %v1101 = vperm.slane %v988, 0
    %v1103 = vmul.f32 %v1095, %v1101
    %v1104 = vmul.f32 %v1096, %v1101
    %v1105 = vmul.f32 %v1097, %v1101
    %v1106 = vmul.f32 %v1098, %v1101
    %v1107 = vmul.f32 %v1099, %v1101
    %v1109 = vperm.slane %v989, 0
    %v1111 = vadd.f32 %v1103, %v1109
    %v1112 = vadd.f32 %v1104, %v1109
    %v1113 = vadd.f32 %v1105, %v1109
    %v1114 = vadd.f32 %v1106, %v1109
    %v1115 = vadd.f32 %v1107, %v1109
    %v1116 = vld [vmem:[%s13] sm:$0xff]
    %v1117 = vld [vmem:[%s13 + $0x8] sm:$0xff]
    %v1118 = vld [vmem:[%s13 + $0x10] sm:$0xff]
    %v1119 = vld [vmem:[%s13 + $0x18] sm:$0xff]
    %v1120 = vld [vmem:[%s14] sm:$0x1]
    %v1122 = vperm.slane %v1120, 0
    %v1125 = vsel %vm157, %v1111, 0
    %v1128 = vsel %vm157, %v1112, 0
    %v1131 = vsel %vm157, %v1113, 0
    %v1134 = vsel %vm157, %v1114, 0
    %v1137 = vsel %vm157, %v1115, 0
    %1139 = vmatpush.msra.mxu0 0.0
    %1140 = vmatpush.msra.mxu0 0.0
    %1141 = vmatpush.msra.mxu0 0.0
    %1142 = vmatpush.msra.mxu0 0.0
    %1143 = vmatpush.msra.mxu0 0.0
    %1144 = vmatpush.msra.mxu0 0.0
    %1145 = vmatpush.msra.mxu0 0.0
    %1146 = vmatpush.msra.mxu0 0.0
    %1147 = vmatpush.msra.mxu0 0.0
    %1148 = vmatpush.msra.mxu0 0.0
    %1149 = vmatpush.msra.mxu0 0.0
    %1150 = vmatpush.msra.mxu0 0.0
    %1151 = vmatpush.msra.mxu0 %v1119
    %1152 = vmatpush.msra.mxu0 %v1118
    %1153 = vmatpush.msra.mxu0 %v1117
    %1154 = vmatpush.msra.mxu0 %v1116
    %1155 = vmatmul.f32.gmra.mxu0 %v1125
    %v1156 = vpop.f32.mrf.mxu0
    %v1157 = vadd.f32 %v1122, %v1156
    %1158 = vmatmul.f32.gmra.mxu0 %v1128
    %v1159 = vpop.f32.mrf.mxu0
    %v1160 = vadd.f32 %v1122, %v1159
    %1161 = vmatmul.f32.gmra.mxu0 %v1131
    %v1162 = vpop.f32.mrf.mxu0
    %v1163 = vadd.f32 %v1122, %v1162
    %1164 = vmatmul.f32.gmra.mxu0 %v1134
    %v1165 = vpop.f32.mrf.mxu0
    %v1166 = vadd.f32 %v1122, %v1165
    %1167 = vmatmul.f32.gmra.mxu0 %v1137
    %v1168 = vpop.f32.mrf.mxu0
    %v1169 = vadd.f32 %v1122, %v1168
    %1170 = vdwg.mxu0
    %v1171 = vmul.f32 %v1157, 0.5
    %v1172 = vmul.f32 %v1160, 0.5
    %v1173 = vmul.f32 %v1163, 0.5
    %v1174 = vmul.f32 %v1166, 0.5
    %v1175 = vmul.f32 %v1169, 0.5
    %v1176 = vmul.f32 %v1157, 0.044715
    %v1177 = vmul.f32 %v1160, 0.044715
    %v1178 = vmul.f32 %v1163, 0.044715
    %v1179 = vmul.f32 %v1166, 0.044715
    %v1180 = vmul.f32 %v1169, 0.044715
    %v1181 = vmul.f32 %v1176, %v1157
    %v1182 = vmul.f32 %v1177, %v1160
    %v1183 = vmul.f32 %v1178, %v1163
    %v1184 = vmul.f32 %v1179, %v1166
    %v1185 = vmul.f32 %v1180, %v1169
    %v1186 = vmul.f32 %v1181, %v1157
    %v1187 = vmul.f32 %v1182, %v1160
    %v1188 = vmul.f32 %v1183, %v1163
    %v1189 = vmul.f32 %v1184, %v1166
    %v1190 = vmul.f32 %v1185, %v1169
    %v1191 = vadd.f32 %v1157, %v1186
    %v1192 = vadd.f32 %v1160, %v1187
    %v1193 = vadd.f32 %v1163, %v1188
    %v1194 = vadd.f32 %v1166, %v1189
    %v1195 = vadd.f32 %v1169, %v1190
    %v1196 = vmul.f32 %v1191, 0.7978846
    %v1197 = vmul.f32 %v1192, 0.7978846
    %v1198 = vmul.f32 %v1193, 0.7978846
    %v1199 = vmul.f32 %v1194, 0.7978846
    %v1200 = vmul.f32 %v1195, 0.7978846
    %v1201 = vtanh.pop %v1196
    %v1202 = vtanh.pop %v1197
    %v1203 = vtanh.pop %v1198
    %v1204 = vtanh.pop %v1199
    %v1205 = vtanh.pop %v1200
    %v1206 = vadd.f32 %v1201, 1.0
    %v1207 = vadd.f32 %v1202, 1.0
    %v1208 = vadd.f32 %v1203, 1.0
    %v1209 = vadd.f32 %v1204, 1.0
    %v1210 = vadd.f32 %v1205, 1.0
    %v1211 = vmul.f32 %v1171, %v1206
    %v1212 = vmul.f32 %v1172, %v1207
    %v1213 = vmul.f32 %v1173, %v1208
    %v1214 = vmul.f32 %v1174, %v1209
    %v1215 = vmul.f32 %v1175, %v1210
    %v1216 = vld [vmem:[%s15] sm:$0xff]
    %v1217 = vld [vmem:[%s15 + $0x8] sm:$0xff]
    %v1218 = vld [vmem:[%s15 + $0x10] sm:$0xff]
    %v1219 = vld [vmem:[%s15 + $0x18] sm:$0xff]
    %v1220 = vld [vmem:[%s15 + $0x20] sm:$0xff]
    %v1221 = vld [vmem:[%s15 + $0x28] sm:$0xff]
    %v1222 = vld [vmem:[%s15 + $0x30] sm:$0xff]
    %v1223 = vld [vmem:[%s15 + $0x38] sm:$0xff]
    %vm1224 = vcmask 523264
    %v1226 = vsel %vm1224, %v1211, 0
    %v1229 = vsel %vm1224, %v1212, 0
    %v1232 = vsel %vm1224, %v1213, 0
    %v1235 = vsel %vm1224, %v1214, 0
    %v1238 = vsel %vm1224, %v1215, 0
    %1240 = vmatpush.msra.mxu0 0.0
    %1241 = vmatpush.msra.mxu0 0.0
    %1242 = vmatpush.msra.mxu0 0.0
    %1243 = vmatpush.msra.mxu0 0.0
    %1244 = vmatpush.msra.mxu0 0.0
    %1245 = vmatpush.msra.mxu0 0.0
    %1246 = vmatpush.msra.mxu0 0.0
    %1247 = vmatpush.msra.mxu0 0.0
    %1248 = vmatpush.msra.mxu0 %v1223
    %1249 = vmatpush.msra.mxu0 %v1222
    %1250 = vmatpush.msra.mxu0 %v1221
    %1251 = vmatpush.msra.mxu0 %v1220
    %1252 = vmatpush.msra.mxu0 %v1219
    %1253 = vmatpush.msra.mxu0 %v1218
    %1254 = vmatpush.msra.mxu0 %v1217
    %1255 = vmatpush.msra.mxu0 %v1216
    %1256 = vmatmul.f32.gmra.mxu0 %v1226
    %v1257 = vpop.f32.mrf.mxu0
    %v1258 = vadd.f32 0.0, %v1257
    %1259 = vmatmul.f32.gmra.mxu0 %v1229
    %v1260 = vpop.f32.mrf.mxu0
    %v1261 = vadd.f32 0.0, %v1260
    %1262 = vmatmul.f32.gmra.mxu0 %v1232
    %v1263 = vpop.f32.mrf.mxu0
    %v1264 = vadd.f32 0.0, %v1263
    %1265 = vmatmul.f32.gmra.mxu0 %v1235
    %v1266 = vpop.f32.mrf.mxu0
    %v1267 = vadd.f32 0.0, %v1266
    %1268 = vmatmul.f32.gmra.mxu0 %v1238
    %v1269 = vpop.f32.mrf.mxu0
    %v1270 = vadd.f32 0.0, %v1269
    %1271 = vdwg.mxu0
    %v1272 = vadd.f32 %v983, %v1258
    %v1273 = vadd.f32 %v984, %v1261
    %v1274 = vadd.f32 %v985, %v1264
    %v1275 = vadd.f32 %v986, %v1267
    %v1276 = vadd.f32 %v987, %v1270
    %v1277 = vld [vmem:[%s16] sm:$0x1]
    %v1279 = vperm.slane %v1277, 0
    %v1281 = vadd.f32 %v1272, %v1279
    %v1282 = vadd.f32 %v1273, %v1279
    %v1283 = vadd.f32 %v1274, %v1279
    %v1284 = vadd.f32 %v1275, %v1279
    %v1285 = vadd.f32 %v1276, %v1279
    %s1286 = scalar_lea.vmem %s5, 1
    %v1287 = vld [vmem:[%s1286] sm:$0x1]
    %s1288 = scalar_lea.vmem %s6, 1
    %v1289 = vld [vmem:[%s1288] sm:$0x1]
    %v1290 = vsel %vm157, %v1281, 0.0
    %1291 = vadd.xlane.f32.xlu0 %v1290
    %v1292 = vpop.xlane.xlu0 %1291
    %v1293 = vsel %vm157, %v1282, 0.0
    %1294 = vadd.xlane.f32.xlu0 %v1293
    %v1295 = vpop.xlane.xlu0 %1294
    %v1296 = vsel %vm157, %v1283, 0.0
    %1297 = vadd.xlane.f32.xlu0 %v1296
    %v1298 = vpop.xlane.xlu0 %1297
    %v1299 = vsel %vm157, %v1284, 0.0
    %1300 = vadd.xlane.f32.xlu0 %v1299
    %v1301 = vpop.xlane.xlu0 %1300
    %v1302 = vsel %vm170, %v1285, 0.0
    %1303 = vadd.xlane.f32.xlu0 %v1302
    %v1304 = vpop.xlane.xlu0 %1303
    %v1305 = vmul.f32 %v1292, %v180
    %v1306 = vmul.f32 %v1295, %v180
    %v1307 = vmul.f32 %v1298, %v180
    %v1308 = vmul.f32 %v1301, %v180
    %v1309 = vmul.f32 %v1304, %v180
    %v1310 = vsub.f32 %v1281, %v1305
    %v1311 = vsub.f32 %v1282, %v1306
    %v1312 = vsub.f32 %v1283, %v1307
    %v1313 = vsub.f32 %v1284, %v1308
    %v1314 = vsub.f32 %v1285, %v1309
    %v1315 = vmul.f32 %v1310, %v1310
    %v1316 = vmul.f32 %v1311, %v1311
    %v1317 = vmul.f32 %v1312, %v1312
    %v1318 = vmul.f32 %v1313, %v1313
    %v1319 = vmul.f32 %v1314, %v1314
    %v1320 = vsel %vm157, %v1315, 0.0
    %1321 = vadd.xlane.f32.xlu0 %v1320
    %v1322 = vpop.xlane.xlu0 %1321
    %v1323 = vsel %vm157, %v1316, 0.0
    %1324 = vadd.xlane.f32.xlu0 %v1323
    %v1325 = vpop.xlane.xlu0 %1324
    %v1326 = vsel %vm157, %v1317, 0.0
    %1327 = vadd.xlane.f32.xlu0 %v1326
    %v1328 = vpop.xlane.xlu0 %1327
    %v1329 = vsel %vm157, %v1318, 0.0
    %1330 = vadd.xlane.f32.xlu0 %v1329
    %v1331 = vpop.xlane.xlu0 %1330
    %v1332 = vsel %vm170, %v1319, 0.0
    %1333 = vadd.xlane.f32.xlu0 %v1332
    %v1334 = vpop.xlane.xlu0 %1333
    %v1335 = vmul.f32 %v1322, %v180
    %v1336 = vmul.f32 %v1325, %v180
    %v1337 = vmul.f32 %v1328, %v180
    %v1338 = vmul.f32 %v1331, %v180
    %v1339 = vmul.f32 %v1334, %v180
    %v1340 = vadd.f32 %v1335, 1e-12
    %v1341 = vadd.f32 %v1336, 1e-12
    %v1342 = vadd.f32 %v1337, 1e-12
    %v1343 = vadd.f32 %v1338, 1e-12
    %v1344 = vadd.f32 %v1339, 1e-12
    %v1345 = vrsqrt.pop %v1340
    %v1346 = vmul.f32 %v1345, %v1340
    %v1347 = vmul.f32 %v1346, %v1345
    %v1348 = vmul.f32 0.5, %v1347
    %v1349 = vsub.f32 1.5, %v1348
    %v1350 = vmul.f32 %v1345, %v1349
    %vm1351 = vweird.f32 %v1340
    %vm1352 = vweird.f32 %v1345
    %vm1353 = vmor %vm1351, %vm1352
    %v1354 = vsel %vm1353, %v1345, %v1350
    %v1355 = vrsqrt.pop %v1341
    %v1356 = vmul.f32 %v1355, %v1341
    %v1357 = vmul.f32 %v1356, %v1355
    %v1358 = vmul.f32 0.5, %v1357
    %v1359 = vsub.f32 1.5, %v1358
    %v1360 = vmul.f32 %v1355, %v1359
    %vm1361 = vweird.f32 %v1341
    %vm1362 = vweird.f32 %v1355
    %vm1363 = vmor %vm1361, %vm1362
    %v1364 = vsel %vm1363, %v1355, %v1360
    %v1365 = vrsqrt.pop %v1342
    %v1366 = vmul.f32 %v1365, %v1342
    %v1367 = vmul.f32 %v1366, %v1365
    %v1368 = vmul.f32 0.5, %v1367
    %v1369 = vsub.f32 1.5, %v1368
    %v1370 = vmul.f32 %v1365, %v1369
    %vm1371 = vweird.f32 %v1342
    %vm1372 = vweird.f32 %v1365
    %vm1373 = vmor %vm1371, %vm1372
    %v1374 = vsel %vm1373, %v1365, %v1370
    %v1375 = vrsqrt.pop %v1343
    %v1376 = vmul.f32 %v1375, %v1343
    %v1377 = vmul.f32 %v1376, %v1375
    %v1378 = vmul.f32 0.5, %v1377
    %v1379 = vsub.f32 1.5, %v1378
    %v1380 = vmul.f32 %v1375, %v1379
    %vm1381 = vweird.f32 %v1343
    %vm1382 = vweird.f32 %v1375
    %vm1383 = vmor %vm1381, %vm1382
    %v1384 = vsel %vm1383, %v1375, %v1380
    %v1385 = vrsqrt.pop %v1344
    %v1386 = vmul.f32 %v1385, %v1344
    %v1387 = vmul.f32 %v1386, %v1385
    %v1388 = vmul.f32 0.5, %v1387
    %v1389 = vsub.f32 1.5, %v1388
    %v1390 = vmul.f32 %v1385, %v1389
    %vm1391 = vweird.f32 %v1344
    %vm1392 = vweird.f32 %v1385
    %vm1393 = vmor %vm1391, %vm1392
    %v1394 = vsel %vm1393, %v1385, %v1390
    %v1395 = vmul.f32 %v1310, %v1354
    %v1396 = vmul.f32 %v1311, %v1364
    %v1397 = vmul.f32 %v1312, %v1374
    %v1398 = vmul.f32 %v1313, %v1384
    %v1399 = vmul.f32 %v1314, %v1394
    %v1401 = vperm.slane %v1287, 0
    %v1403 = vmul.f32 %v1395, %v1401
    %v1404 = vmul.f32 %v1396, %v1401
    %v1405 = vmul.f32 %v1397, %v1401
    %v1406 = vmul.f32 %v1398, %v1401
    %v1407 = vmul.f32 %v1399, %v1401
    %v1409 = vperm.slane %v1289, 0
    %v1411 = vadd.f32 %v1403, %v1409
    %v1412 = vadd.f32 %v1404, %v1409
    %v1413 = vadd.f32 %v1405, %v1409
    %v1414 = vadd.f32 %v1406, %v1409
    %v1415 = vadd.f32 %v1407, %v1409
    %s1416 = scalar_lea.vmem %s7, 32
    %v1417 = vld [vmem:[%s1416] sm:$0xff]
    %v1418 = vld [vmem:[%s1416 + $0x8] sm:$0xff]
    %v1419 = vld [vmem:[%s1416 + $0x10] sm:$0xff]
    %v1420 = vld [vmem:[%s1416 + $0x18] sm:$0xff]
    %s1421 = scalar_lea.vmem %s8, 1
    %v1422 = vld [vmem:[%s1421] sm:$0x1]
    %v1424 = vperm.slane %v1422, 0
    %v1427 = vsel %vm157, %v1411, 0
    %v1430 = vsel %vm157, %v1412, 0
    %v1433 = vsel %vm157, %v1413, 0
    %v1436 = vsel %vm157, %v1414, 0
    %v1439 = vsel %vm157, %v1415, 0
    %1441 = vmatpush.msra.mxu0 0.0
    %1442 = vmatpush.msra.mxu0 0.0
    %1443 = vmatpush.msra.mxu0 0.0
    %1444 = vmatpush.msra.mxu0 0.0
    %1445 = vmatpush.msra.mxu0 0.0
    %1446 = vmatpush.msra.mxu0 0.0
    %1447 = vmatpush.msra.mxu0 0.0
    %1448 = vmatpush.msra.mxu0 0.0
    %1449 = vmatpush.msra.mxu0 0.0
    %1450 = vmatpush.msra.mxu0 0.0
    %1451 = vmatpush.msra.mxu0 0.0
    %1452 = vmatpush.msra.mxu0 0.0
    %1453 = vmatpush.msra.mxu0 %v1420
    %1454 = vmatpush.msra.mxu0 %v1419
    %1455 = vmatpush.msra.mxu0 %v1418
    %1456 = vmatpush.msra.mxu0 %v1417
    %1457 = vmatmul.f32.gmra.mxu0 %v1427
    %v1458 = vpop.f32.mrf.mxu0
    %v1459 = vadd.f32 %v1424, %v1458
    %1460 = vmatmul.f32.gmra.mxu0 %v1430
    %v1461 = vpop.f32.mrf.mxu0
    %v1462 = vadd.f32 %v1424, %v1461
    %1463 = vmatmul.f32.gmra.mxu0 %v1433
    %v1464 = vpop.f32.mrf.mxu0
    %v1465 = vadd.f32 %v1424, %v1464
    %1466 = vmatmul.f32.gmra.mxu0 %v1436
    %v1467 = vpop.f32.mrf.mxu0
    %v1468 = vadd.f32 %v1424, %v1467
    %1469 = vmatmul.f32.gmra.mxu0 %v1439
    %v1470 = vpop.f32.mrf.mxu0
    %v1471 = vadd.f32 %v1424, %v1470
    %1472 = vdwg.mxu0
    %s1473 = scalar_lea.vmem %s9, 32
    %v1474 = vld [vmem:[%s1473] sm:$0xff]
    %v1475 = vld [vmem:[%s1473 + $0x8] sm:$0xff]
    %v1476 = vld [vmem:[%s1473 + $0x10] sm:$0xff]
    %v1477 = vld [vmem:[%s1473 + $0x18] sm:$0xff]
    %1483 = vrot.lane.b32.xlu0 %v1459, 96
    %v1484 = vpop.permute.xlu0 %1483
    %1485 = vrot.lane.b32.xlu0 %v1462, 96
    %v1486 = vpop.permute.xlu0 %1485
    %1487 = vrot.lane.b32.xlu0 %v1465, 96
    %v1488 = vpop.permute.xlu0 %1487
    %1489 = vrot.lane.b32.xlu0 %v1468, 96
    %v1490 = vpop.permute.xlu0 %1489
    %1491 = vrot.lane.b32.xlu0 %v1471, 96
    %v1492 = vpop.permute.xlu0 %1491
    %v1493 = vsel %vm366, %v1459, 0
    %v1495 = vsel %vm366, %v1462, 0
    %v1497 = vsel %vm366, %v1465, 0
    %v1499 = vsel %vm366, %v1468, 0
    %v1501 = vsel %vm366, %v1471, 0
    %v1503 = vsel %vm366, %v1484, 0
    %v1505 = vsel %vm366, %v1486, 0
    %v1507 = vsel %vm366, %v1488, 0
    %v1509 = vsel %vm366, %v1490, 0
    %v1511 = vsel %vm366, %v1492, 0
    %1513 = vmatpush.xpose.msra.mxu0 0.0
    %1514 = vmatpush.xpose.msra.mxu0 0.0
    %1515 = vmatpush.xpose.msra.mxu0 0.0
    %1516 = vmatpush.xpose.msra.mxu0 0.0
    %1517 = vmatpush.xpose.msra.mxu0 0.0
    %1518 = vmatpush.xpose.msra.mxu0 0.0
    %1519 = vmatpush.xpose.msra.mxu0 0.0
    %1520 = vmatpush.xpose.msra.mxu0 0.0
    %1521 = vmatpush.xpose.msra.mxu0 0.0
    %1522 = vmatpush.xpose.msra.mxu0 0.0
    %1523 = vmatpush.xpose.msra.mxu0 0.0
    %1524 = vmatpush.xpose.msra.mxu0 %v1511
    %1525 = vmatpush.xpose.msra.mxu0 %v1509
    %1526 = vmatpush.xpose.msra.mxu0 %v1507
    %1527 = vmatpush.xpose.msra.mxu0 %v1505
    %1528 = vmatpush.xpose.msra.mxu0 %v1503
    %1529 = vmatmul.f32.gmra.mxu0 %v1493
    %v1530 = vpop.f32.mrf.mxu0
    %v1531 = vadd.f32 0.0, %v1530
    %1532 = vmatmul.f32.gmra.mxu0 %v1495
    %v1533 = vpop.f32.mrf.mxu0
    %v1534 = vadd.f32 0.0, %v1533
    %1535 = vmatmul.f32.gmra.mxu0 %v1497
    %v1536 = vpop.f32.mrf.mxu0
    %v1537 = vadd.f32 0.0, %v1536
    %1538 = vmatmul.f32.gmra.mxu0 %v1499
    %v1539 = vpop.f32.mrf.mxu0
    %v1540 = vadd.f32 0.0, %v1539
    %1541 = vmatmul.f32.gmra.mxu0 %v1501
    %v1542 = vpop.f32.mrf.mxu0
    %v1543 = vadd.f32 0.0, %v1542
    %1544 = vdwg.mxu0
    %v1545 = vmul.f32 %v1531, 0.25
    %v1546 = vmul.f32 %v1534, 0.25
    %v1547 = vmul.f32 %v1537, 0.25
    %v1548 = vmul.f32 %v1540, 0.25
    %v1549 = vmul.f32 %v1543, 0.25
    %v1550 = vadd.f32 %v1545, %v150
    %v1551 = vadd.f32 %v1546, %v151
    %v1552 = vadd.f32 %v1547, %v152
    %v1553 = vadd.f32 %v1548, %v153
    %v1554 = vadd.f32 %v1549, %v154
    %v1555 = vsel %vm429, %v1550, -inf
    %1556 = vmax.xlane.f32.xlu0 %v1555
    %v1557 = vpop.xlane.xlu0 %1556
    %v1558 = vsel %vm429, %v1551, -inf
    %1559 = vmax.xlane.f32.xlu0 %v1558
    %v1560 = vpop.xlane.xlu0 %1559
    %v1561 = vsel %vm429, %v1552, -inf
    %1562 = vmax.xlane.f32.xlu0 %v1561
    %v1563 = vpop.xlane.xlu0 %1562
    %v1564 = vsel %vm429, %v1553, -inf
    %1565 = vmax.xlane.f32.xlu0 %v1564
    %v1566 = vpop.xlane.xlu0 %1565
    %v1567 = vsel %vm442, %v1554, -inf
    %1568 = vmax.xlane.f32.xlu0 %v1567
    %v1569 = vpop.xlane.xlu0 %1568
    %v1570 = vsub.f32 %v1550, %v1557
    %v1571 = vsub.f32 %v1551, %v1560
    %v1572 = vsub.f32 %v1552, %v1563
    %v1573 = vsub.f32 %v1553, %v1566
    %v1574 = vsub.f32 %v1554, %v1569
    %v1575 = vmul.f32 %v1570, 1.442695
    %v1576 = vpow.pop %v1575
    %v1577 = vmul.f32 %v1571, 1.442695
    %v1578 = vpow.pop %v1577
    %v1579 = vmul.f32 %v1572, 1.442695
    %v1580 = vpow.pop %v1579
    %v1581 = vmul.f32 %v1573, 1.442695
    %v1582 = vpow.pop %v1581
    %v1583 = vmul.f32 %v1574, 1.442695
    %v1584 = vpow.pop %v1583
    %v1585 = vsel %vm429, %v1576, 0.0
    %1586 = vadd.xlane.f32.xlu0 %v1585
    %v1587 = vpop.xlane.xlu0 %1586
    %v1588 = vsel %vm429, %v1578, 0.0
    %1589 = vadd.xlane.f32.xlu0 %v1588
    %v1590 = vpop.xlane.xlu0 %1589
    %v1591 = vsel %vm429, %v1580, 0.0
    %1592 = vadd.xlane.f32.xlu0 %v1591
    %v1593 = vpop.xlane.xlu0 %1592
    %v1594 = vsel %vm429, %v1582, 0.0
    %1595 = vadd.xlane.f32.xlu0 %v1594
    %v1596 = vpop.xlane.xlu0 %1595
    %v1597 = vsel %vm442, %v1584, 0.0
    %1598 = vadd.xlane.f32.xlu0 %v1597
    %v1599 = vpop.xlane.xlu0 %1598
    %v1600 = vrcp.pop %v1587
    %v1601 = vmul.f32 %v1587, %v1600
    %v1602 = vsub.f32 1.0, %v1601
    %v1603 = vmul.f32 %v1600, %v1602
    %v1604 = vadd.f32 %v1600, %v1603
    %vm1605 = vweird.f32 %v1587
    %vm1606 = vweird.f32 %v1600
    %vm1607 = vmor %vm1605, %vm1606
    %v1608 = vsel %vm1607, %v1600, %v1604
    %v1609 = vand.u32 2147483647, %v1587
    %vm1610 = vcmp.eq.f32.partialorder %v1609, 8.507059e+37
    %v1611 = vand.u32 %v1587, 2147483648
    %v1612 = vor.u32 1.1754944e-38, %v1611
    %v1613 = vsel %vm1610, %v1612, %v1608
    %v1614 = vmul.f32 %v1576, %v1613
    %v1615 = vrcp.pop %v1590
    %v1616 = vmul.f32 %v1590, %v1615
    %v1617 = vsub.f32 1.0, %v1616
    %v1618 = vmul.f32 %v1615, %v1617
    %v1619 = vadd.f32 %v1615, %v1618
    %vm1620 = vweird.f32 %v1590
    %vm1621 = vweird.f32 %v1615
    %vm1622 = vmor %vm1620, %vm1621
    %v1623 = vsel %vm1622, %v1615, %v1619
    %v1624 = vand.u32 2147483647, %v1590
    %vm1625 = vcmp.eq.f32.partialorder %v1624, 8.507059e+37
    %v1626 = vand.u32 %v1590, 2147483648
    %v1627 = vor.u32 1.1754944e-38, %v1626
    %v1628 = vsel %vm1625, %v1627, %v1623
    %v1629 = vmul.f32 %v1578, %v1628
    %v1630 = vrcp.pop %v1593
    %v1631 = vmul.f32 %v1593, %v1630
    %v1632 = vsub.f32 1.0, %v1631
    %v1633 = vmul.f32 %v1630, %v1632
    %v1634 = vadd.f32 %v1630, %v1633
    %vm1635 = vweird.f32 %v1593
    %vm1636 = vweird.f32 %v1630
    %vm1637 = vmor %vm1635, %vm1636
    %v1638 = vsel %vm1637, %v1630, %v1634
    %v1639 = vand.u32 2147483647, %v1593
    %vm1640 = vcmp.eq.f32.partialorder %v1639, 8.507059e+37
    %v1641 = vand.u32 %v1593, 2147483648
    %v1642 = vor.u32 1.1754944e-38, %v1641
    %v1643 = vsel %vm1640, %v1642, %v1638
    %v1644 = vmul.f32 %v1580, %v1643
    %v1645 = vrcp.pop %v1596
    %v1646 = vmul.f32 %v1596, %v1645
    %v1647 = vsub.f32 1.0, %v1646
    %v1648 = vmul.f32 %v1645, %v1647
    %v1649 = vadd.f32 %v1645, %v1648
    %vm1650 = vweird.f32 %v1596
    %vm1651 = vweird.f32 %v1645
    %vm1652 = vmor %vm1650, %vm1651
    %v1653 = vsel %vm1652, %v1645, %v1649
    %v1654 = vand.u32 2147483647, %v1596
    %vm1655 = vcmp.eq.f32.partialorder %v1654, 8.507059e+37
    %v1656 = vand.u32 %v1596, 2147483648
    %v1657 = vor.u32 1.1754944e-38, %v1656
    %v1658 = vsel %vm1655, %v1657, %v1653
    %v1659 = vmul.f32 %v1582, %v1658
    %v1660 = vrcp.pop %v1599
    %v1661 = vmul.f32 %v1599, %v1660
    %v1662 = vsub.f32 1.0, %v1661
    %v1663 = vmul.f32 %v1660, %v1662
    %v1664 = vadd.f32 %v1660, %v1663
    %vm1665 = vweird.f32 %v1599
    %vm1666 = vweird.f32 %v1660
    %vm1667 = vmor %vm1665, %vm1666
    %v1668 = vsel %vm1667, %v1660, %v1664
    %v1669 = vand.u32 2147483647, %v1599
    %vm1670 = vcmp.eq.f32.partialorder %v1669, 8.507059e+37
    %v1671 = vand.u32 %v1599, 2147483648
    %v1672 = vor.u32 1.1754944e-38, %v1671
    %v1673 = vsel %vm1670, %v1672, %v1668
    %v1674 = vmul.f32 %v1584, %v1673
    %1675 = vrot.lane.b32.xlu0 %v1459, 64
    %v1676 = vpop.permute.xlu0 %1675
    %1677 = vrot.lane.b32.xlu0 %v1462, 64
    %v1678 = vpop.permute.xlu0 %1677
    %1679 = vrot.lane.b32.xlu0 %v1465, 64
    %v1680 = vpop.permute.xlu0 %1679
    %1681 = vrot.lane.b32.xlu0 %v1468, 64
    %v1682 = vpop.permute.xlu0 %1681
    %1683 = vrot.lane.b32.xlu0 %v1471, 64
    %v1684 = vpop.permute.xlu0 %1683
    %v1690 = vsel %vm429, %v1614, 0
    %v1693 = vsel %vm429, %v1629, 0
    %v1696 = vsel %vm429, %v1644, 0
    %v1699 = vsel %vm429, %v1659, 0
    %v1702 = vsel %vm429, %v1674, 0
    %v1704 = vsel %vm580, %v1684, 0
    %1706 = vmatpush.msra.mxu0 0.0
    %1707 = vmatpush.msra.mxu0 0.0
    %1708 = vmatpush.msra.mxu0 0.0
    %1709 = vmatpush.msra.mxu0 0.0
    %1710 = vmatpush.msra.mxu0 0.0
    %1711 = vmatpush.msra.mxu0 0.0
    %1712 = vmatpush.msra.mxu0 0.0
    %1713 = vmatpush.msra.mxu0 0.0
    %1714 = vmatpush.msra.mxu0 0.0
    %1715 = vmatpush.msra.mxu0 0.0
    %1716 = vmatpush.msra.mxu0 0.0
    %1717 = vmatpush.msra.mxu0 %v1704
    %1718 = vmatpush.msra.mxu0 %v1682
    %1719 = vmatpush.msra.mxu0 %v1680
    %1720 = vmatpush.msra.mxu0 %v1678
    %1721 = vmatpush.msra.mxu0 %v1676
    %1722 = vmatmul.f32.gmra.mxu0 %v1690
    %v1723 = vpop.f32.mrf.mxu0
    %v1724 = vadd.f32 0.0, %v1723
    %1725 = vmatmul.f32.gmra.mxu0 %v1693
    %v1726 = vpop.f32.mrf.mxu0
    %v1727 = vadd.f32 0.0, %v1726
    %1728 = vmatmul.f32.gmra.mxu0 %v1696
    %v1729 = vpop.f32.mrf.mxu0
    %v1730 = vadd.f32 0.0, %v1729
    %1731 = vmatmul.f32.gmra.mxu0 %v1699
    %v1732 = vpop.f32.mrf.mxu0
    %v1733 = vadd.f32 0.0, %v1732
    %1734 = vmatmul.f32.gmra.mxu0 %v1702
    %v1735 = vpop.f32.mrf.mxu0
    %v1736 = vadd.f32 0.0, %v1735
    %1737 = vdwg.mxu0
    %1738 = vrot.lane.b32.xlu0 %v1459, 112
    %v1739 = vpop.permute.xlu0 %1738
    %1740 = vrot.lane.b32.xlu0 %v1462, 112
    %v1741 = vpop.permute.xlu0 %1740
    %1742 = vrot.lane.b32.xlu0 %v1465, 112
    %v1743 = vpop.permute.xlu0 %1742
    %1744 = vrot.lane.b32.xlu0 %v1468, 112
    %v1745 = vpop.permute.xlu0 %1744
    %1746 = vrot.lane.b32.xlu0 %v1471, 112
    %v1747 = vpop.permute.xlu0 %1746
    %1748 = vrot.lane.b32.xlu0 %v1459, 80
    %v1749 = vpop.permute.xlu0 %1748
    %1750 = vrot.lane.b32.xlu0 %v1462, 80
    %v1751 = vpop.permute.xlu0 %1750
    %1752 = vrot.lane.b32.xlu0 %v1465, 80
    %v1753 = vpop.permute.xlu0 %1752
    %1754 = vrot.lane.b32.xlu0 %v1468, 80
    %v1755 = vpop.permute.xlu0 %1754
    %1756 = vrot.lane.b32.xlu0 %v1471, 80
    %v1757 = vpop.permute.xlu0 %1756
    %v1758 = vsel %vm366, %v1739, 0
    %v1760 = vsel %vm366, %v1741, 0
    %v1762 = vsel %vm366, %v1743, 0
    %v1764 = vsel %vm366, %v1745, 0
    %v1766 = vsel %vm366, %v1747, 0
    %v1768 = vsel %vm366, %v1749, 0
    %v1770 = vsel %vm366, %v1751, 0
    %v1772 = vsel %vm366, %v1753, 0
    %v1774 = vsel %vm366, %v1755, 0
    %v1776 = vsel %vm366, %v1757, 0
    %1778 = vmatpush.xpose.msra.mxu0 0.0
    %1779 = vmatpush.xpose.msra.mxu0 0.0
    %1780 = vmatpush.xpose.msra.mxu0 0.0
    %1781 = vmatpush.xpose.msra.mxu0 0.0
    %1782 = vmatpush.xpose.msra.mxu0 0.0
    %1783 = vmatpush.xpose.msra.mxu0 0.0
    %1784 = vmatpush.xpose.msra.mxu0 0.0
    %1785 = vmatpush.xpose.msra.mxu0 0.0
    %1786 = vmatpush.xpose.msra.mxu0 0.0
    %1787 = vmatpush.xpose.msra.mxu0 0.0
    %1788 = vmatpush.xpose.msra.mxu0 0.0
    %1789 = vmatpush.xpose.msra.mxu0 %v1776
    %1790 = vmatpush.xpose.msra.mxu0 %v1774
    %1791 = vmatpush.xpose.msra.mxu0 %v1772
    %1792 = vmatpush.xpose.msra.mxu0 %v1770
    %1793 = vmatpush.xpose.msra.mxu0 %v1768
    %1794 = vmatmul.f32.gmra.mxu0 %v1758
    %v1795 = vpop.f32.mrf.mxu0
    %v1796 = vadd.f32 0.0, %v1795
    %1797 = vmatmul.f32.gmra.mxu0 %v1760
    %v1798 = vpop.f32.mrf.mxu0
    %v1799 = vadd.f32 0.0, %v1798
    %1800 = vmatmul.f32.gmra.mxu0 %v1762
    %v1801 = vpop.f32.mrf.mxu0
    %v1802 = vadd.f32 0.0, %v1801
    %1803 = vmatmul.f32.gmra.mxu0 %v1764
    %v1804 = vpop.f32.mrf.mxu0
    %v1805 = vadd.f32 0.0, %v1804
    %1806 = vmatmul.f32.gmra.mxu0 %v1766
    %v1807 = vpop.f32.mrf.mxu0
    %v1808 = vadd.f32 0.0, %v1807
    %1809 = vdwg.mxu0
    %v1810 = vmul.f32 %v1796, 0.25
    %v1811 = vmul.f32 %v1799, 0.25
    %v1812 = vmul.f32 %v1802, 0.25
    %v1813 = vmul.f32 %v1805, 0.25
    %v1814 = vmul.f32 %v1808, 0.25
    %v1815 = vadd.f32 %v1810, %v150
    %v1816 = vadd.f32 %v1811, %v151
    %v1817 = vadd.f32 %v1812, %v152
    %v1818 = vadd.f32 %v1813, %v153
    %v1819 = vadd.f32 %v1814, %v154
    %v1820 = vsel %vm429, %v1815, -inf
    %1821 = vmax.xlane.f32.xlu0 %v1820
    %v1822 = vpop.xlane.xlu0 %1821
    %v1823 = vsel %vm429, %v1816, -inf
    %1824 = vmax.xlane.f32.xlu0 %v1823
    %v1825 = vpop.xlane.xlu0 %1824
    %v1826 = vsel %vm429, %v1817, -inf
    %1827 = vmax.xlane.f32.xlu0 %v1826
    %v1828 = vpop.xlane.xlu0 %1827
    %v1829 = vsel %vm429, %v1818, -inf
    %1830 = vmax.xlane.f32.xlu0 %v1829
    %v1831 = vpop.xlane.xlu0 %1830
    %v1832 = vsel %vm442, %v1819, -inf
    %1833 = vmax.xlane.f32.xlu0 %v1832
    %v1834 = vpop.xlane.xlu0 %1833
    %v1835 = vsub.f32 %v1815, %v1822
    %v1836 = vsub.f32 %v1816, %v1825
    %v1837 = vsub.f32 %v1817, %v1828
    %v1838 = vsub.f32 %v1818, %v1831
    %v1839 = vsub.f32 %v1819, %v1834
    %v1840 = vmul.f32 %v1835, 1.442695
    %v1841 = vpow.pop %v1840
    %v1842 = vmul.f32 %v1836, 1.442695
    %v1843 = vpow.pop %v1842
    %v1844 = vmul.f32 %v1837, 1.442695
    %v1845 = vpow.pop %v1844
    %v1846 = vmul.f32 %v1838, 1.442695
    %v1847 = vpow.pop %v1846
    %v1848 = vmul.f32 %v1839, 1.442695
    %v1849 = vpow.pop %v1848
    %v1850 = vsel %vm429, %v1841, 0.0
    %1851 = vadd.xlane.f32.xlu0 %v1850
    %v1852 = vpop.xlane.xlu0 %1851
    %v1853 = vsel %vm429, %v1843, 0.0
    %1854 = vadd.xlane.f32.xlu0 %v1853
    %v1855 = vpop.xlane.xlu0 %1854
    %v1856 = vsel %vm429, %v1845, 0.0
    %1857 = vadd.xlane.f32.xlu0 %v1856
    %v1858 = vpop.xlane.xlu0 %1857
    %v1859 = vsel %vm429, %v1847, 0.0
    %1860 = vadd.xlane.f32.xlu0 %v1859
    %v1861 = vpop.xlane.xlu0 %1860
    %v1862 = vsel %vm442, %v1849, 0.0
    %1863 = vadd.xlane.f32.xlu0 %v1862
    %v1864 = vpop.xlane.xlu0 %1863
    %v1865 = vrcp.pop %v1852
    %v1866 = vmul.f32 %v1852, %v1865
    %v1867 = vsub.f32 1.0, %v1866
    %v1868 = vmul.f32 %v1865, %v1867
    %v1869 = vadd.f32 %v1865, %v1868
    %vm1870 = vweird.f32 %v1852
    %vm1871 = vweird.f32 %v1865
    %vm1872 = vmor %vm1870, %vm1871
    %v1873 = vsel %vm1872, %v1865, %v1869
    %v1874 = vand.u32 2147483647, %v1852
    %vm1875 = vcmp.eq.f32.partialorder %v1874, 8.507059e+37
    %v1876 = vand.u32 %v1852, 2147483648
    %v1877 = vor.u32 1.1754944e-38, %v1876
    %v1878 = vsel %vm1875, %v1877, %v1873
    %v1879 = vmul.f32 %v1841, %v1878
    %v1880 = vrcp.pop %v1855
    %v1881 = vmul.f32 %v1855, %v1880
    %v1882 = vsub.f32 1.0, %v1881
    %v1883 = vmul.f32 %v1880, %v1882
    %v1884 = vadd.f32 %v1880, %v1883
    %vm1885 = vweird.f32 %v1855
    %vm1886 = vweird.f32 %v1880
    %vm1887 = vmor %vm1885, %vm1886
    %v1888 = vsel %vm1887, %v1880, %v1884
    %v1889 = vand.u32 2147483647, %v1855
    %vm1890 = vcmp.eq.f32.partialorder %v1889, 8.507059e+37
    %v1891 = vand.u32 %v1855, 2147483648
    %v1892 = vor.u32 1.1754944e-38, %v1891
    %v1893 = vsel %vm1890, %v1892, %v1888
    %v1894 = vmul.f32 %v1843, %v1893
    %v1895 = vrcp.pop %v1858
    %v1896 = vmul.f32 %v1858, %v1895
    %v1897 = vsub.f32 1.0, %v1896
    %v1898 = vmul.f32 %v1895, %v1897
    %v1899 = vadd.f32 %v1895, %v1898
    %vm1900 = vweird.f32 %v1858
    %vm1901 = vweird.f32 %v1895
    %vm1902 = vmor %vm1900, %vm1901
    %v1903 = vsel %vm1902, %v1895, %v1899
    %v1904 = vand.u32 2147483647, %v1858
    %vm1905 = vcmp.eq.f32.partialorder %v1904, 8.507059e+37
    %v1906 = vand.u32 %v1858, 2147483648
    %v1907 = vor.u32 1.1754944e-38, %v1906
    %v1908 = vsel %vm1905, %v1907, %v1903
    %v1909 = vmul.f32 %v1845, %v1908
    %v1910 = vrcp.pop %v1861
    %v1911 = vmul.f32 %v1861, %v1910
    %v1912 = vsub.f32 1.0, %v1911
    %v1913 = vmul.f32 %v1910, %v1912
    %v1914 = vadd.f32 %v1910, %v1913
    %vm1915 = vweird.f32 %v1861
    %vm1916 = vweird.f32 %v1910
    %vm1917 = vmor %vm1915, %vm1916
    %v1918 = vsel %vm1917, %v1910, %v1914
    %v1919 = vand.u32 2147483647, %v1861
    %vm1920 = vcmp.eq.f32.partialorder %v1919, 8.507059e+37
    %v1921 = vand.u32 %v1861, 2147483648
    %v1922 = vor.u32 1.1754944e-38, %v1921
    %v1923 = vsel %vm1920, %v1922, %v1918
    %v1924 = vmul.f32 %v1847, %v1923
    %v1925 = vrcp.pop %v1864
    %v1926 = vmul.f32 %v1864, %v1925
    %v1927 = vsub.f32 1.0, %v1926
    %v1928 = vmul.f32 %v1925, %v1927
    %v1929 = vadd.f32 %v1925, %v1928
    %vm1930 = vweird.f32 %v1864
    %vm1931 = vweird.f32 %v1925
    %vm1932 = vmor %vm1930, %vm1931
    %v1933 = vsel %vm1932, %v1925, %v1929
    %v1934 = vand.u32 2147483647, %v1864
    %vm1935 = vcmp.eq.f32.partialorder %v1934, 8.507059e+37
    %v1936 = vand.u32 %v1864, 2147483648
    %v1937 = vor.u32 1.1754944e-38, %v1936
    %v1938 = vsel %vm1935, %v1937, %v1933
    %v1939 = vmul.f32 %v1849, %v1938
    %1940 = vrot.lane.b32.xlu0 %v1459, 48
    %v1941 = vpop.permute.xlu0 %1940
    %1942 = vrot.lane.b32.xlu0 %v1462, 48
    %v1943 = vpop.permute.xlu0 %1942
    %1944 = vrot.lane.b32.xlu0 %v1465, 48
    %v1945 = vpop.permute.xlu0 %1944
    %1946 = vrot.lane.b32.xlu0 %v1468, 48
    %v1947 = vpop.permute.xlu0 %1946
    %1948 = vrot.lane.b32.xlu0 %v1471, 48
    %v1949 = vpop.permute.xlu0 %1948
    %v1955 = vsel %vm429, %v1879, 0
    %v1958 = vsel %vm429, %v1894, 0
    %v1961 = vsel %vm429, %v1909, 0
    %v1964 = vsel %vm429, %v1924, 0
    %v1967 = vsel %vm429, %v1939, 0
    %v1969 = vsel %vm580, %v1949, 0
    %1971 = vmatpush.msra.mxu0 0.0
    %1972 = vmatpush.msra.mxu0 0.0
    %1973 = vmatpush.msra.mxu0 0.0
    %1974 = vmatpush.msra.mxu0 0.0
    %1975 = vmatpush.msra.mxu0 0.0
    %1976 = vmatpush.msra.mxu0 0.0
    %1977 = vmatpush.msra.mxu0 0.0
    %1978 = vmatpush.msra.mxu0 0.0
    %1979 = vmatpush.msra.mxu0 0.0
    %1980 = vmatpush.msra.mxu0 0.0
    %1981 = vmatpush.msra.mxu0 0.0
    %1982 = vmatpush.msra.mxu0 %v1969
    %1983 = vmatpush.msra.mxu0 %v1947
    %1984 = vmatpush.msra.mxu0 %v1945
    %1985 = vmatpush.msra.mxu0 %v1943
    %1986 = vmatpush.msra.mxu0 %v1941
    %1987 = vmatmul.f32.gmra.mxu0 %v1955
    %v1988 = vpop.f32.mrf.mxu0
    %v1989 = vadd.f32 0.0, %v1988
    %1990 = vmatmul.f32.gmra.mxu0 %v1958
    %v1991 = vpop.f32.mrf.mxu0
    %v1992 = vadd.f32 0.0, %v1991
    %1993 = vmatmul.f32.gmra.mxu0 %v1961
    %v1994 = vpop.f32.mrf.mxu0
    %v1995 = vadd.f32 0.0, %v1994
    %1996 = vmatmul.f32.gmra.mxu0 %v1964
    %v1997 = vpop.f32.mrf.mxu0
    %v1998 = vadd.f32 0.0, %v1997
    %1999 = vmatmul.f32.gmra.mxu0 %v1967
    %v2000 = vpop.f32.mrf.mxu0
    %v2001 = vadd.f32 0.0, %v2000
    %2002 = vdwg.mxu0
    %v2004 = vsel %vm366, %v1989, 0
    %v2007 = vsel %vm366, %v1992, 0
    %v2010 = vsel %vm366, %v1995, 0
    %v2013 = vsel %vm366, %v1998, 0
    %v2016 = vsel %vm366, %v2001, 0
    %2018 = vmatpush.msra.mxu0 0.0
    %2019 = vmatpush.msra.mxu0 0.0
    %2020 = vmatpush.msra.mxu0 0.0
    %2021 = vmatpush.msra.mxu0 0.0
    %2022 = vmatpush.msra.mxu0 0.0
    %2023 = vmatpush.msra.mxu0 0.0
    %2024 = vmatpush.msra.mxu0 0.0
    %2025 = vmatpush.msra.mxu0 0.0
    %2026 = vmatpush.msra.mxu0 0.0
    %2027 = vmatpush.msra.mxu0 0.0
    %2028 = vmatpush.msra.mxu0 0.0
    %2029 = vmatpush.msra.mxu0 0.0
    %2030 = vmatpush.msra.mxu0 0.0
    %2031 = vmatpush.msra.mxu0 0.0
    %2032 = vmatpush.msra.mxu0 %v1477
    %2033 = vmatpush.msra.mxu0 %v1476
    %2034 = vmatmul.f32.gmra.mxu0 %v2004
    %v2035 = vpop.f32.mrf.mxu0
    %v2036 = vadd.f32 0.0, %v2035
    %2037 = vmatmul.f32.gmra.mxu0 %v2007
    %v2038 = vpop.f32.mrf.mxu0
    %v2039 = vadd.f32 0.0, %v2038
    %2040 = vmatmul.f32.gmra.mxu0 %v2010
    %v2041 = vpop.f32.mrf.mxu0
    %v2042 = vadd.f32 0.0, %v2041
    %2043 = vmatmul.f32.gmra.mxu0 %v2013
    %v2044 = vpop.f32.mrf.mxu0
    %v2045 = vadd.f32 0.0, %v2044
    %2046 = vmatmul.f32.gmra.mxu0 %v2016
    %v2047 = vpop.f32.mrf.mxu0
    %v2048 = vadd.f32 0.0, %v2047
    %2049 = vdwg.mxu0
    %v2051 = vsel %vm366, %v1724, 0
    %v2054 = vsel %vm366, %v1727, 0
    %v2057 = vsel %vm366, %v1730, 0
    %v2060 = vsel %vm366, %v1733, 0
    %v2063 = vsel %vm366, %v1736, 0
    %2065 = vmatpush.msra.mxu0 0.0
    %2066 = vmatpush.msra.mxu0 0.0
    %2067 = vmatpush.msra.mxu0 0.0
    %2068 = vmatpush.msra.mxu0 0.0
    %2069 = vmatpush.msra.mxu0 0.0
    %2070 = vmatpush.msra.mxu0 0.0
    %2071 = vmatpush.msra.mxu0 0.0
    %2072 = vmatpush.msra.mxu0 0.0
    %2073 = vmatpush.msra.mxu0 0.0
    %2074 = vmatpush.msra.mxu0 0.0
    %2075 = vmatpush.msra.mxu0 0.0
    %2076 = vmatpush.msra.mxu0 0.0
    %2077 = vmatpush.msra.mxu0 0.0
    %2078 = vmatpush.msra.mxu0 0.0
    %2079 = vmatpush.msra.mxu0 %v1475
    %2080 = vmatpush.msra.mxu0 %v1474
    %2081 = vmatmul.f32.gmra.mxu0 %v2051
    %v2082 = vpop.f32.mrf.mxu0
    %v2083 = vadd.f32 %v2036, %v2082
    %2084 = vmatmul.f32.gmra.mxu0 %v2054
    %v2085 = vpop.f32.mrf.mxu0
    %v2086 = vadd.f32 %v2039, %v2085
    %2087 = vmatmul.f32.gmra.mxu0 %v2057
    %v2088 = vpop.f32.mrf.mxu0
    %v2089 = vadd.f32 %v2042, %v2088
    %2090 = vmatmul.f32.gmra.mxu0 %v2060
    %v2091 = vpop.f32.mrf.mxu0
    %v2092 = vadd.f32 %v2045, %v2091
    %2093 = vmatmul.f32.gmra.mxu0 %v2063
    %v2094 = vpop.f32.mrf.mxu0
    %v2095 = vadd.f32 %v2048, %v2094
    %2096 = vdwg.mxu0
    %v2097 = vadd.f32 %v1281, %v2083
    %v2098 = vadd.f32 %v1282, %v2086
    %v2099 = vadd.f32 %v1283, %v2089
    %v2100 = vadd.f32 %v1284, %v2092
    %v2101 = vadd.f32 %v1285, %v2095
    %s2102 = scalar_lea.vmem %s10, 1
    %v2103 = vld [vmem:[%s2102] sm:$0x1]
    %v2105 = vperm.slane %v2103, 0
    %v2107 = vadd.f32 %v2097, %v2105
    %v2108 = vadd.f32 %v2098, %v2105
    %v2109 = vadd.f32 %v2099, %v2105
    %v2110 = vadd.f32 %v2100, %v2105
    %v2111 = vadd.f32 %v2101, %v2105
    %s2112 = scalar_lea.vmem %s11, 1
    %v2113 = vld [vmem:[%s2112] sm:$0x1]
    %s2114 = scalar_lea.vmem %s12, 1
    %v2115 = vld [vmem:[%s2114] sm:$0x1]
    %v2116 = vsel %vm157, %v2107, 0.0
    %2117 = vadd.xlane.f32.xlu0 %v2116
    %v2118 = vpop.xlane.xlu0 %2117
    %v2119 = vsel %vm157, %v2108, 0.0
    %2120 = vadd.xlane.f32.xlu0 %v2119
    %v2121 = vpop.xlane.xlu0 %2120
    %v2122 = vsel %vm157, %v2109, 0.0
    %2123 = vadd.xlane.f32.xlu0 %v2122
    %v2124 = vpop.xlane.xlu0 %2123
    %v2125 = vsel %vm157, %v2110, 0.0
    %2126 = vadd.xlane.f32.xlu0 %v2125
    %v2127 = vpop.xlane.xlu0 %2126
    %v2128 = vsel %vm170, %v2111, 0.0
    %2129 = vadd.xlane.f32.xlu0 %v2128
    %v2130 = vpop.xlane.xlu0 %2129
    %v2131 = vmul.f32 %v2118, %v180
    %v2132 = vmul.f32 %v2121, %v180
    %v2133 = vmul.f32 %v2124, %v180
    %v2134 = vmul.f32 %v2127, %v180
    %v2135 = vmul.f32 %v2130, %v180
    %v2136 = vsub.f32 %v2107, %v2131
    %v2137 = vsub.f32 %v2108, %v2132
    %v2138 = vsub.f32 %v2109, %v2133
    %v2139 = vsub.f32 %v2110, %v2134
    %v2140 = vsub.f32 %v2111, %v2135
    %v2141 = vmul.f32 %v2136, %v2136
    %v2142 = vmul.f32 %v2137, %v2137
    %v2143 = vmul.f32 %v2138, %v2138
    %v2144 = vmul.f32 %v2139, %v2139
    %v2145 = vmul.f32 %v2140, %v2140
    %v2146 = vsel %vm157, %v2141, 0.0
    %2147 = vadd.xlane.f32.xlu0 %v2146
    %v2148 = vpop.xlane.xlu0 %2147
    %v2149 = vsel %vm157, %v2142, 0.0
    %2150 = vadd.xlane.f32.xlu0 %v2149
    %v2151 = vpop.xlane.xlu0 %2150
    %v2152 = vsel %vm157, %v2143, 0.0
    %2153 = vadd.xlane.f32.xlu0 %v2152
    %v2154 = vpop.xlane.xlu0 %2153
    %v2155 = vsel %vm157, %v2144, 0.0
    %2156 = vadd.xlane.f32.xlu0 %v2155
    %v2157 = vpop.xlane.xlu0 %2156
    %v2158 = vsel %vm170, %v2145, 0.0
    %2159 = vadd.xlane.f32.xlu0 %v2158
    %v2160 = vpop.xlane.xlu0 %2159
    %v2161 = vmul.f32 %v2148, %v180
    %v2162 = vmul.f32 %v2151, %v180
    %v2163 = vmul.f32 %v2154, %v180
    %v2164 = vmul.f32 %v2157, %v180
    %v2165 = vmul.f32 %v2160, %v180
    %v2166 = vadd.f32 %v2161, 1e-12
    %v2167 = vadd.f32 %v2162, 1e-12
    %v2168 = vadd.f32 %v2163, 1e-12
    %v2169 = vadd.f32 %v2164, 1e-12
    %v2170 = vadd.f32 %v2165, 1e-12
    %v2171 = vrsqrt.pop %v2166
    %v2172 = vmul.f32 %v2171, %v2166
    %v2173 = vmul.f32 %v2172, %v2171
    %v2174 = vmul.f32 0.5, %v2173
    %v2175 = vsub.f32 1.5, %v2174
    %v2176 = vmul.f32 %v2171, %v2175
    %vm2177 = vweird.f32 %v2166
    %vm2178 = vweird.f32 %v2171
    %vm2179 = vmor %vm2177, %vm2178
    %v2180 = vsel %vm2179, %v2171, %v2176
    %v2181 = vrsqrt.pop %v2167
    %v2182 = vmul.f32 %v2181, %v2167
    %v2183 = vmul.f32 %v2182, %v2181
    %v2184 = vmul.f32 0.5, %v2183
    %v2185 = vsub.f32 1.5, %v2184
    %v2186 = vmul.f32 %v2181, %v2185
    %vm2187 = vweird.f32 %v2167
    %vm2188 = vweird.f32 %v2181
    %vm2189 = vmor %vm2187, %vm2188
    %v2190 = vsel %vm2189, %v2181, %v2186
    %v2191 = vrsqrt.pop %v2168
    %v2192 = vmul.f32 %v2191, %v2168
    %v2193 = vmul.f32 %v2192, %v2191
    %v2194 = vmul.f32 0.5, %v2193
    %v2195 = vsub.f32 1.5, %v2194
    %v2196 = vmul.f32 %v2191, %v2195
    %vm2197 = vweird.f32 %v2168
    %vm2198 = vweird.f32 %v2191
    %vm2199 = vmor %vm2197, %vm2198
    %v2200 = vsel %vm2199, %v2191, %v2196
    %v2201 = vrsqrt.pop %v2169
    %v2202 = vmul.f32 %v2201, %v2169
    %v2203 = vmul.f32 %v2202, %v2201
    %v2204 = vmul.f32 0.5, %v2203
    %v2205 = vsub.f32 1.5, %v2204
    %v2206 = vmul.f32 %v2201, %v2205
    %vm2207 = vweird.f32 %v2169
    %vm2208 = vweird.f32 %v2201
    %vm2209 = vmor %vm2207, %vm2208
    %v2210 = vsel %vm2209, %v2201, %v2206
    %v2211 = vrsqrt.pop %v2170
    %v2212 = vmul.f32 %v2211, %v2170
    %v2213 = vmul.f32 %v2212, %v2211
    %v2214 = vmul.f32 0.5, %v2213
    %v2215 = vsub.f32 1.5, %v2214
    %v2216 = vmul.f32 %v2211, %v2215
    %vm2217 = vweird.f32 %v2170
    %vm2218 = vweird.f32 %v2211
    %vm2219 = vmor %vm2217, %vm2218
    %v2220 = vsel %vm2219, %v2211, %v2216
    %v2221 = vmul.f32 %v2136, %v2180
    %v2222 = vmul.f32 %v2137, %v2190
    %v2223 = vmul.f32 %v2138, %v2200
    %v2224 = vmul.f32 %v2139, %v2210
    %v2225 = vmul.f32 %v2140, %v2220
    %v2227 = vperm.slane %v2113, 0
    %v2229 = vmul.f32 %v2221, %v2227
    %v2230 = vmul.f32 %v2222, %v2227
    %v2231 = vmul.f32 %v2223, %v2227
    %v2232 = vmul.f32 %v2224, %v2227
    %v2233 = vmul.f32 %v2225, %v2227
    %v2235 = vperm.slane %v2115, 0
    %v2237 = vadd.f32 %v2229, %v2235
    %v2238 = vadd.f32 %v2230, %v2235
    %v2239 = vadd.f32 %v2231, %v2235
    %v2240 = vadd.f32 %v2232, %v2235
    %v2241 = vadd.f32 %v2233, %v2235
    %s2242 = scalar_lea.vmem %s13, 32
    %v2243 = vld [vmem:[%s2242] sm:$0xff]
    %v2244 = vld [vmem:[%s2242 + $0x8] sm:$0xff]
    %v2245 = vld [vmem:[%s2242 + $0x10] sm:$0xff]
    %v2246 = vld [vmem:[%s2242 + $0x18] sm:$0xff]
    %s2247 = scalar_lea.vmem %s14, 1
    %v2248 = vld [vmem:[%s2247] sm:$0x1]
    %v2250 = vperm.slane %v2248, 0
    %v2253 = vsel %vm157, %v2237, 0
    %v2256 = vsel %vm157, %v2238, 0
    %v2259 = vsel %vm157, %v2239, 0
    %v2262 = vsel %vm157, %v2240, 0
    %v2265 = vsel %vm157, %v2241, 0
    %2267 = vmatpush.msra.mxu0 0.0
    %2268 = vmatpush.msra.mxu0 0.0
    %2269 = vmatpush.msra.mxu0 0.0
    %2270 = vmatpush.msra.mxu0 0.0
    %2271 = vmatpush.msra.mxu0 0.0
    %2272 = vmatpush.msra.mxu0 0.0
    %2273 = vmatpush.msra.mxu0 0.0
    %2274 = vmatpush.msra.mxu0 0.0
    %2275 = vmatpush.msra.mxu0 0.0
    %2276 = vmatpush.msra.mxu0 0.0
    %2277 = vmatpush.msra.mxu0 0.0
    %2278 = vmatpush.msra.mxu0 0.0
    %2279 = vmatpush.msra.mxu0 %v2246
    %2280 = vmatpush.msra.mxu0 %v2245
    %2281 = vmatpush.msra.mxu0 %v2244
    %2282 = vmatpush.msra.mxu0 %v2243
    %2283 = vmatmul.f32.gmra.mxu0 %v2253
    %v2284 = vpop.f32.mrf.mxu0
    %v2285 = vadd.f32 %v2250, %v2284
    %2286 = vmatmul.f32.gmra.mxu0 %v2256
    %v2287 = vpop.f32.mrf.mxu0
    %v2288 = vadd.f32 %v2250, %v2287
    %2289 = vmatmul.f32.gmra.mxu0 %v2259
    %v2290 = vpop.f32.mrf.mxu0
    %v2291 = vadd.f32 %v2250, %v2290
    %2292 = vmatmul.f32.gmra.mxu0 %v2262
    %v2293 = vpop.f32.mrf.mxu0
    %v2294 = vadd.f32 %v2250, %v2293
    %2295 = vmatmul.f32.gmra.mxu0 %v2265
    %v2296 = vpop.f32.mrf.mxu0
    %v2297 = vadd.f32 %v2250, %v2296
    %2298 = vdwg.mxu0
    %v2299 = vmul.f32 %v2285, 0.5
    %v2300 = vmul.f32 %v2288, 0.5
    %v2301 = vmul.f32 %v2291, 0.5
    %v2302 = vmul.f32 %v2294, 0.5
    %v2303 = vmul.f32 %v2297, 0.5
    %v2304 = vmul.f32 %v2285, 0.044715
    %v2305 = vmul.f32 %v2288, 0.044715
    %v2306 = vmul.f32 %v2291, 0.044715
    %v2307 = vmul.f32 %v2294, 0.044715
    %v2308 = vmul.f32 %v2297, 0.044715
    %v2309 = vmul.f32 %v2304, %v2285
    %v2310 = vmul.f32 %v2305, %v2288
    %v2311 = vmul.f32 %v2306, %v2291
    %v2312 = vmul.f32 %v2307, %v2294
    %v2313 = vmul.f32 %v2308, %v2297
    %v2314 = vmul.f32 %v2309, %v2285
    %v2315 = vmul.f32 %v2310, %v2288
    %v2316 = vmul.f32 %v2311, %v2291
    %v2317 = vmul.f32 %v2312, %v2294
    %v2318 = vmul.f32 %v2313, %v2297
    %v2319 = vadd.f32 %v2285, %v2314
    %v2320 = vadd.f32 %v2288, %v2315
    %v2321 = vadd.f32 %v2291, %v2316
    %v2322 = vadd.f32 %v2294, %v2317
    %v2323 = vadd.f32 %v2297, %v2318
    %v2324 = vmul.f32 %v2319, 0.7978846
    %v2325 = vmul.f32 %v2320, 0.7978846
    %v2326 = vmul.f32 %v2321, 0.7978846
    %v2327 = vmul.f32 %v2322, 0.7978846
    %v2328 = vmul.f32 %v2323, 0.7978846
    %v2329 = vtanh.pop %v2324
    %v2330 = vtanh.pop %v2325
    %v2331 = vtanh.pop %v2326
    %v2332 = vtanh.pop %v2327
    %v2333 = vtanh.pop %v2328
    %v2334 = vadd.f32 %v2329, 1.0
    %v2335 = vadd.f32 %v2330, 1.0
    %v2336 = vadd.f32 %v2331, 1.0
    %v2337 = vadd.f32 %v2332, 1.0
    %v2338 = vadd.f32 %v2333, 1.0
    %v2339 = vmul.f32 %v2299, %v2334
    %v2340 = vmul.f32 %v2300, %v2335
    %v2341 = vmul.f32 %v2301, %v2336
    %v2342 = vmul.f32 %v2302, %v2337
    %v2343 = vmul.f32 %v2303, %v2338
    %s2344 = scalar_lea.vmem %s15, 64
    %v2345 = vld [vmem:[%s2344] sm:$0xff]
    %v2346 = vld [vmem:[%s2344 + $0x8] sm:$0xff]
    %v2347 = vld [vmem:[%s2344 + $0x10] sm:$0xff]
    %v2348 = vld [vmem:[%s2344 + $0x18] sm:$0xff]
    %v2349 = vld [vmem:[%s2344 + $0x20] sm:$0xff]
    %v2350 = vld [vmem:[%s2344 + $0x28] sm:$0xff]
    %v2351 = vld [vmem:[%s2344 + $0x30] sm:$0xff]
    %v2352 = vld [vmem:[%s2344 + $0x38] sm:$0xff]
    %v2354 = vsel %vm1224, %v2339, 0
    %v2357 = vsel %vm1224, %v2340, 0
    %v2360 = vsel %vm1224, %v2341, 0
    %v2363 = vsel %vm1224, %v2342, 0
    %v2366 = vsel %vm1224, %v2343, 0
    %2368 = vmatpush.msra.mxu0 0.0
    %2369 = vmatpush.msra.mxu0 0.0
    %2370 = vmatpush.msra.mxu0 0.0
    %2371 = vmatpush.msra.mxu0 0.0
    %2372 = vmatpush.msra.mxu0 0.0
    %2373 = vmatpush.msra.mxu0 0.0
    %2374 = vmatpush.msra.mxu0 0.0
    %2375 = vmatpush.msra.mxu0 0.0
    %2376 = vmatpush.msra.mxu0 %v2352
    %2377 = vmatpush.msra.mxu0 %v2351
    %2378 = vmatpush.msra.mxu0 %v2350
    %2379 = vmatpush.msra.mxu0 %v2349
    %2380 = vmatpush.msra.mxu0 %v2348
    %2381 = vmatpush.msra.mxu0 %v2347
    %2382 = vmatpush.msra.mxu0 %v2346
    %2383 = vmatpush.msra.mxu0 %v2345
    %2384 = vmatmul.f32.gmra.mxu0 %v2354
    %v2385 = vpop.f32.mrf.mxu0
    %v2386 = vadd.f32 0.0, %v2385
    %2387 = vmatmul.f32.gmra.mxu0 %v2357
    %v2388 = vpop.f32.mrf.mxu0
    %v2389 = vadd.f32 0.0, %v2388
    %2390 = vmatmul.f32.gmra.mxu0 %v2360
    %v2391 = vpop.f32.mrf.mxu0
    %v2392 = vadd.f32 0.0, %v2391
    %2393 = vmatmul.f32.gmra.mxu0 %v2363
    %v2394 = vpop.f32.mrf.mxu0
    %v2395 = vadd.f32 0.0, %v2394
    %2396 = vmatmul.f32.gmra.mxu0 %v2366
    %v2397 = vpop.f32.mrf.mxu0
    %v2398 = vadd.f32 0.0, %v2397
    %2399 = vdwg.mxu0
    %v2400 = vadd.f32 %v2107, %v2386
    %v2401 = vadd.f32 %v2108, %v2389
    %v2402 = vadd.f32 %v2109, %v2392
    %v2403 = vadd.f32 %v2110, %v2395
    %v2404 = vadd.f32 %v2111, %v2398
    %s2405 = scalar_lea.vmem %s16, 1
    %v2406 = vld [vmem:[%s2405] sm:$0x1]
    %v2408 = vperm.slane %v2406, 0
    %v2410 = vadd.f32 %v2400, %v2408
    %v2411 = vadd.f32 %v2401, %v2408
    %v2412 = vadd.f32 %v2402, %v2408
    %v2413 = vadd.f32 %v2403, %v2408
    %v2414 = vadd.f32 %v2404, %v2408
    %v2415 = vld [vmem:[%s3] sm:$0x3]
    %v2417 = vsel %vm429, %v2415, 0
    %v2420 = vsel %vm580, %v2414, 0
    %2422 = vmatpush.msra.mxu0 0.0
    %2423 = vmatpush.msra.mxu0 0.0
    %2424 = vmatpush.msra.mxu0 0.0
    %2425 = vmatpush.msra.mxu0 0.0
    %2426 = vmatpush.msra.mxu0 0.0
    %2427 = vmatpush.msra.mxu0 0.0
    %2428 = vmatpush.msra.mxu0 0.0
    %2429 = vmatpush.msra.mxu0 0.0
    %2430 = vmatpush.msra.mxu0 0.0
    %2431 = vmatpush.msra.mxu0 0.0
    %2432 = vmatpush.msra.mxu0 0.0
    %2433 = vmatpush.msra.mxu0 %v2420
    %2434 = vmatpush.msra.mxu0 %v2413
    %2435 = vmatpush.msra.mxu0 %v2412
    %2436 = vmatpush.msra.mxu0 %v2411
    %2437 = vmatpush.msra.mxu0 %v2410
    %2438 = vmatmul.f32.gmra.mxu0 %v2417
    %v2439 = vpop.f32.mrf.mxu0
    %v2440 = vadd.f32 0.0, %v2439
    %2441 = vdwg.mxu0
    %v2442 = vld [vmem:[%s17] sm:$0x1]
    %v2443 = vld [vmem:[%s18] sm:$0x1]
    %v2444 = vsel %vm170, %v2440, 0.0
    %2445 = vadd.xlane.f32.xlu0 %v2444
    %v2446 = vpop.xlane.xlu0 %2445
    %v2447 = vmul.f32 %v2446, %v180
    %v2448 = vsub.f32 %v2440, %v2447
    %v2449 = vmul.f32 %v2448, %v2448
    %v2450 = vsel %vm170, %v2449, 0.0
    %2451 = vadd.xlane.f32.xlu0 %v2450
    %v2452 = vpop.xlane.xlu0 %2451
    %v2453 = vmul.f32 %v2452, %v180
    %v2454 = vadd.f32 %v2453, 1e-12
    %v2455 = vrsqrt.pop %v2454
    %v2456 = vmul.f32 %v2455, %v2454
    %v2457 = vmul.f32 %v2456, %v2455
    %v2458 = vmul.f32 0.5, %v2457
    %v2459 = vsub.f32 1.5, %v2458
    %v2460 = vmul.f32 %v2455, %v2459
    %vm2461 = vweird.f32 %v2454
    %vm2462 = vweird.f32 %v2455
    %vm2463 = vmor %vm2461, %vm2462
    %v2464 = vsel %vm2463, %v2455, %v2460
    %v2465 = vmul.f32 %v2448, %v2464
    %v2467 = vperm.slane %v2442, 0
    %v2469 = vmul.f32 %v2465, %v2467
    %v2471 = vperm.slane %v2443, 0
    %v2473 = vadd.f32 %v2469, %v2471
    %v2474 = vld [vmem:[%s19] sm:$0xff]
    %v2475 = vld [vmem:[%s19 + $0x8] sm:$0xff]
    %v2476 = vld [vmem:[%s19 + $0x10] sm:$0xff]
    %v2477 = vld [vmem:[%s19 + $0x18] sm:$0xff]
    %v2478 = vld [vmem:[%s19 + $0x20] sm:$0xff]
    %v2479 = vld [vmem:[%s19 + $0x28] sm:$0xff]
    %v2480 = vld [vmem:[%s19 + $0x30] sm:$0xff]
    %v2481 = vld [vmem:[%s19 + $0x38] sm:$0xff]
    %v2482 = vld [vmem:[%s19 + $0x40] sm:$0xff]
    %v2483 = vld [vmem:[%s19 + $0x48] sm:$0xff]
    %v2484 = vld [vmem:[%s19 + $0x50] sm:$0xff]
    %v2485 = vld [vmem:[%s19 + $0x58] sm:$0xff]
    %v2486 = vld [vmem:[%s19 + $0x60] sm:$0xff]
    %v2487 = vld [vmem:[%s19 + $0x68] sm:$0xff]
    %v2488 = vld [vmem:[%s19 + $0x70] sm:$0xff]
    %v2489 = vld [vmem:[%s19 + $0x78] sm:$0xff]
    %v2490 = vld [vmem:[%s20] sm:$0xf]
    %v2492 = vperm.slane %v2490, 0
    %v2493 = vperm.slane %v2490, 1
    %v2494 = vperm.slane %v2490, 2
    %v2495 = vperm.slane %v2490, 3
    %v2501 = vsel %vm157, %v2473, 0
    %2503 = vmatpush.msra.mxu0 0.0
    %2504 = vmatpush.msra.mxu0 0.0
    %2505 = vmatpush.msra.mxu0 0.0
    %2506 = vmatpush.msra.mxu0 0.0
    %2507 = vmatpush.msra.mxu0 0.0
    %2508 = vmatpush.msra.mxu0 0.0
    %2509 = vmatpush.msra.mxu0 0.0
    %2510 = vmatpush.msra.mxu0 0.0
    %2511 = vmatpush.msra.mxu0 0.0
    %2512 = vmatpush.msra.mxu0 0.0
    %2513 = vmatpush.msra.mxu0 0.0
    %2514 = vmatpush.msra.mxu0 0.0
    %2515 = vmatpush.msra.mxu0 %v2486
    %2516 = vmatpush.msra.mxu0 %v2482
    %2517 = vmatpush.msra.mxu0 %v2478
    %2518 = vmatpush.msra.mxu0 %v2474
    %2519 = vmatmul.f32.gmra.mxu0 %v2501
    %v2520 = vpop.f32.mrf.mxu0
    %v2521 = vadd.f32 %v2492, %v2520
    %2522 = vdwg.mxu0
    %2523 = vmatpush.msra.mxu0 0.0
    %2524 = vmatpush.msra.mxu0 0.0
    %2525 = vmatpush.msra.mxu0 0.0
    %2526 = vmatpush.msra.mxu0 0.0
    %2527 = vmatpush.msra.mxu0 0.0
    %2528 = vmatpush.msra.mxu0 0.0
    %2529 = vmatpush.msra.mxu0 0.0
    %2530 = vmatpush.msra.mxu0 0.0
    %2531 = vmatpush.msra.mxu0 0.0
    %2532 = vmatpush.msra.mxu0 0.0
    %2533 = vmatpush.msra.mxu0 0.0
    %2534 = vmatpush.msra.mxu0 0.0
    %2535 = vmatpush.msra.mxu0 %v2487
    %2536 = vmatpush.msra.mxu0 %v2483
    %2537 = vmatpush.msra.mxu0 %v2479
    %2538 = vmatpush.msra.mxu0 %v2475
    %2539 = vmatmul.f32.gmra.mxu0 %v2501
    %v2540 = vpop.f32.mrf.mxu0
    %v2541 = vadd.f32 %v2493, %v2540
    %2542 = vdwg.mxu0
    %2543 = vmatpush.msra.mxu0 0.0
    %2544 = vmatpush.msra.mxu0 0.0
    %2545 = vmatpush.msra.mxu0 0.0
    %2546 = vmatpush.msra.mxu0 0.0
    %2547 = vmatpush.msra.mxu0 0.0
    %2548 = vmatpush.msra.mxu0 0.0
    %2549 = vmatpush.msra.mxu0 0.0
    %2550 = vmatpush.msra.mxu0 0.0
    %2551 = vmatpush.msra.mxu0 0.0
    %2552 = vmatpush.msra.mxu0 0.0
    %2553 = vmatpush.msra.mxu0 0.0
    %2554 = vmatpush.msra.mxu0 0.0
    %2555 = vmatpush.msra.mxu0 %v2488
    %2556 = vmatpush.msra.mxu0 %v2484
    %2557 = vmatpush.msra.mxu0 %v2480
    %2558 = vmatpush.msra.mxu0 %v2476
    %2559 = vmatmul.f32.gmra.mxu0 %v2501
    %v2560 = vpop.f32.mrf.mxu0
    %v2561 = vadd.f32 %v2494, %v2560
    %2562 = vdwg.mxu0
    %2563 = vmatpush.msra.mxu0 0.0
    %2564 = vmatpush.msra.mxu0 0.0
    %2565 = vmatpush.msra.mxu0 0.0
    %2566 = vmatpush.msra.mxu0 0.0
    %2567 = vmatpush.msra.mxu0 0.0
    %2568 = vmatpush.msra.mxu0 0.0
    %2569 = vmatpush.msra.mxu0 0.0
    %2570 = vmatpush.msra.mxu0 0.0
    %2571 = vmatpush.msra.mxu0 0.0
    %2572 = vmatpush.msra.mxu0 0.0
    %2573 = vmatpush.msra.mxu0 0.0
    %2574 = vmatpush.msra.mxu0 0.0
    %2575 = vmatpush.msra.mxu0 %v2489
    %2576 = vmatpush.msra.mxu0 %v2485
    %2577 = vmatpush.msra.mxu0 %v2481
    %2578 = vmatpush.msra.mxu0 %v2477
    %2579 = vmatmul.f32.gmra.mxu0 %v2501
    %v2580 = vpop.f32.mrf.mxu0
    %v2581 = vadd.f32 %v2495, %v2580
    %2582 = vdwg.mxu0
    %v2583 = vmax.f32 %v2521, 0.0
    %v2584 = vmax.f32 %v2541, 0.0
    %v2585 = vmax.f32 %v2561, 0.0
    %v2586 = vmax.f32 %v2581, 0.0
    %v2587 = vld [vmem:[%s21] sm:$0xff]
    %v2588 = vld [vmem:[%s21 + $0x8] sm:$0xff]
    %v2589 = vld [vmem:[%s21 + $0x10] sm:$0xff]
    %v2590 = vld [vmem:[%s21 + $0x18] sm:$0xff]
    %v2591 = vld [vmem:[%s21 + $0x20] sm:$0xff]
    %v2592 = vld [vmem:[%s21 + $0x28] sm:$0xff]
    %v2593 = vld [vmem:[%s21 + $0x30] sm:$0xff]
    %v2594 = vld [vmem:[%s21 + $0x38] sm:$0xff]
    %v2595 = vld [vmem:[%s21 + $0x40] sm:$0xff]
    %v2596 = vld [vmem:[%s21 + $0x48] sm:$0xff]
    %v2597 = vld [vmem:[%s21 + $0x50] sm:$0xff]
    %v2598 = vld [vmem:[%s21 + $0x58] sm:$0xff]
    %v2599 = vld [vmem:[%s21 + $0x60] sm:$0xff]
    %v2600 = vld [vmem:[%s21 + $0x68] sm:$0xff]
    %v2601 = vld [vmem:[%s21 + $0x70] sm:$0xff]
    %v2602 = vld [vmem:[%s21 + $0x78] sm:$0xff]
    %v2603 = vld [vmem:[%s21 + $0x80] sm:$0xff]
    %v2604 = vld [vmem:[%s21 + $0x88] sm:$0xff]
    %v2605 = vld [vmem:[%s21 + $0x90] sm:$0xff]
    %v2606 = vld [vmem:[%s21 + $0x98] sm:$0xff]
    %v2607 = vld [vmem:[%s21 + $0xa0] sm:$0xff]
    %v2608 = vld [vmem:[%s21 + $0xa8] sm:$0xff]
    %v2609 = vld [vmem:[%s21 + $0xb0] sm:$0xff]
    %v2610 = vld [vmem:[%s21 + $0xb8] sm:$0xff]
    %v2611 = vld [vmem:[%s21 + $0xc0] sm:$0xff]
    %v2612 = vld [vmem:[%s21 + $0xc8] sm:$0xff]
    %v2613 = vld [vmem:[%s21 + $0xd0] sm:$0xff]
    %v2614 = vld [vmem:[%s21 + $0xd8] sm:$0xff]
    %v2615 = vld [vmem:[%s21 + $0xe0] sm:$0xff]
    %v2616 = vld [vmem:[%s21 + $0xe8] sm:$0xff]
    %v2617 = vld [vmem:[%s21 + $0xf0] sm:$0xff]
    %v2618 = vld [vmem:[%s21 + $0xf8] sm:$0xff]
    %v2619 = vld [vmem:[%s21 + $0x100] sm:$0xff]
    %v2620 = vld [vmem:[%s21 + $0x108] sm:$0xff]
    %v2621 = vld [vmem:[%s21 + $0x110] sm:$0xff]
    %v2622 = vld [vmem:[%s21 + $0x118] sm:$0xff]
    %v2623 = vld [vmem:[%s21 + $0x120] sm:$0xff]
    %v2624 = vld [vmem:[%s21 + $0x128] sm:$0xff]
    %v2625 = vld [vmem:[%s21 + $0x130] sm:$0xff]
    %v2626 = vld [vmem:[%s21 + $0x138] sm:$0xff]
    %v2627 = vld [vmem:[%s21 + $0x140] sm:$0xff]
    %v2628 = vld [vmem:[%s21 + $0x148] sm:$0xff]
    %v2629 = vld [vmem:[%s21 + $0x150] sm:$0xff]
    %v2630 = vld [vmem:[%s21 + $0x158] sm:$0xff]
    %v2631 = vld [vmem:[%s21 + $0x160] sm:$0xff]
    %v2632 = vld [vmem:[%s21 + $0x168] sm:$0xff]
    %v2633 = vld [vmem:[%s21 + $0x170] sm:$0xff]
    %v2634 = vld [vmem:[%s21 + $0x178] sm:$0xff]
    %v2635 = vld [vmem:[%s21 + $0x180] sm:$0xff]
    %v2636 = vld [vmem:[%s21 + $0x188] sm:$0xff]
    %v2637 = vld [vmem:[%s21 + $0x190] sm:$0xff]
    %v2638 = vld [vmem:[%s21 + $0x198] sm:$0xff]
    %v2639 = vld [vmem:[%s21 + $0x1a0] sm:$0xff]
    %v2640 = vld [vmem:[%s21 + $0x1a8] sm:$0xff]
    %v2641 = vld [vmem:[%s21 + $0x1b0] sm:$0xff]
    %v2642 = vld [vmem:[%s21 + $0x1b8] sm:$0xff]
    %v2643 = vld [vmem:[%s21 + $0x1c0] sm:$0xff]
    %v2644 = vld [vmem:[%s21 + $0x1c8] sm:$0xff]
    %v2645 = vld [vmem:[%s21 + $0x1d0] sm:$0xff]
    %v2646 = vld [vmem:[%s21 + $0x1d8] sm:$0xff]
    %v2647 = vld [vmem:[%s21 + $0x1e0] sm:$0xff]
    %v2648 = vld [vmem:[%s21 + $0x1e8] sm:$0xff]
    %v2649 = vld [vmem:[%s21 + $0x1f0] sm:$0xff]
    %v2650 = vld [vmem:[%s21 + $0x1f8] sm:$0xff]
    %v2651 = vld [vmem:[%s22] sm:$0x1]
    %v2653 = vperm.slane %v2651, 0
    %2655 = vmatpush.msra.mxu0 %v2602
    %2656 = vmatpush.msra.mxu0 %v2601
    %2657 = vmatpush.msra.mxu0 %v2600
    %2658 = vmatpush.msra.mxu0 %v2599
    %2659 = vmatpush.msra.mxu0 %v2598
    %2660 = vmatpush.msra.mxu0 %v2597
    %2661 = vmatpush.msra.mxu0 %v2596
    %2662 = vmatpush.msra.mxu0 %v2595
    %2663 = vmatpush.msra.mxu0 %v2594
    %2664 = vmatpush.msra.mxu0 %v2593
    %2665 = vmatpush.msra.mxu0 %v2592
    %2666 = vmatpush.msra.mxu0 %v2591
    %2667 = vmatpush.msra.mxu0 %v2590
    %2668 = vmatpush.msra.mxu0 %v2589
    %2669 = vmatpush.msra.mxu0 %v2588
    %2670 = vmatpush.msra.mxu0 %v2587
    %2671 = vmatmul.f32.gmra.mxu0 %v2583
    %v2672 = vpop.f32.mrf.mxu0
    %v2673 = vadd.f32 %v2653, %v2672
    %2674 = vdwg.mxu0
    %2675 = vmatpush.msra.mxu0 %v2618
    %2676 = vmatpush.msra.mxu0 %v2617
    %2677 = vmatpush.msra.mxu0 %v2616
    %2678 = vmatpush.msra.mxu0 %v2615
    %2679 = vmatpush.msra.mxu0 %v2614
    %2680 = vmatpush.msra.mxu0 %v2613
    %2681 = vmatpush.msra.mxu0 %v2612
    %2682 = vmatpush.msra.mxu0 %v2611
    %2683 = vmatpush.msra.mxu0 %v2610
    %2684 = vmatpush.msra.mxu0 %v2609
    %2685 = vmatpush.msra.mxu0 %v2608
    %2686 = vmatpush.msra.mxu0 %v2607
    %2687 = vmatpush.msra.mxu0 %v2606
    %2688 = vmatpush.msra.mxu0 %v2605
    %2689 = vmatpush.msra.mxu0 %v2604
    %2690 = vmatpush.msra.mxu0 %v2603
    %2691 = vmatmul.f32.gmra.mxu0 %v2584
    %v2692 = vpop.f32.mrf.mxu0
    %v2693 = vadd.f32 %v2673, %v2692
    %2694 = vdwg.mxu0
    %2695 = vmatpush.msra.mxu0 %v2634
    %2696 = vmatpush.msra.mxu0 %v2633
    %2697 = vmatpush.msra.mxu0 %v2632
    %2698 = vmatpush.msra.mxu0 %v2631
    %2699 = vmatpush.msra.mxu0 %v2630
    %2700 = vmatpush.msra.mxu0 %v2629
    %2701 = vmatpush.msra.mxu0 %v2628
    %2702 = vmatpush.msra.mxu0 %v2627
    %2703 = vmatpush.msra.mxu0 %v2626
    %2704 = vmatpush.msra.mxu0 %v2625
    %2705 = vmatpush.msra.mxu0 %v2624
    %2706 = vmatpush.msra.mxu0 %v2623
    %2707 = vmatpush.msra.mxu0 %v2622
    %2708 = vmatpush.msra.mxu0 %v2621
    %2709 = vmatpush.msra.mxu0 %v2620
    %2710 = vmatpush.msra.mxu0 %v2619
    %2711 = vmatmul.f32.gmra.mxu0 %v2585
    %v2712 = vpop.f32.mrf.mxu0
    %v2713 = vadd.f32 %v2693, %v2712
    %2714 = vdwg.mxu0
    %2715 = vmatpush.msra.mxu0 %v2650
    %2716 = vmatpush.msra.mxu0 %v2649
    %2717 = vmatpush.msra.mxu0 %v2648
    %2718 = vmatpush.msra.mxu0 %v2647
    %2719 = vmatpush.msra.mxu0 %v2646
    %2720 = vmatpush.msra.mxu0 %v2645
    %2721 = vmatpush.msra.mxu0 %v2644
    %2722 = vmatpush.msra.mxu0 %v2643
    %2723 = vmatpush.msra.mxu0 %v2642
    %2724 = vmatpush.msra.mxu0 %v2641
    %2725 = vmatpush.msra.mxu0 %v2640
    %2726 = vmatpush.msra.mxu0 %v2639
    %2727 = vmatpush.msra.mxu0 %v2638
    %2728 = vmatpush.msra.mxu0 %v2637
    %2729 = vmatpush.msra.mxu0 %v2636
    %2730 = vmatpush.msra.mxu0 %v2635
    %2731 = vmatmul.f32.gmra.mxu0 %v2586
    %v2732 = vpop.f32.mrf.mxu0
    %v2733 = vadd.f32 %v2713, %v2732
    %2734 = vdwg.mxu0
    %v2735 = vmul.f32 %v2733, 0.5
    %v2736 = vmul.f32 %v2733, 0.044715
    %v2737 = vmul.f32 %v2736, %v2733
    %v2738 = vmul.f32 %v2737, %v2733
    %v2739 = vadd.f32 %v2733, %v2738
    %v2740 = vmul.f32 %v2739, 0.7978846
    %v2741 = vtanh.pop %v2740
    %v2742 = vadd.f32 %v2741, 1.0
    %v2743 = vmul.f32 %v2735, %v2742
    %v2744 = vld [vmem:[%s23] sm:$0xff]
    %v2745 = vld [vmem:[%s23 + $0x8] sm:$0xff]
    %v2746 = vld [vmem:[%s23 + $0x10] sm:$0xff]
    %v2747 = vld [vmem:[%s23 + $0x18] sm:$0xff]
    %v2748 = vld [vmem:[%s23 + $0x20] sm:$0xff]
    %v2749 = vld [vmem:[%s23 + $0x28] sm:$0xff]
    %v2750 = vld [vmem:[%s23 + $0x30] sm:$0xff]
    %v2751 = vld [vmem:[%s23 + $0x38] sm:$0xff]
    %v2752 = vld [vmem:[%s23 + $0x40] sm:$0xff]
    %v2753 = vld [vmem:[%s23 + $0x48] sm:$0xff]
    %v2754 = vld [vmem:[%s23 + $0x50] sm:$0xff]
    %v2755 = vld [vmem:[%s23 + $0x58] sm:$0xff]
    %v2756 = vld [vmem:[%s23 + $0x60] sm:$0xff]
    %v2757 = vld [vmem:[%s23 + $0x68] sm:$0xff]
    %v2758 = vld [vmem:[%s23 + $0x70] sm:$0xff]
    %v2759 = vld [vmem:[%s23 + $0x78] sm:$0xff]
    %v2760 = vld [vmem:[%s24] sm:$0x1]
    %v2762 = vperm.slane %v2760, 0
    %2764 = vmatpush.msra.mxu0 %v2759
    %2765 = vmatpush.msra.mxu0 %v2758
    %2766 = vmatpush.msra.mxu0 %v2757
    %2767 = vmatpush.msra.mxu0 %v2756
    %2768 = vmatpush.msra.mxu0 %v2755
    %2769 = vmatpush.msra.mxu0 %v2754
    %2770 = vmatpush.msra.mxu0 %v2753
    %2771 = vmatpush.msra.mxu0 %v2752
    %2772 = vmatpush.msra.mxu0 %v2751
    %2773 = vmatpush.msra.mxu0 %v2750
    %2774 = vmatpush.msra.mxu0 %v2749
    %2775 = vmatpush.msra.mxu0 %v2748
    %2776 = vmatpush.msra.mxu0 %v2747
    %2777 = vmatpush.msra.mxu0 %v2746
    %2778 = vmatpush.msra.mxu0 %v2745
    %2779 = vmatpush.msra.mxu0 %v2744
    %2780 = vmatmul.f32.gmra.mxu0 %v2743
    %v2781 = vpop.f32.mrf.mxu0
    %v2782 = vadd.f32 %v2762, %v2781
    %2783 = vdwg.mxu0
    %2784 = vst [vmem:[#allocation2] sm:$0x3] %v2782
    // Predicated region
    $region102: #{vit_classifier_forward.1} parent=1 // pred_check
      _
    $region103: #{vit_classifier_forward.1} parent=1 // pred_check_branch
      %2786 = sbr.rel (0) target = $region105
    $region104: #{vit_classifier_forward.1} parent=1 // pred_region
      %2788 = vsyncadd [#allocation3], 0
      %s2790 = sshll.u32 [#allocation2], 4
      %s2791 = int_to_ptr.vmem [resolvable:$true] %s2790
      %s2792 = sshll.u32 %s25, 4
      %s2793 = int_to_ptr.hbm [resolvable:$true] %s2792
      %2795 = dma.vmem_to_hbm [thread:$0]  %s2791, 32, %s2793, [#allocation3]
    $region105: #{vit_classifier_forward.1} parent=1 // pred_fallthru
      _
    // Predicated region
    $region106: #{vit_classifier_forward.1} parent=1 // pred_check
      _
    $region107: #{vit_classifier_forward.1} parent=1 // pred_check_branch
      %2797 = sbr.rel (0) target = $region109
    $region108: #{vit_classifier_forward.1} parent=1 // pred_region
      %2799 = dma.done [#allocation3], 32
    $region109: #{vit_classifier_forward.1} parent=1 // pred_fallthru
      _
    %2800 = vsyncpa [#allocation3], 1

</llo_original>
